<compile_context>
chip_gen: v6e
topology: v6e:2x2x1
jax: 0.10.0
libtpu: 0.0.40
codegen_flags: <defaults>
</compile_context>

<pallas_src>
import functools

import numpy as np
import jax
import jax.numpy as jnp
from jax import lax
from jax.experimental import pallas as pl
from jax.experimental.pallas import tpu as pltpu

EPS = 1e-5          # nn.InstanceNorm2d default
NEG_SLOPE = 0.01    # nn.LeakyReLU default


# ----------------------------------------------------------------------------
# Fused kernel: one image per grid step.
# ----------------------------------------------------------------------------
def _upscale_fused_kernel(x_ref, sc_ref, wt_ref, bt_ref, w1_ref, w2_ref,
                          c_ref, m_ref, o_ref, up_ref,
                          *, chalf, c1, cmid, H, W, SH, SW, pad_top, zero_rows):
    f32 = jnp.float32
    L = SH * SW

    # --- ConvTranspose2d(k=2, s=2): one MXU matmul + VPU bias broadcast ------
    # wt_ref: (4*Chalf, Cin), rows ordered (di, dj, co);  x_ref[0]: (Cin, H*W)
    y = jnp.dot(wt_ref[...], x_ref[0].astype(f32), preferred_element_type=f32)
    y = y + bt_ref[...]                                   # (4*Chalf, H*W)

    # --- stride-2 scatter + F.pad placement: per-row small 0/1 matmuls -------
    # c_ref[dj]: (W, SW) with 1 at column pad_left + 2j + dj   (tiny, linear cost)
    if zero_rows:                                          # only when F.pad adds rows
        up_ref[...] = jnp.zeros_like(up_ref)
    cs0 = c_ref[0].astype(f32)
    cs1 = c_ref[1].astype(f32)
    for i in range(H):
        yi = y[:, i * W:(i + 1) * W]                       # (4*Chalf, W)
        u0 = jnp.dot(yi, cs0, preferred_element_type=f32)  # (4*Chalf, SW)
        u1 = jnp.dot(yi, cs1, preferred_element_type=f32)
        r = pad_top + 2 * i
        up_ref[:, r * SW:(r + 1) * SW] = u0[0:chalf] + u1[chalf:2 * chalf]
        up_ref[:, (r + 1) * SW:(r + 2) * SW] = (u0[2 * chalf:3 * chalf]
                                                + u1[3 * chalf:4 * chalf])

    # --- fused 3x3 conv (SAME, no bias) + InstanceNorm + LeakyReLU -----------
    # column-wrap masks (precomputed 0/1): [q >= 1, q <= SW-2]
    mask_l = m_ref[0:1, :]
    mask_r = m_ref[1:2, :]
    zpad_w = SW + 1

    def conv3x3(v, wcol):
        # v: (Cpart, L) flat raster image; wcol(t) -> (Cout, Cpart) tap weights.
        zp = jnp.zeros((v.shape[0], zpad_w), f32)
        vp = jnp.concatenate([zp, v, zp], axis=1)          # zero-extended rows
        acc = None
        for dh in range(3):
            for dw in range(3):
                t = dh * 3 + dw
                k = (dh - 1) * SW + (dw - 1)
                sv = vp[:, zpad_w + k: zpad_w + k + L]     # in[p+dh-1, q+dw-1]
                if dw == 0:
                    sv = sv * mask_l
                elif dw == 2:
                    sv = sv * mask_r
                part = jnp.dot(wcol(t), sv, preferred_element_type=f32)
                acc = part if acc is None else acc + part
        return acc

    def inorm_lrelu(r):
        inv_cnt = 1.0 / float(L)
        mean = jnp.sum(r, axis=1, keepdims=True) * inv_cnt
        d = r - mean
        var = jnp.sum(d * d, axis=1, keepdims=True) * inv_cnt
        yn = d * lax.rsqrt(var + EPS)
        return jnp.where(yn > 0, yn, NEG_SLOPE * yn)

    up = up_ref[...]                                       # (Chalf, L)
    sc = sc_ref[0].astype(f32)                             # (Chalf, L)

    # conv1 split over the concat halves: K = [up | shortcut]
    h1 = inorm_lrelu(
        conv3x3(up, lambda t: w1_ref[:, t * c1: t * c1 + chalf])
        + conv3x3(sc, lambda t: w1_ref[:, t * c1 + chalf: (t + 1) * c1]))
    h2 = inorm_lrelu(
        conv3x3(h1, lambda t: w2_ref[:, t * cmid: (t + 1) * cmid]))

    o_ref[0] = h2.astype(o_ref.dtype)


# ----------------------------------------------------------------------------
# Weight preparation: PyTorch layouts -> matmul layouts used by the kernel.
# ----------------------------------------------------------------------------
def make_params(wt_torch, bt, w1_torch, w2_torch):
    cin, chalf = wt_torch.shape[0], wt_torch.shape[1]
    # ConvTranspose2d weight (Cin, Chalf, 2, 2) -> (4*Chalf, Cin), rows (di, dj, co)
    wtm = jnp.transpose(wt_torch, (2, 3, 1, 0)).reshape(4 * chalf, cin)
    btm = jnp.tile(bt, 4).reshape(4 * chalf, 1)

    def conv_mat(w):   # OIHW -> (O, 9*I), columns ordered (dh, dw, in_channel)
        o, i = w.shape[0], w.shape[1]
        return jnp.transpose(w, (0, 2, 3, 1)).reshape(o, 9 * i)

    return {"wtm": wtm, "btm": btm,
            "w1m": conv_mat(w1_torch), "w2m": conv_mat(w2_torch)}


# ----------------------------------------------------------------------------
# UpScale forward (single fused pallas_call)
# ----------------------------------------------------------------------------
def upscale_forward(params, x_nchw, shortcut_nchw):
    N, cin, H, W = x_nchw.shape
    _, chalf, SH, SW = shortcut_nchw.shape
    c1 = 2 * chalf                       # channels after concat (== in_channels)
    cmid = params["w1m"].shape[0]
    cout = params["w2m"].shape[0]
    HW, L = H * W, SH * SW

    # F.pad offsets (static under jit); negative diffs (crop) not supported here.
    h_diff, w_diff = SH - 2 * H, SW - 2 * W
    pad_top, pad_left = h_diff // 2, w_diff // 2
    zero_rows = h_diff > 0

    # Tiny constants: per-dj column scatter matrices and the two column-wrap masks.
    cmat = np.zeros((2, W, SW), np.float32)
    for dj in range(2):
        for j in range(W):
            cmat[dj, j, pad_left + 2 * j + dj] = 1.0
    q = np.arange(L) % SW
    masks = np.stack([(q >= 1).astype(np.float32),
                      (q <= SW - 2).astype(np.float32)], axis=0)   # (2, L)

    x3 = x_nchw.reshape(N, cin, HW).astype(jnp.float32)
    sc3 = shortcut_nchw.reshape(N, chalf, L).astype(jnp.float32)

    kernel = functools.partial(_upscale_fused_kernel, chalf=chalf, c1=c1, cmid=cmid,
                               H=H, W=W, SH=SH, SW=SW, pad_top=pad_top,
                               zero_rows=zero_rows)

    out = pl.pallas_call(
        kernel,
        out_shape=jax.ShapeDtypeStruct((N, cout, L), jnp.float32),
        grid_spec=pltpu.PrefetchScalarGridSpec(
            num_scalar_prefetch=0,
            grid=(N,),
            in_specs=[
                pl.BlockSpec((1, cin, HW), lambda n: (n, 0, 0)),        # x
                pl.BlockSpec((1, chalf, L), lambda n: (n, 0, 0)),       # shortcut
                pl.BlockSpec((4 * chalf, cin), lambda n: (0, 0)),       # ConvT weight
                pl.BlockSpec((4 * chalf, 1), lambda n: (0, 0)),         # ConvT bias
                pl.BlockSpec((cmid, 9 * c1), lambda n: (0, 0)),         # conv1 weight
                pl.BlockSpec((cout, 9 * cmid), lambda n: (0, 0)),       # conv2 weight
                pl.BlockSpec((2, W, SW), lambda n: (0, 0, 0)),          # column scatter
                pl.BlockSpec((2, L), lambda n: (0, 0)),                 # column masks
            ],
            out_specs=pl.BlockSpec((1, cout, L), lambda n: (n, 0, 0)),
            scratch_shapes=[
                pltpu.VMEM((chalf, L), jnp.float32),                    # upsampled image
            ],
        ),
        compiler_params=pltpu.CompilerParams(
            dimension_semantics=("parallel",)),
    )(x3, sc3, params["wtm"], params["btm"], params["w1m"], params["w2m"],
      jnp.asarray(cmat), jnp.asarray(masks))

    return out.reshape(N, cout, SH, SW)                                  # NCHW


# ----------------------------------------------------------------------------
# Pure-JAX reference (independent code path) for the correctness check
# ----------------------------------------------------------------------------
def _instance_norm(x):
    mean = jnp.mean(x, axis=(1, 2), keepdims=True)
    var = jnp.mean((x - mean) ** 2, axis=(1, 2), keepdims=True)
    return (x - mean) * lax.rsqrt(var + EPS)


def _lrelu(x):
    return jnp.where(x > 0, x, NEG_SLOPE * x)


def upscale_reference(wt_t, bt, w1_t, w2_t, x_nchw, sc_nchw):
    x = jnp.transpose(x_nchw, (0, 2, 3, 1))       # NCHW -> NHWC
    sc = jnp.transpose(sc_nchw, (0, 2, 3, 1))
    # ConvTranspose2d k=2 s=2:  out[n, 2i+p, 2j+q, o] = sum_c x[n,i,j,c]*wt[c,o,p,q] + b[o]
    up6 = jnp.einsum("nijc,copq->nipjqo", x, wt_t)
    n, h, _, w, _, co = up6.shape
    up = up6.reshape(n, 2 * h, 2 * w, co) + bt
    h_diff = sc.shape[1] - up.shape[1]
    w_diff = sc.shape[2] - up.shape[2]
    up = jnp.pad(up, ((0, 0),
                      (h_diff // 2, h_diff - h_diff // 2),
                      (w_diff // 2, w_diff - w_diff // 2),
                      (0, 0)))
    cat = jnp.concatenate([up, sc], axis=-1)
    dn = ("NHWC", "HWIO", "NHWC")
    w1 = jnp.transpose(w1_t, (2, 3, 1, 0))        # OIHW -> HWIO
    w2 = jnp.transpose(w2_t, (2, 3, 1, 0))
    hid = _lrelu(_instance_norm(
        lax.conv_general_dilated(cat, w1, (1, 1), "SAME", dimension_numbers=dn)))
    hid = _lrelu(_instance_norm(
        lax.conv_general_dilated(hid, w2, (1, 1), "SAME", dimension_numbers=dn)))
    return jnp.transpose(hid, (0, 3, 1, 2))       # NHWC -> NCHW


# ----------------------------------------------------------------------------
if __name__ == "__main__":
    # Module config: UpScale(in_channels=8, out_channels=4)
    in_channels, out_channels = 8, 4
    chalf = in_channels // 2           # 4
    N, H, W = 2, 8, 8                  # coarse feature map
    SH, SW = 2 * H, 2 * W              # shortcut spatial size (16 x 16)

    key = jax.random.PRNGKey(0)
    k_wt, k_bt, k_w1, k_w2, k_x, k_sc = jax.random.split(key, 6)

    # PyTorch-shaped synthetic parameters
    wt_torch = 0.1 * jax.random.normal(k_wt, (in_channels, chalf, 2, 2), jnp.float32)
    bt = 0.1 * jax.random.normal(k_bt, (chalf,), jnp.float32)
    w1_torch = 0.1 * jax.random.normal(k_w1, (out_channels, in_channels, 3, 3), jnp.float32)
    w2_torch = 0.1 * jax.random.normal(k_w2, (out_channels, out_channels, 3, 3), jnp.float32)

    params = make_params(wt_torch, bt, w1_torch, w2_torch)

    x = jax.random.normal(k_x, (N, in_channels, H, W), jnp.float32)       # NCHW
    shortcut = jax.random.normal(k_sc, (N, chalf, SH, SW), jnp.float32)   # NCHW

    out = jax.block_until_ready(jax.jit(upscale_forward)(params, x, shortcut))
    ref = jax.block_until_ready(
        jax.jit(upscale_reference)(wt_torch, bt, w1_torch, w2_torch, x, shortcut))

    assert out.shape == (N, out_channels, SH, SW), out.shape
    max_err = float(jnp.max(jnp.abs(out - ref)))
    assert jnp.allclose(out, ref, atol=1e-3, rtol=1e-3), max_err

    print("KERNEL_OK")
</pallas_src>

<mosaic_0001>
module attributes {stable_mosaic.version = 11 : i64} {
  func.func @_upscale_fused_kernel(%arg0: i32, %arg1: memref<1x8x64xf32, #tpu.memory_space<vmem>>, %arg2: memref<1x4x256xf32, #tpu.memory_space<vmem>>, %arg3: memref<16x8xf32, #tpu.memory_space<vmem>>, %arg4: memref<16x1xf32, #tpu.memory_space<vmem>>, %arg5: memref<4x72xf32, #tpu.memory_space<vmem>>, %arg6: memref<4x36xf32, #tpu.memory_space<vmem>>, %arg7: memref<2x8x16xf32, #tpu.memory_space<vmem>>, %arg8: memref<2x256xf32, #tpu.memory_space<vmem>>, %arg9: memref<1x4x256xf32, #tpu.memory_space<vmem>>, %arg10: memref<4x256xf32, #tpu.memory_space<vmem>>) attributes {dimension_semantics = [#tpu.dimension_semantics<parallel>], iteration_bounds = array<i64: 2>, scalar_prefetch = 0 : i64, scratch_operands = 1 : i64, tpu.core_type = #tpu.core_type<tc>, window_params = [{transform_indices = @transform_0, window_bounds = array<i64: 1, 8, 64>}, {transform_indices = @transform_1, window_bounds = array<i64: 1, 4, 256>}, {pipeline_mode = #tpu.pipeline_mode<synchronous>, transform_indices = @transform_2, window_bounds = array<i64: 16, 8>}, {pipeline_mode = #tpu.pipeline_mode<synchronous>, transform_indices = @transform_3, window_bounds = array<i64: 16, 1>}, {pipeline_mode = #tpu.pipeline_mode<synchronous>, transform_indices = @transform_4, window_bounds = array<i64: 4, 72>}, {pipeline_mode = #tpu.pipeline_mode<synchronous>, transform_indices = @transform_5, window_bounds = array<i64: 4, 36>}, {pipeline_mode = #tpu.pipeline_mode<synchronous>, transform_indices = @transform_6, window_bounds = array<i64: 2, 8, 16>}, {pipeline_mode = #tpu.pipeline_mode<synchronous>, transform_indices = @transform_7, window_bounds = array<i64: 2, 256>}, {transform_indices = @transform_8, window_bounds = array<i64: 1, 4, 256>}]} {
    %c0 = arith.constant 0 : index
    %c0_0 = arith.constant 0 : index
    %0 = vector.load %arg3[%c0, %c0_0] : memref<16x8xf32, #tpu.memory_space<vmem>>, vector<16x8xf32>
    %c0_1 = arith.constant 0 : index
    %c0_2 = arith.constant 0 : index
    %c0_3 = arith.constant 0 : index
    %1 = vector.load %arg1[%c0_1, %c0_2, %c0_3] : memref<1x8x64xf32, #tpu.memory_space<vmem>>, vector<1x8x64xf32>
    %2 = vector.shape_cast %1 : vector<1x8x64xf32> to vector<8x64xf32>
    %cst = arith.constant dense<0.000000e+00> : vector<16x64xf32>
    %3 = tpu.matmul %0, %2, %cst {dimension_numbers = #tpu.dot_dimension_numbers<[1], [0], [0], [1], [0, 0, 1, 1], [], []>} : vector<16x8xf32>, vector<8x64xf32>, vector<16x64xf32> -> vector<16x64xf32>
    %c0_4 = arith.constant 0 : index
    %c0_5 = arith.constant 0 : index
    %4 = vector.load %arg4[%c0_4, %c0_5] : memref<16x1xf32, #tpu.memory_space<vmem>>, vector<16x1xf32>
    %5 = vector.broadcast %4 : vector<16x1xf32> to vector<16x64xf32>
    %6 = arith.addf %3, %5 : vector<16x64xf32>
    %c0_6 = arith.constant 0 : index
    %c0_7 = arith.constant 0 : index
    %c0_8 = arith.constant 0 : index
    %7 = vector.load %arg7[%c0_6, %c0_7, %c0_8] : memref<2x8x16xf32, #tpu.memory_space<vmem>>, vector<1x8x16xf32>
    %8 = vector.shape_cast %7 : vector<1x8x16xf32> to vector<8x16xf32>
    %c1 = arith.constant 1 : index
    %c0_9 = arith.constant 0 : index
    %c0_10 = arith.constant 0 : index
    %9 = vector.load %arg7[%c1, %c0_9, %c0_10] : memref<2x8x16xf32, #tpu.memory_space<vmem>>, vector<1x8x16xf32>
    %10 = vector.shape_cast %9 : vector<1x8x16xf32> to vector<8x16xf32>
    %11 = vector.extract_strided_slice %6 {offsets = [0, 0], sizes = [16, 8], strides = [1, 1]} : vector<16x64xf32> to vector<16x8xf32>
    %cst_11 = arith.constant dense<0.000000e+00> : vector<16x16xf32>
    %12 = tpu.matmul %11, %8, %cst_11 {dimension_numbers = #tpu.dot_dimension_numbers<[1], [0], [0], [1], [0, 0, 1, 1], [], []>} : vector<16x8xf32>, vector<8x16xf32>, vector<16x16xf32> -> vector<16x16xf32>
    %cst_12 = arith.constant dense<0.000000e+00> : vector<16x16xf32>
    %13 = tpu.matmul %11, %10, %cst_12 {dimension_numbers = #tpu.dot_dimension_numbers<[1], [0], [0], [1], [0, 0, 1, 1], [], []>} : vector<16x8xf32>, vector<8x16xf32>, vector<16x16xf32> -> vector<16x16xf32>
    %14 = vector.extract_strided_slice %12 {offsets = [0, 0], sizes = [4, 16], strides = [1, 1]} : vector<16x16xf32> to vector<4x16xf32>
    %15 = vector.extract_strided_slice %13 {offsets = [4, 0], sizes = [4, 16], strides = [1, 1]} : vector<16x16xf32> to vector<4x16xf32>
    %16 = arith.addf %14, %15 : vector<4x16xf32>
    %c0_13 = arith.constant 0 : index
    %c0_14 = arith.constant 0 : index
    %17 = vector.load %arg10[%c0_13, %c0_14] : memref<4x256xf32, #tpu.memory_space<vmem>>, vector<4x16xf32>
    tpu.vector_store %arg10[%c0_13, %c0_14], %16 {strides = array<i32>} : memref<4x256xf32, #tpu.memory_space<vmem>>, vector<4x16xf32>,
    %18 = vector.extract_strided_slice %12 {offsets = [8, 0], sizes = [4, 16], strides = [1, 1]} : vector<16x16xf32> to vector<4x16xf32>
    %19 = vector.extract_strided_slice %13 {offsets = [12, 0], sizes = [4, 16], strides = [1, 1]} : vector<16x16xf32> to vector<4x16xf32>
    %20 = arith.addf %18, %19 : vector<4x16xf32>
    %c0_15 = arith.constant 0 : index
    %c16 = arith.constant 16 : index
    %21 = vector.load %arg10[%c0_15, %c16] : memref<4x256xf32, #tpu.memory_space<vmem>>, vector<4x16xf32>
    tpu.vector_store %arg10[%c0_15, %c16], %20 {strides = array<i32>} : memref<4x256xf32, #tpu.memory_space<vmem>>, vector<4x16xf32>,
    %22 = vector.extract_strided_slice %6 {offsets = [0, 8], sizes = [16, 8], strides = [1, 1]} : vector<16x64xf32> to vector<16x8xf32>
    %cst_16 = arith.constant dense<0.000000e+00> : vector<16x16xf32>
    %23 = tpu.matmul %22, %8, %cst_16 {dimension_numbers = #tpu.dot_dimension_numbers<[1], [0], [0], [1], [0, 0, 1, 1], [], []>} : vector<16x8xf32>, vector<8x16xf32>, vector<16x16xf32> -> vector<16x16xf32>
    %cst_17 = arith.constant dense<0.000000e+00> : vector<16x16xf32>
    %24 = tpu.matmul %22, %10, %cst_17 {dimension_numbers = #tpu.dot_dimension_numbers<[1], [0], [0], [1], [0, 0, 1, 1], [], []>} : vector<16x8xf32>, vector<8x16xf32>, vector<16x16xf32> -> vector<16x16xf32>
    %25 = vector.extract_strided_slice %23 {offsets = [0, 0], sizes = [4, 16], strides = [1, 1]} : vector<16x16xf32> to vector<4x16xf32>
    %26 = vector.extract_strided_slice %24 {offsets = [4, 0], sizes = [4, 16], strides = [1, 1]} : vector<16x16xf32> to vector<4x16xf32>
    %27 = arith.addf %25, %26 : vector<4x16xf32>
    %c0_18 = arith.constant 0 : index
    %c32 = arith.constant 32 : index
    %28 = vector.load %arg10[%c0_18, %c32] : memref<4x256xf32, #tpu.memory_space<vmem>>, vector<4x16xf32>
    tpu.vector_store %arg10[%c0_18, %c32], %27 {strides = array<i32>} : memref<4x256xf32, #tpu.memory_space<vmem>>, vector<4x16xf32>,
    %29 = vector.extract_strided_slice %23 {offsets = [8, 0], sizes = [4, 16], strides = [1, 1]} : vector<16x16xf32> to vector<4x16xf32>
    %30 = vector.extract_strided_slice %24 {offsets = [12, 0], sizes = [4, 16], strides = [1, 1]} : vector<16x16xf32> to vector<4x16xf32>
    %31 = arith.addf %29, %30 : vector<4x16xf32>
    %c0_19 = arith.constant 0 : index
    %c48 = arith.constant 48 : index
    %32 = vector.load %arg10[%c0_19, %c48] : memref<4x256xf32, #tpu.memory_space<vmem>>, vector<4x16xf32>
    tpu.vector_store %arg10[%c0_19, %c48], %31 {strides = array<i32>} : memref<4x256xf32, #tpu.memory_space<vmem>>, vector<4x16xf32>,
    %33 = vector.extract_strided_slice %6 {offsets = [0, 16], sizes = [16, 8], strides = [1, 1]} : vector<16x64xf32> to vector<16x8xf32>
    %cst_20 = arith.constant dense<0.000000e+00> : vector<16x16xf32>
    %34 = tpu.matmul %33, %8, %cst_20 {dimension_numbers = #tpu.dot_dimension_numbers<[1], [0], [0], [1], [0, 0, 1, 1], [], []>} : vector<16x8xf32>, vector<8x16xf32>, vector<16x16xf32> -> vector<16x16xf32>
    %cst_21 = arith.constant dense<0.000000e+00> : vector<16x16xf32>
    %35 = tpu.matmul %33, %10, %cst_21 {dimension_numbers = #tpu.dot_dimension_numbers<[1], [0], [0], [1], [0, 0, 1, 1], [], []>} : vector<16x8xf32>, vector<8x16xf32>, vector<16x16xf32> -> vector<16x16xf32>
    %36 = vector.extract_strided_slice %34 {offsets = [0, 0], sizes = [4, 16], strides = [1, 1]} : vector<16x16xf32> to vector<4x16xf32>
    %37 = vector.extract_strided_slice %35 {offsets = [4, 0], sizes = [4, 16], strides = [1, 1]} : vector<16x16xf32> to vector<4x16xf32>
    %38 = arith.addf %36, %37 : vector<4x16xf32>
    %c0_22 = arith.constant 0 : index
    %c64 = arith.constant 64 : index
    %39 = vector.load %arg10[%c0_22, %c64] : memref<4x256xf32, #tpu.memory_space<vmem>>, vector<4x16xf32>
    tpu.vector_store %arg10[%c0_22, %c64], %38 {strides = array<i32>} : memref<4x256xf32, #tpu.memory_space<vmem>>, vector<4x16xf32>,
    %40 = vector.extract_strided_slice %34 {offsets = [8, 0], sizes = [4, 16], strides = [1, 1]} : vector<16x16xf32> to vector<4x16xf32>
    %41 = vector.extract_strided_slice %35 {offsets = [12, 0], sizes = [4, 16], strides = [1, 1]} : vector<16x16xf32> to vector<4x16xf32>
    %42 = arith.addf %40, %41 : vector<4x16xf32>
    %c0_23 = arith.constant 0 : index
    %c80 = arith.constant 80 : index
    %43 = vector.load %arg10[%c0_23, %c80] : memref<4x256xf32, #tpu.memory_space<vmem>>, vector<4x16xf32>
    tpu.vector_store %arg10[%c0_23, %c80], %42 {strides = array<i32>} : memref<4x256xf32, #tpu.memory_space<vmem>>, vector<4x16xf32>,
    %44 = vector.extract_strided_slice %6 {offsets = [0, 24], sizes = [16, 8], strides = [1, 1]} : vector<16x64xf32> to vector<16x8xf32>
    %cst_24 = arith.constant dense<0.000000e+00> : vector<16x16xf32>
    %45 = tpu.matmul %44, %8, %cst_24 {dimension_numbers = #tpu.dot_dimension_numbers<[1], [0], [0], [1], [0, 0, 1, 1], [], []>} : vector<16x8xf32>, vector<8x16xf32>, vector<16x16xf32> -> vector<16x16xf32>
    %cst_25 = arith.constant dense<0.000000e+00> : vector<16x16xf32>
    %46 = tpu.matmul %44, %10, %cst_25 {dimension_numbers = #tpu.dot_dimension_numbers<[1], [0], [0], [1], [0, 0, 1, 1], [], []>} : vector<16x8xf32>, vector<8x16xf32>, vector<16x16xf32> -> vector<16x16xf32>
    %47 = vector.extract_strided_slice %45 {offsets = [0, 0], sizes = [4, 16], strides = [1, 1]} : vector<16x16xf32> to vector<4x16xf32>
    %48 = vector.extract_strided_slice %46 {offsets = [4, 0], sizes = [4, 16], strides = [1, 1]} : vector<16x16xf32> to vector<4x16xf32>
    %49 = arith.addf %47, %48 : vector<4x16xf32>
    %c0_26 = arith.constant 0 : index
    %c96 = arith.constant 96 : index
    %50 = vector.load %arg10[%c0_26, %c96] : memref<4x256xf32, #tpu.memory_space<vmem>>, vector<4x16xf32>
    tpu.vector_store %arg10[%c0_26, %c96], %49 {strides = array<i32>} : memref<4x256xf32, #tpu.memory_space<vmem>>, vector<4x16xf32>,
    %51 = vector.extract_strided_slice %45 {offsets = [8, 0], sizes = [4, 16], strides = [1, 1]} : vector<16x16xf32> to vector<4x16xf32>
    %52 = vector.extract_strided_slice %46 {offsets = [12, 0], sizes = [4, 16], strides = [1, 1]} : vector<16x16xf32> to vector<4x16xf32>
    %53 = arith.addf %51, %52 : vector<4x16xf32>
    %c0_27 = arith.constant 0 : index
    %c112 = arith.constant 112 : index
    %54 = vector.load %arg10[%c0_27, %c112] : memref<4x256xf32, #tpu.memory_space<vmem>>, vector<4x16xf32>
    tpu.vector_store %arg10[%c0_27, %c112], %53 {strides = array<i32>} : memref<4x256xf32, #tpu.memory_space<vmem>>, vector<4x16xf32>,
    %55 = vector.extract_strided_slice %6 {offsets = [0, 32], sizes = [16, 8], strides = [1, 1]} : vector<16x64xf32> to vector<16x8xf32>
    %cst_28 = arith.constant dense<0.000000e+00> : vector<16x16xf32>
    %56 = tpu.matmul %55, %8, %cst_28 {dimension_numbers = #tpu.dot_dimension_numbers<[1], [0], [0], [1], [0, 0, 1, 1], [], []>} : vector<16x8xf32>, vector<8x16xf32>, vector<16x16xf32> -> vector<16x16xf32>
    %cst_29 = arith.constant dense<0.000000e+00> : vector<16x16xf32>
    %57 = tpu.matmul %55, %10, %cst_29 {dimension_numbers = #tpu.dot_dimension_numbers<[1], [0], [0], [1], [0, 0, 1, 1], [], []>} : vector<16x8xf32>, vector<8x16xf32>, vector<16x16xf32> -> vector<16x16xf32>
    %58 = vector.extract_strided_slice %56 {offsets = [0, 0], sizes = [4, 16], strides = [1, 1]} : vector<16x16xf32> to vector<4x16xf32>
    %59 = vector.extract_strided_slice %57 {offsets = [4, 0], sizes = [4, 16], strides = [1, 1]} : vector<16x16xf32> to vector<4x16xf32>
    %60 = arith.addf %58, %59 : vector<4x16xf32>
    %c0_30 = arith.constant 0 : index
    %c128 = arith.constant 128 : index
    %61 = vector.load %arg10[%c0_30, %c128] : memref<4x256xf32, #tpu.memory_space<vmem>>, vector<4x16xf32>
    tpu.vector_store %arg10[%c0_30, %c128], %60 {strides = array<i32>} : memref<4x256xf32, #tpu.memory_space<vmem>>, vector<4x16xf32>,
    %62 = vector.extract_strided_slice %56 {offsets = [8, 0], sizes = [4, 16], strides = [1, 1]} : vector<16x16xf32> to vector<4x16xf32>
    %63 = vector.extract_strided_slice %57 {offsets = [12, 0], sizes = [4, 16], strides = [1, 1]} : vector<16x16xf32> to vector<4x16xf32>
    %64 = arith.addf %62, %63 : vector<4x16xf32>
    %c0_31 = arith.constant 0 : index
    %c144 = arith.constant 144 : index
    %65 = vector.load %arg10[%c0_31, %c144] : memref<4x256xf32, #tpu.memory_space<vmem>>, vector<4x16xf32>
    tpu.vector_store %arg10[%c0_31, %c144], %64 {strides = array<i32>} : memref<4x256xf32, #tpu.memory_space<vmem>>, vector<4x16xf32>,
    %66 = vector.extract_strided_slice %6 {offsets = [0, 40], sizes = [16, 8], strides = [1, 1]} : vector<16x64xf32> to vector<16x8xf32>
    %cst_32 = arith.constant dense<0.000000e+00> : vector<16x16xf32>
    %67 = tpu.matmul %66, %8, %cst_32 {dimension_numbers = #tpu.dot_dimension_numbers<[1], [0], [0], [1], [0, 0, 1, 1], [], []>} : vector<16x8xf32>, vector<8x16xf32>, vector<16x16xf32> -> vector<16x16xf32>
    %cst_33 = arith.constant dense<0.000000e+00> : vector<16x16xf32>
    %68 = tpu.matmul %66, %10, %cst_33 {dimension_numbers = #tpu.dot_dimension_numbers<[1], [0], [0], [1], [0, 0, 1, 1], [], []>} : vector<16x8xf32>, vector<8x16xf32>, vector<16x16xf32> -> vector<16x16xf32>
    %69 = vector.extract_strided_slice %67 {offsets = [0, 0], sizes = [4, 16], strides = [1, 1]} : vector<16x16xf32> to vector<4x16xf32>
    %70 = vector.extract_strided_slice %68 {offsets = [4, 0], sizes = [4, 16], strides = [1, 1]} : vector<16x16xf32> to vector<4x16xf32>
    %71 = arith.addf %69, %70 : vector<4x16xf32>
    %c0_34 = arith.constant 0 : index
    %c160 = arith.constant 160 : index
    %72 = vector.load %arg10[%c0_34, %c160] : memref<4x256xf32, #tpu.memory_space<vmem>>, vector<4x16xf32>
    tpu.vector_store %arg10[%c0_34, %c160], %71 {strides = array<i32>} : memref<4x256xf32, #tpu.memory_space<vmem>>, vector<4x16xf32>,
    %73 = vector.extract_strided_slice %67 {offsets = [8, 0], sizes = [4, 16], strides = [1, 1]} : vector<16x16xf32> to vector<4x16xf32>
    %74 = vector.extract_strided_slice %68 {offsets = [12, 0], sizes = [4, 16], strides = [1, 1]} : vector<16x16xf32> to vector<4x16xf32>
    %75 = arith.addf %73, %74 : vector<4x16xf32>
    %c0_35 = arith.constant 0 : index
    %c176 = arith.constant 176 : index
    %76 = vector.load %arg10[%c0_35, %c176] : memref<4x256xf32, #tpu.memory_space<vmem>>, vector<4x16xf32>
    tpu.vector_store %arg10[%c0_35, %c176], %75 {strides = array<i32>} : memref<4x256xf32, #tpu.memory_space<vmem>>, vector<4x16xf32>,
    %77 = vector.extract_strided_slice %6 {offsets = [0, 48], sizes = [16, 8], strides = [1, 1]} : vector<16x64xf32> to vector<16x8xf32>
    %cst_36 = arith.constant dense<0.000000e+00> : vector<16x16xf32>
    %78 = tpu.matmul %77, %8, %cst_36 {dimension_numbers = #tpu.dot_dimension_numbers<[1], [0], [0], [1], [0, 0, 1, 1], [], []>} : vector<16x8xf32>, vector<8x16xf32>, vector<16x16xf32> -> vector<16x16xf32>
    %cst_37 = arith.constant dense<0.000000e+00> : vector<16x16xf32>
    %79 = tpu.matmul %77, %10, %cst_37 {dimension_numbers = #tpu.dot_dimension_numbers<[1], [0], [0], [1], [0, 0, 1, 1], [], []>} : vector<16x8xf32>, vector<8x16xf32>, vector<16x16xf32> -> vector<16x16xf32>
    %80 = vector.extract_strided_slice %78 {offsets = [0, 0], sizes = [4, 16], strides = [1, 1]} : vector<16x16xf32> to vector<4x16xf32>
    %81 = vector.extract_strided_slice %79 {offsets = [4, 0], sizes = [4, 16], strides = [1, 1]} : vector<16x16xf32> to vector<4x16xf32>
    %82 = arith.addf %80, %81 : vector<4x16xf32>
    %c0_38 = arith.constant 0 : index
    %c192 = arith.constant 192 : index
    %83 = vector.load %arg10[%c0_38, %c192] : memref<4x256xf32, #tpu.memory_space<vmem>>, vector<4x16xf32>
    tpu.vector_store %arg10[%c0_38, %c192], %82 {strides = array<i32>} : memref<4x256xf32, #tpu.memory_space<vmem>>, vector<4x16xf32>,
    %84 = vector.extract_strided_slice %78 {offsets = [8, 0], sizes = [4, 16], strides = [1, 1]} : vector<16x16xf32> to vector<4x16xf32>
    %85 = vector.extract_strided_slice %79 {offsets = [12, 0], sizes = [4, 16], strides = [1, 1]} : vector<16x16xf32> to vector<4x16xf32>
    %86 = arith.addf %84, %85 : vector<4x16xf32>
    %c0_39 = arith.constant 0 : index
    %c208 = arith.constant 208 : index
    %87 = vector.load %arg10[%c0_39, %c208] : memref<4x256xf32, #tpu.memory_space<vmem>>, vector<4x16xf32>
    tpu.vector_store %arg10[%c0_39, %c208], %86 {strides = array<i32>} : memref<4x256xf32, #tpu.memory_space<vmem>>, vector<4x16xf32>,
    %88 = vector.extract_strided_slice %6 {offsets = [0, 56], sizes = [16, 8], strides = [1, 1]} : vector<16x64xf32> to vector<16x8xf32>
    %cst_40 = arith.constant dense<0.000000e+00> : vector<16x16xf32>
    %89 = tpu.matmul %88, %8, %cst_40 {dimension_numbers = #tpu.dot_dimension_numbers<[1], [0], [0], [1], [0, 0, 1, 1], [], []>} : vector<16x8xf32>, vector<8x16xf32>, vector<16x16xf32> -> vector<16x16xf32>
    %cst_41 = arith.constant dense<0.000000e+00> : vector<16x16xf32>
    %90 = tpu.matmul %88, %10, %cst_41 {dimension_numbers = #tpu.dot_dimension_numbers<[1], [0], [0], [1], [0, 0, 1, 1], [], []>} : vector<16x8xf32>, vector<8x16xf32>, vector<16x16xf32> -> vector<16x16xf32>
    %91 = vector.extract_strided_slice %89 {offsets = [0, 0], sizes = [4, 16], strides = [1, 1]} : vector<16x16xf32> to vector<4x16xf32>
    %92 = vector.extract_strided_slice %90 {offsets = [4, 0], sizes = [4, 16], strides = [1, 1]} : vector<16x16xf32> to vector<4x16xf32>
    %93 = arith.addf %91, %92 : vector<4x16xf32>
    %c0_42 = arith.constant 0 : index
    %c224 = arith.constant 224 : index
    %94 = vector.load %arg10[%c0_42, %c224] : memref<4x256xf32, #tpu.memory_space<vmem>>, vector<4x16xf32>
    tpu.vector_store %arg10[%c0_42, %c224], %93 {strides = array<i32>} : memref<4x256xf32, #tpu.memory_space<vmem>>, vector<4x16xf32>,
    %95 = vector.extract_strided_slice %89 {offsets = [8, 0], sizes = [4, 16], strides = [1, 1]} : vector<16x16xf32> to vector<4x16xf32>
    %96 = vector.extract_strided_slice %90 {offsets = [12, 0], sizes = [4, 16], strides = [1, 1]} : vector<16x16xf32> to vector<4x16xf32>
    %97 = arith.addf %95, %96 : vector<4x16xf32>
    %c0_43 = arith.constant 0 : index
    %c240 = arith.constant 240 : index
    %98 = vector.load %arg10[%c0_43, %c240] : memref<4x256xf32, #tpu.memory_space<vmem>>, vector<4x16xf32>
    tpu.vector_store %arg10[%c0_43, %c240], %97 {strides = array<i32>} : memref<4x256xf32, #tpu.memory_space<vmem>>, vector<4x16xf32>,
    %c0_44 = arith.constant 0 : index
    %c0_45 = arith.constant 0 : index
    %99 = vector.load %arg8[%c0_44, %c0_45] : memref<2x256xf32, #tpu.memory_space<vmem>>, vector<1x256xf32>
    %c1_46 = arith.constant 1 : index
    %c0_47 = arith.constant 0 : index
    %100 = vector.load %arg8[%c1_46, %c0_47] : memref<2x256xf32, #tpu.memory_space<vmem>>, vector<1x256xf32>
    %c0_48 = arith.constant 0 : index
    %c0_49 = arith.constant 0 : index
    %101 = vector.load %arg10[%c0_48, %c0_49] : memref<4x256xf32, #tpu.memory_space<vmem>>, vector<4x256xf32>
    %c0_50 = arith.constant 0 : index
    %c0_51 = arith.constant 0 : index
    %c0_52 = arith.constant 0 : index
    %102 = vector.load %arg2[%c0_50, %c0_51, %c0_52] : memref<1x4x256xf32, #tpu.memory_space<vmem>>, vector<1x4x256xf32>
    %103 = vector.shape_cast %102 : vector<1x4x256xf32> to vector<4x256xf32>
    %cst_53 = arith.constant 0.000000e+00 : f32
    %104 = vector.broadcast %cst_53 : f32 to vector<4x17xf32>
    %105 = tpu.concatenate %104, %101, %104 in 1 : vector<4x17xf32>, vector<4x256xf32>, vector<4x17xf32> -> vector<4x290xf32>
    %106 = vector.extract_strided_slice %105 {offsets = [0, 0], sizes = [4, 256], strides = [1, 1]} : vector<4x290xf32> to vector<4x256xf32>
    %107 = vector.broadcast %99 : vector<1x256xf32> to vector<4x256xf32>
    %108 = arith.mulf %106, %107 : vector<4x256xf32>
    %c0_54 = arith.constant 0 : index
    %c0_55 = arith.constant 0 : index
    %109 = vector.load %arg5[%c0_54, %c0_55] : memref<4x72xf32, #tpu.memory_space<vmem>>, vector<4x4xf32>
    %cst_56 = arith.constant dense<0.000000e+00> : vector<4x256xf32>
    %110 = tpu.matmul %109, %108, %cst_56 {dimension_numbers = #tpu.dot_dimension_numbers<[1], [0], [0], [1], [0, 0, 1, 1], [], []>} : vector<4x4xf32>, vector<4x256xf32>, vector<4x256xf32> -> vector<4x256xf32>
    %111 = vector.extract_strided_slice %105 {offsets = [0, 1], sizes = [4, 256], strides = [1, 1]} : vector<4x290xf32> to vector<4x256xf32>
    %c0_57 = arith.constant 0 : index
    %c8 = arith.constant 8 : index
    %112 = vector.load %arg5[%c0_57, %c8] : memref<4x72xf32, #tpu.memory_space<vmem>>, vector<4x4xf32>
    %cst_58 = arith.constant dense<0.000000e+00> : vector<4x256xf32>
    %113 = tpu.matmul %112, %111, %cst_58 {dimension_numbers = #tpu.dot_dimension_numbers<[1], [0], [0], [1], [0, 0, 1, 1], [], []>} : vector<4x4xf32>, vector<4x256xf32>, vector<4x256xf32> -> vector<4x256xf32>
    %114 = arith.addf %110, %113 : vector<4x256xf32>
    %115 = vector.extract_strided_slice %105 {offsets = [0, 2], sizes = [4, 256], strides = [1, 1]} : vector<4x290xf32> to vector<4x256xf32>
    %116 = vector.broadcast %100 : vector<1x256xf32> to vector<4x256xf32>
    %117 = arith.mulf %115, %116 : vector<4x256xf32>
    %c0_59 = arith.constant 0 : index
    %c16_60 = arith.constant 16 : index
    %118 = vector.load %arg5[%c0_59, %c16_60] : memref<4x72xf32, #tpu.memory_space<vmem>>, vector<4x4xf32>
    %cst_61 = arith.constant dense<0.000000e+00> : vector<4x256xf32>
    %119 = tpu.matmul %118, %117, %cst_61 {dimension_numbers = #tpu.dot_dimension_numbers<[1], [0], [0], [1], [0, 0, 1, 1], [], []>} : vector<4x4xf32>, vector<4x256xf32>, vector<4x256xf32> -> vector<4x256xf32>
    %120 = arith.addf %114, %119 : vector<4x256xf32>
    %121 = vector.extract_strided_slice %105 {offsets = [0, 16], sizes = [4, 256], strides = [1, 1]} : vector<4x290xf32> to vector<4x256xf32>
    %122 = vector.broadcast %99 : vector<1x256xf32> to vector<4x256xf32>
    %123 = arith.mulf %121, %122 : vector<4x256xf32>
    %c0_62 = arith.constant 0 : index
    %c24 = arith.constant 24 : index
    %124 = vector.load %arg5[%c0_62, %c24] : memref<4x72xf32, #tpu.memory_space<vmem>>, vector<4x4xf32>
    %cst_63 = arith.constant dense<0.000000e+00> : vector<4x256xf32>
    %125 = tpu.matmul %124, %123, %cst_63 {dimension_numbers = #tpu.dot_dimension_numbers<[1], [0], [0], [1], [0, 0, 1, 1], [], []>} : vector<4x4xf32>, vector<4x256xf32>, vector<4x256xf32> -> vector<4x256xf32>
    %126 = arith.addf %120, %125 : vector<4x256xf32>
    %127 = vector.extract_strided_slice %105 {offsets = [0, 17], sizes = [4, 256], strides = [1, 1]} : vector<4x290xf32> to vector<4x256xf32>
    %c0_64 = arith.constant 0 : index
    %c32_65 = arith.constant 32 : index
    %128 = vector.load %arg5[%c0_64, %c32_65] : memref<4x72xf32, #tpu.memory_space<vmem>>, vector<4x4xf32>
    %cst_66 = arith.constant dense<0.000000e+00> : vector<4x256xf32>
    %129 = tpu.matmul %128, %127, %cst_66 {dimension_numbers = #tpu.dot_dimension_numbers<[1], [0], [0], [1], [0, 0, 1, 1], [], []>} : vector<4x4xf32>, vector<4x256xf32>, vector<4x256xf32> -> vector<4x256xf32>
    %130 = arith.addf %126, %129 : vector<4x256xf32>
    %131 = vector.extract_strided_slice %105 {offsets = [0, 18], sizes = [4, 256], strides = [1, 1]} : vector<4x290xf32> to vector<4x256xf32>
    %132 = vector.broadcast %100 : vector<1x256xf32> to vector<4x256xf32>
    %133 = arith.mulf %131, %132 : vector<4x256xf32>
    %c0_67 = arith.constant 0 : index
    %c40 = arith.constant 40 : index
    %134 = vector.load %arg5[%c0_67, %c40] : memref<4x72xf32, #tpu.memory_space<vmem>>, vector<4x4xf32>
    %cst_68 = arith.constant dense<0.000000e+00> : vector<4x256xf32>
    %135 = tpu.matmul %134, %133, %cst_68 {dimension_numbers = #tpu.dot_dimension_numbers<[1], [0], [0], [1], [0, 0, 1, 1], [], []>} : vector<4x4xf32>, vector<4x256xf32>, vector<4x256xf32> -> vector<4x256xf32>
    %136 = arith.addf %130, %135 : vector<4x256xf32>
    %137 = vector.extract_strided_slice %105 {offsets = [0, 32], sizes = [4, 256], strides = [1, 1]} : vector<4x290xf32> to vector<4x256xf32>
    %138 = vector.broadcast %99 : vector<1x256xf32> to vector<4x256xf32>
    %139 = arith.mulf %137, %138 : vector<4x256xf32>
    %c0_69 = arith.constant 0 : index
    %c48_70 = arith.constant 48 : index
    %140 = vector.load %arg5[%c0_69, %c48_70] : memref<4x72xf32, #tpu.memory_space<vmem>>, vector<4x4xf32>
    %cst_71 = arith.constant dense<0.000000e+00> : vector<4x256xf32>
    %141 = tpu.matmul %140, %139, %cst_71 {dimension_numbers = #tpu.dot_dimension_numbers<[1], [0], [0], [1], [0, 0, 1, 1], [], []>} : vector<4x4xf32>, vector<4x256xf32>, vector<4x256xf32> -> vector<4x256xf32>
    %142 = arith.addf %136, %141 : vector<4x256xf32>
    %143 = vector.extract_strided_slice %105 {offsets = [0, 33], sizes = [4, 256], strides = [1, 1]} : vector<4x290xf32> to vector<4x256xf32>
    %c0_72 = arith.constant 0 : index
    %c56 = arith.constant 56 : index
    %144 = vector.load %arg5[%c0_72, %c56] : memref<4x72xf32, #tpu.memory_space<vmem>>, vector<4x4xf32>
    %cst_73 = arith.constant dense<0.000000e+00> : vector<4x256xf32>
    %145 = tpu.matmul %144, %143, %cst_73 {dimension_numbers = #tpu.dot_dimension_numbers<[1], [0], [0], [1], [0, 0, 1, 1], [], []>} : vector<4x4xf32>, vector<4x256xf32>, vector<4x256xf32> -> vector<4x256xf32>
    %146 = arith.addf %142, %145 : vector<4x256xf32>
    %147 = vector.extract_strided_slice %105 {offsets = [0, 34], sizes = [4, 256], strides = [1, 1]} : vector<4x290xf32> to vector<4x256xf32>
    %148 = vector.broadcast %100 : vector<1x256xf32> to vector<4x256xf32>
    %149 = arith.mulf %147, %148 : vector<4x256xf32>
    %c0_74 = arith.constant 0 : index
    %c64_75 = arith.constant 64 : index
    %150 = vector.load %arg5[%c0_74, %c64_75] : memref<4x72xf32, #tpu.memory_space<vmem>>, vector<4x4xf32>
    %cst_76 = arith.constant dense<0.000000e+00> : vector<4x256xf32>
    %151 = tpu.matmul %150, %149, %cst_76 {dimension_numbers = #tpu.dot_dimension_numbers<[1], [0], [0], [1], [0, 0, 1, 1], [], []>} : vector<4x4xf32>, vector<4x256xf32>, vector<4x256xf32> -> vector<4x256xf32>
    %152 = arith.addf %146, %151 : vector<4x256xf32>
    %cst_77 = arith.constant 0.000000e+00 : f32
    %153 = vector.broadcast %cst_77 : f32 to vector<4x17xf32>
    %154 = tpu.concatenate %153, %103, %153 in 1 : vector<4x17xf32>, vector<4x256xf32>, vector<4x17xf32> -> vector<4x290xf32>
    %155 = vector.extract_strided_slice %154 {offsets = [0, 0], sizes = [4, 256], strides = [1, 1]} : vector<4x290xf32> to vector<4x256xf32>
    %156 = vector.broadcast %99 : vector<1x256xf32> to vector<4x256xf32>
    %157 = arith.mulf %155, %156 : vector<4x256xf32>
    %c0_78 = arith.constant 0 : index
    %c4 = arith.constant 4 : index
    %158 = vector.load %arg5[%c0_78, %c4] : memref<4x72xf32, #tpu.memory_space<vmem>>, vector<4x4xf32>
    %cst_79 = arith.constant dense<0.000000e+00> : vector<4x256xf32>
    %159 = tpu.matmul %158, %157, %cst_79 {dimension_numbers = #tpu.dot_dimension_numbers<[1], [0], [0], [1], [0, 0, 1, 1], [], []>} : vector<4x4xf32>, vector<4x256xf32>, vector<4x256xf32> -> vector<4x256xf32>
    %160 = vector.extract_strided_slice %154 {offsets = [0, 1], sizes = [4, 256], strides = [1, 1]} : vector<4x290xf32> to vector<4x256xf32>
    %c0_80 = arith.constant 0 : index
    %c12 = arith.constant 12 : index
    %161 = vector.load %arg5[%c0_80, %c12] : memref<4x72xf32, #tpu.memory_space<vmem>>, vector<4x4xf32>
    %cst_81 = arith.constant dense<0.000000e+00> : vector<4x256xf32>
    %162 = tpu.matmul %161, %160, %cst_81 {dimension_numbers = #tpu.dot_dimension_numbers<[1], [0], [0], [1], [0, 0, 1, 1], [], []>} : vector<4x4xf32>, vector<4x256xf32>, vector<4x256xf32> -> vector<4x256xf32>
    %163 = arith.addf %159, %162 : vector<4x256xf32>
    %164 = vector.extract_strided_slice %154 {offsets = [0, 2], sizes = [4, 256], strides = [1, 1]} : vector<4x290xf32> to vector<4x256xf32>
    %165 = vector.broadcast %100 : vector<1x256xf32> to vector<4x256xf32>
    %166 = arith.mulf %164, %165 : vector<4x256xf32>
    %c0_82 = arith.constant 0 : index
    %c20 = arith.constant 20 : index
    %167 = vector.load %arg5[%c0_82, %c20] : memref<4x72xf32, #tpu.memory_space<vmem>>, vector<4x4xf32>
    %cst_83 = arith.constant dense<0.000000e+00> : vector<4x256xf32>
    %168 = tpu.matmul %167, %166, %cst_83 {dimension_numbers = #tpu.dot_dimension_numbers<[1], [0], [0], [1], [0, 0, 1, 1], [], []>} : vector<4x4xf32>, vector<4x256xf32>, vector<4x256xf32> -> vector<4x256xf32>
    %169 = arith.addf %163, %168 : vector<4x256xf32>
    %170 = vector.extract_strided_slice %154 {offsets = [0, 16], sizes = [4, 256], strides = [1, 1]} : vector<4x290xf32> to vector<4x256xf32>
    %171 = vector.broadcast %99 : vector<1x256xf32> to vector<4x256xf32>
    %172 = arith.mulf %170, %171 : vector<4x256xf32>
    %c0_84 = arith.constant 0 : index
    %c28 = arith.constant 28 : index
    %173 = vector.load %arg5[%c0_84, %c28] : memref<4x72xf32, #tpu.memory_space<vmem>>, vector<4x4xf32>
    %cst_85 = arith.constant dense<0.000000e+00> : vector<4x256xf32>
    %174 = tpu.matmul %173, %172, %cst_85 {dimension_numbers = #tpu.dot_dimension_numbers<[1], [0], [0], [1], [0, 0, 1, 1], [], []>} : vector<4x4xf32>, vector<4x256xf32>, vector<4x256xf32> -> vector<4x256xf32>
    %175 = arith.addf %169, %174 : vector<4x256xf32>
    %176 = vector.extract_strided_slice %154 {offsets = [0, 17], sizes = [4, 256], strides = [1, 1]} : vector<4x290xf32> to vector<4x256xf32>
    %c0_86 = arith.constant 0 : index
    %c36 = arith.constant 36 : index
    %177 = vector.load %arg5[%c0_86, %c36] : memref<4x72xf32, #tpu.memory_space<vmem>>, vector<4x4xf32>
    %cst_87 = arith.constant dense<0.000000e+00> : vector<4x256xf32>
    %178 = tpu.matmul %177, %176, %cst_87 {dimension_numbers = #tpu.dot_dimension_numbers<[1], [0], [0], [1], [0, 0, 1, 1], [], []>} : vector<4x4xf32>, vector<4x256xf32>, vector<4x256xf32> -> vector<4x256xf32>
    %179 = arith.addf %175, %178 : vector<4x256xf32>
    %180 = vector.extract_strided_slice %154 {offsets = [0, 18], sizes = [4, 256], strides = [1, 1]} : vector<4x290xf32> to vector<4x256xf32>
    %181 = vector.broadcast %100 : vector<1x256xf32> to vector<4x256xf32>
    %182 = arith.mulf %180, %181 : vector<4x256xf32>
    %c0_88 = arith.constant 0 : index
    %c44 = arith.constant 44 : index
    %183 = vector.load %arg5[%c0_88, %c44] : memref<4x72xf32, #tpu.memory_space<vmem>>, vector<4x4xf32>
    %cst_89 = arith.constant dense<0.000000e+00> : vector<4x256xf32>
    %184 = tpu.matmul %183, %182, %cst_89 {dimension_numbers = #tpu.dot_dimension_numbers<[1], [0], [0], [1], [0, 0, 1, 1], [], []>} : vector<4x4xf32>, vector<4x256xf32>, vector<4x256xf32> -> vector<4x256xf32>
    %185 = arith.addf %179, %184 : vector<4x256xf32>
    %186 = vector.extract_strided_slice %154 {offsets = [0, 32], sizes = [4, 256], strides = [1, 1]} : vector<4x290xf32> to vector<4x256xf32>
    %187 = vector.broadcast %99 : vector<1x256xf32> to vector<4x256xf32>
    %188 = arith.mulf %186, %187 : vector<4x256xf32>
    %c0_90 = arith.constant 0 : index
    %c52 = arith.constant 52 : index
    %189 = vector.load %arg5[%c0_90, %c52] : memref<4x72xf32, #tpu.memory_space<vmem>>, vector<4x4xf32>
    %cst_91 = arith.constant dense<0.000000e+00> : vector<4x256xf32>
    %190 = tpu.matmul %189, %188, %cst_91 {dimension_numbers = #tpu.dot_dimension_numbers<[1], [0], [0], [1], [0, 0, 1, 1], [], []>} : vector<4x4xf32>, vector<4x256xf32>, vector<4x256xf32> -> vector<4x256xf32>
    %191 = arith.addf %185, %190 : vector<4x256xf32>
    %192 = vector.extract_strided_slice %154 {offsets = [0, 33], sizes = [4, 256], strides = [1, 1]} : vector<4x290xf32> to vector<4x256xf32>
    %c0_92 = arith.constant 0 : index
    %c60 = arith.constant 60 : index
    %193 = vector.load %arg5[%c0_92, %c60] : memref<4x72xf32, #tpu.memory_space<vmem>>, vector<4x4xf32>
    %cst_93 = arith.constant dense<0.000000e+00> : vector<4x256xf32>
    %194 = tpu.matmul %193, %192, %cst_93 {dimension_numbers = #tpu.dot_dimension_numbers<[1], [0], [0], [1], [0, 0, 1, 1], [], []>} : vector<4x4xf32>, vector<4x256xf32>, vector<4x256xf32> -> vector<4x256xf32>
    %195 = arith.addf %191, %194 : vector<4x256xf32>
    %196 = vector.extract_strided_slice %154 {offsets = [0, 34], sizes = [4, 256], strides = [1, 1]} : vector<4x290xf32> to vector<4x256xf32>
    %197 = vector.broadcast %100 : vector<1x256xf32> to vector<4x256xf32>
    %198 = arith.mulf %196, %197 : vector<4x256xf32>
    %c0_94 = arith.constant 0 : index
    %c68 = arith.constant 68 : index
    %199 = vector.load %arg5[%c0_94, %c68] : memref<4x72xf32, #tpu.memory_space<vmem>>, vector<4x4xf32>
    %cst_95 = arith.constant dense<0.000000e+00> : vector<4x256xf32>
    %200 = tpu.matmul %199, %198, %cst_95 {dimension_numbers = #tpu.dot_dimension_numbers<[1], [0], [0], [1], [0, 0, 1, 1], [], []>} : vector<4x4xf32>, vector<4x256xf32>, vector<4x256xf32> -> vector<4x256xf32>
    %201 = arith.addf %195, %200 : vector<4x256xf32>
    %202 = arith.addf %152, %201 : vector<4x256xf32>
    %cst_96 = arith.constant dense<0.000000e+00> : vector<4xf32>
    %203 = vector.multi_reduction <add>, %202, %cst_96 [1] : vector<4x256xf32> to vector<4xf32>
    %204 = vector.shape_cast %203 : vector<4xf32> to vector<4x1xf32>
    %cst_97 = arith.constant 3.906250e-03 : f32
    %205 = vector.broadcast %cst_97 : f32 to vector<4x1xf32>
    %206 = arith.mulf %204, %205 : vector<4x1xf32>
    %207 = vector.broadcast %206 : vector<4x1xf32> to vector<4x256xf32>
    %208 = arith.subf %202, %207 : vector<4x256xf32>
    %209 = arith.mulf %208, %208 : vector<4x256xf32>
    %cst_98 = arith.constant dense<0.000000e+00> : vector<4xf32>
    %210 = vector.multi_reduction <add>, %209, %cst_98 [1] : vector<4x256xf32> to vector<4xf32>
    %211 = vector.shape_cast %210 : vector<4xf32> to vector<4x1xf32>
    %cst_99 = arith.constant 3.906250e-03 : f32
    %212 = vector.broadcast %cst_99 : f32 to vector<4x1xf32>
    %213 = arith.mulf %211, %212 : vector<4x1xf32>
    %cst_100 = arith.constant 9.99999974E-6 : f32
    %214 = vector.broadcast %cst_100 : f32 to vector<4x1xf32>
    %215 = arith.addf %213, %214 : vector<4x1xf32>
    %216 = math.rsqrt %215 : vector<4x1xf32>
    %217 = vector.broadcast %216 : vector<4x1xf32> to vector<4x256xf32>
    %218 = arith.mulf %208, %217 : vector<4x256xf32>
    %cst_101 = arith.constant 0.000000e+00 : f32
    %219 = vector.broadcast %cst_101 : f32 to vector<4x256xf32>
    %220 = arith.cmpf ogt, %218, %219 : vector<4x256xf32>
    %cst_102 = arith.constant 0.00999999977 : f32
    %221 = vector.broadcast %cst_102 : f32 to vector<4x256xf32>
    %222 = arith.mulf %221, %218 : vector<4x256xf32>
    %223 = arith.select %220, %218, %222 : vector<4x256xi1>, vector<4x256xf32>
    %cst_103 = arith.constant 0.000000e+00 : f32
    %224 = vector.broadcast %cst_103 : f32 to vector<4x17xf32>
    %225 = tpu.concatenate %224, %223, %224 in 1 : vector<4x17xf32>, vector<4x256xf32>, vector<4x17xf32> -> vector<4x290xf32>
    %226 = vector.extract_strided_slice %225 {offsets = [0, 0], sizes = [4, 256], strides = [1, 1]} : vector<4x290xf32> to vector<4x256xf32>
    %227 = vector.broadcast %99 : vector<1x256xf32> to vector<4x256xf32>
    %228 = arith.mulf %226, %227 : vector<4x256xf32>
    %c0_104 = arith.constant 0 : index
    %c0_105 = arith.constant 0 : index
    %229 = vector.load %arg6[%c0_104, %c0_105] : memref<4x36xf32, #tpu.memory_space<vmem>>, vector<4x4xf32>
    %cst_106 = arith.constant dense<0.000000e+00> : vector<4x256xf32>
    %230 = tpu.matmul %229, %228, %cst_106 {dimension_numbers = #tpu.dot_dimension_numbers<[1], [0], [0], [1], [0, 0, 1, 1], [], []>} : vector<4x4xf32>, vector<4x256xf32>, vector<4x256xf32> -> vector<4x256xf32>
    %231 = vector.extract_strided_slice %225 {offsets = [0, 1], sizes = [4, 256], strides = [1, 1]} : vector<4x290xf32> to vector<4x256xf32>
    %c0_107 = arith.constant 0 : index
    %c4_108 = arith.constant 4 : index
    %232 = vector.load %arg6[%c0_107, %c4_108] : memref<4x36xf32, #tpu.memory_space<vmem>>, vector<4x4xf32>
    %cst_109 = arith.constant dense<0.000000e+00> : vector<4x256xf32>
    %233 = tpu.matmul %232, %231, %cst_109 {dimension_numbers = #tpu.dot_dimension_numbers<[1], [0], [0], [1], [0, 0, 1, 1], [], []>} : vector<4x4xf32>, vector<4x256xf32>, vector<4x256xf32> -> vector<4x256xf32>
    %234 = arith.addf %230, %233 : vector<4x256xf32>
    %235 = vector.extract_strided_slice %225 {offsets = [0, 2], sizes = [4, 256], strides = [1, 1]} : vector<4x290xf32> to vector<4x256xf32>
    %236 = vector.broadcast %100 : vector<1x256xf32> to vector<4x256xf32>
    %237 = arith.mulf %235, %236 : vector<4x256xf32>
    %c0_110 = arith.constant 0 : index
    %c8_111 = arith.constant 8 : index
    %238 = vector.load %arg6[%c0_110, %c8_111] : memref<4x36xf32, #tpu.memory_space<vmem>>, vector<4x4xf32>
    %cst_112 = arith.constant dense<0.000000e+00> : vector<4x256xf32>
    %239 = tpu.matmul %238, %237, %cst_112 {dimension_numbers = #tpu.dot_dimension_numbers<[1], [0], [0], [1], [0, 0, 1, 1], [], []>} : vector<4x4xf32>, vector<4x256xf32>, vector<4x256xf32> -> vector<4x256xf32>
    %240 = arith.addf %234, %239 : vector<4x256xf32>
    %241 = vector.extract_strided_slice %225 {offsets = [0, 16], sizes = [4, 256], strides = [1, 1]} : vector<4x290xf32> to vector<4x256xf32>
    %242 = vector.broadcast %99 : vector<1x256xf32> to vector<4x256xf32>
    %243 = arith.mulf %241, %242 : vector<4x256xf32>
    %c0_113 = arith.constant 0 : index
    %c12_114 = arith.constant 12 : index
    %244 = vector.load %arg6[%c0_113, %c12_114] : memref<4x36xf32, #tpu.memory_space<vmem>>, vector<4x4xf32>
    %cst_115 = arith.constant dense<0.000000e+00> : vector<4x256xf32>
    %245 = tpu.matmul %244, %243, %cst_115 {dimension_numbers = #tpu.dot_dimension_numbers<[1], [0], [0], [1], [0, 0, 1, 1], [], []>} : vector<4x4xf32>, vector<4x256xf32>, vector<4x256xf32> -> vector<4x256xf32>
    %246 = arith.addf %240, %245 : vector<4x256xf32>
    %247 = vector.extract_strided_slice %225 {offsets = [0, 17], sizes = [4, 256], strides = [1, 1]} : vector<4x290xf32> to vector<4x256xf32>
    %c0_116 = arith.constant 0 : index
    %c16_117 = arith.constant 16 : index
    %248 = vector.load %arg6[%c0_116, %c16_117] : memref<4x36xf32, #tpu.memory_space<vmem>>, vector<4x4xf32>
    %cst_118 = arith.constant dense<0.000000e+00> : vector<4x256xf32>
    %249 = tpu.matmul %248, %247, %cst_118 {dimension_numbers = #tpu.dot_dimension_numbers<[1], [0], [0], [1], [0, 0, 1, 1], [], []>} : vector<4x4xf32>, vector<4x256xf32>, vector<4x256xf32> -> vector<4x256xf32>
    %250 = arith.addf %246, %249 : vector<4x256xf32>
    %251 = vector.extract_strided_slice %225 {offsets = [0, 18], sizes = [4, 256], strides = [1, 1]} : vector<4x290xf32> to vector<4x256xf32>
    %252 = vector.broadcast %100 : vector<1x256xf32> to vector<4x256xf32>
    %253 = arith.mulf %251, %252 : vector<4x256xf32>
    %c0_119 = arith.constant 0 : index
    %c20_120 = arith.constant 20 : index
    %254 = vector.load %arg6[%c0_119, %c20_120] : memref<4x36xf32, #tpu.memory_space<vmem>>, vector<4x4xf32>
    %cst_121 = arith.constant dense<0.000000e+00> : vector<4x256xf32>
    %255 = tpu.matmul %254, %253, %cst_121 {dimension_numbers = #tpu.dot_dimension_numbers<[1], [0], [0], [1], [0, 0, 1, 1], [], []>} : vector<4x4xf32>, vector<4x256xf32>, vector<4x256xf32> -> vector<4x256xf32>
    %256 = arith.addf %250, %255 : vector<4x256xf32>
    %257 = vector.extract_strided_slice %225 {offsets = [0, 32], sizes = [4, 256], strides = [1, 1]} : vector<4x290xf32> to vector<4x256xf32>
    %258 = vector.broadcast %99 : vector<1x256xf32> to vector<4x256xf32>
    %259 = arith.mulf %257, %258 : vector<4x256xf32>
    %c0_122 = arith.constant 0 : index
    %c24_123 = arith.constant 24 : index
    %260 = vector.load %arg6[%c0_122, %c24_123] : memref<4x36xf32, #tpu.memory_space<vmem>>, vector<4x4xf32>
    %cst_124 = arith.constant dense<0.000000e+00> : vector<4x256xf32>
    %261 = tpu.matmul %260, %259, %cst_124 {dimension_numbers = #tpu.dot_dimension_numbers<[1], [0], [0], [1], [0, 0, 1, 1], [], []>} : vector<4x4xf32>, vector<4x256xf32>, vector<4x256xf32> -> vector<4x256xf32>
    %262 = arith.addf %256, %261 : vector<4x256xf32>
    %263 = vector.extract_strided_slice %225 {offsets = [0, 33], sizes = [4, 256], strides = [1, 1]} : vector<4x290xf32> to vector<4x256xf32>
    %c0_125 = arith.constant 0 : index
    %c28_126 = arith.constant 28 : index
    %264 = vector.load %arg6[%c0_125, %c28_126] : memref<4x36xf32, #tpu.memory_space<vmem>>, vector<4x4xf32>
    %cst_127 = arith.constant dense<0.000000e+00> : vector<4x256xf32>
    %265 = tpu.matmul %264, %263, %cst_127 {dimension_numbers = #tpu.dot_dimension_numbers<[1], [0], [0], [1], [0, 0, 1, 1], [], []>} : vector<4x4xf32>, vector<4x256xf32>, vector<4x256xf32> -> vector<4x256xf32>
    %266 = arith.addf %262, %265 : vector<4x256xf32>
    %267 = vector.extract_strided_slice %225 {offsets = [0, 34], sizes = [4, 256], strides = [1, 1]} : vector<4x290xf32> to vector<4x256xf32>
    %268 = vector.broadcast %100 : vector<1x256xf32> to vector<4x256xf32>
    %269 = arith.mulf %267, %268 : vector<4x256xf32>
    %c0_128 = arith.constant 0 : index
    %c32_129 = arith.constant 32 : index
    %270 = vector.load %arg6[%c0_128, %c32_129] : memref<4x36xf32, #tpu.memory_space<vmem>>, vector<4x4xf32>
    %cst_130 = arith.constant dense<0.000000e+00> : vector<4x256xf32>
    %271 = tpu.matmul %270, %269, %cst_130 {dimension_numbers = #tpu.dot_dimension_numbers<[1], [0], [0], [1], [0, 0, 1, 1], [], []>} : vector<4x4xf32>, vector<4x256xf32>, vector<4x256xf32> -> vector<4x256xf32>
    %272 = arith.addf %266, %271 : vector<4x256xf32>
    %cst_131 = arith.constant dense<0.000000e+00> : vector<4xf32>
    %273 = vector.multi_reduction <add>, %272, %cst_131 [1] : vector<4x256xf32> to vector<4xf32>
    %274 = vector.shape_cast %273 : vector<4xf32> to vector<4x1xf32>
    %cst_132 = arith.constant 3.906250e-03 : f32
    %275 = vector.broadcast %cst_132 : f32 to vector<4x1xf32>
    %276 = arith.mulf %274, %275 : vector<4x1xf32>
    %277 = vector.broadcast %276 : vector<4x1xf32> to vector<4x256xf32>
    %278 = arith.subf %272, %277 : vector<4x256xf32>
    %279 = arith.mulf %278, %278 : vector<4x256xf32>
    %cst_133 = arith.constant dense<0.000000e+00> : vector<4xf32>
    %280 = vector.multi_reduction <add>, %279, %cst_133 [1] : vector<4x256xf32> to vector<4xf32>
    %281 = vector.shape_cast %280 : vector<4xf32> to vector<4x1xf32>
    %cst_134 = arith.constant 3.906250e-03 : f32
    %282 = vector.broadcast %cst_134 : f32 to vector<4x1xf32>
    %283 = arith.mulf %281, %282 : vector<4x1xf32>
    %cst_135 = arith.constant 9.99999974E-6 : f32
    %284 = vector.broadcast %cst_135 : f32 to vector<4x1xf32>
    %285 = arith.addf %283, %284 : vector<4x1xf32>
    %286 = math.rsqrt %285 : vector<4x1xf32>
    %287 = vector.broadcast %286 : vector<4x1xf32> to vector<4x256xf32>
    %288 = arith.mulf %278, %287 : vector<4x256xf32>
    %cst_136 = arith.constant 0.000000e+00 : f32
    %289 = vector.broadcast %cst_136 : f32 to vector<4x256xf32>
    %290 = arith.cmpf ogt, %288, %289 : vector<4x256xf32>
    %cst_137 = arith.constant 0.00999999977 : f32
    %291 = vector.broadcast %cst_137 : f32 to vector<4x256xf32>
    %292 = arith.mulf %291, %288 : vector<4x256xf32>
    %293 = arith.select %290, %288, %292 : vector<4x256xi1>, vector<4x256xf32>
    %c0_138 = arith.constant 0 : index
    %c0_139 = arith.constant 0 : index
    %c0_140 = arith.constant 0 : index
    %294 = vector.load %arg9[%c0_138, %c0_139, %c0_140] : memref<1x4x256xf32, #tpu.memory_space<vmem>>, vector<1x4x256xf32>
    %295 = vector.shape_cast %294 : vector<1x4x256xf32> to vector<4x256xf32>
    %296 = vector.shape_cast %293 : vector<4x256xf32> to vector<1x4x256xf32>
    tpu.vector_store %arg9[%c0_138, %c0_139, %c0_140], %296 {strides = array<i32>} : memref<1x4x256xf32, #tpu.memory_space<vmem>>, vector<1x4x256xf32>,
    return
  }
  func.func @transform_0(%arg0: i32) -> (i32, i32, i32) {
    %c0_i32 = arith.constant 0 : i32
    %c0_i32_0 = arith.constant 0 : i32
    %c0_i32_1 = arith.constant 0 : i32
    return %arg0, %c0_i32, %c0_i32_0 : i32, i32, i32
  }
  func.func @transform_1(%arg0: i32) -> (i32, i32, i32) {
    %c0_i32 = arith.constant 0 : i32
    %c0_i32_0 = arith.constant 0 : i32
    %c0_i32_1 = arith.constant 0 : i32
    return %arg0, %c0_i32, %c0_i32_0 : i32, i32, i32
  }
  func.func @transform_2(%arg0: i32) -> (i32, i32) {
    %c0_i32 = arith.constant 0 : i32
    %c0_i32_0 = arith.constant 0 : i32
    %c0_i32_1 = arith.constant 0 : i32
    return %c0_i32, %c0_i32_0 : i32, i32
  }
  func.func @transform_3(%arg0: i32) -> (i32, i32) {
    %c0_i32 = arith.constant 0 : i32
    %c0_i32_0 = arith.constant 0 : i32
    %c0_i32_1 = arith.constant 0 : i32
    return %c0_i32, %c0_i32_0 : i32, i32
  }
  func.func @transform_4(%arg0: i32) -> (i32, i32) {
    %c0_i32 = arith.constant 0 : i32
    %c0_i32_0 = arith.constant 0 : i32
    %c0_i32_1 = arith.constant 0 : i32
    return %c0_i32, %c0_i32_0 : i32, i32
  }
  func.func @transform_5(%arg0: i32) -> (i32, i32) {
    %c0_i32 = arith.constant 0 : i32
    %c0_i32_0 = arith.constant 0 : i32
    %c0_i32_1 = arith.constant 0 : i32
    return %c0_i32, %c0_i32_0 : i32, i32
  }
  func.func @transform_6(%arg0: i32) -> (i32, i32, i32) {
    %c0_i32 = arith.constant 0 : i32
    %c0_i32_0 = arith.constant 0 : i32
    %c0_i32_1 = arith.constant 0 : i32
    %c0_i32_2 = arith.constant 0 : i32
    return %c0_i32, %c0_i32_0, %c0_i32_1 : i32, i32, i32
  }
  func.func @transform_7(%arg0: i32) -> (i32, i32) {
    %c0_i32 = arith.constant 0 : i32
    %c0_i32_0 = arith.constant 0 : i32
    %c0_i32_1 = arith.constant 0 : i32
    return %c0_i32, %c0_i32_0 : i32, i32
  }
  func.func @transform_8(%arg0: i32) -> (i32, i32, i32) {
    %c0_i32 = arith.constant 0 : i32
    %c0_i32_0 = arith.constant 0 : i32
    %c0_i32_1 = arith.constant 0 : i32
    return %arg0, %c0_i32, %c0_i32_0 : i32, i32, i32
  }
}

</mosaic_0001>

<llo_original>
// kernel: upscale_forward.1
$region0: #{upscale_forward.1}
  #allocation0 [shape = 'u32[]', space=smem, size = 0x4, offset = 0x4, fixed_abs, tag = 'smem constant byte address 0x4 - core index']
  #allocation1 [shape = 'u32[144,128]{1,0:T(1,128)}', space=vmem, size = 0x12000, scoped, tag = 'internal scratch']
  #allocation2 [shape = 'f32[4,256]{1,0:T(4,128)}', space=vmem, size = 0x1000, scoped, tag = 'scratch operand']
  %s0 = inlined_call_operand.vmem [shape: f32[2,8,64], index: 0, kind: input, shape index: {}]
  %s1 = inlined_call_operand.vmem [shape: f32[2,4,256], index: 1, kind: input, shape index: {}]
  %s2 = inlined_call_operand.vmem [shape: f32[16,8], index: 2, kind: input, shape index: {}]
  %s3 = inlined_call_operand.vmem [shape: f32[16,1], index: 3, kind: input, shape index: {}]
  %s4 = inlined_call_operand.vmem [shape: f32[4,72], index: 4, kind: input, shape index: {}]
  %s5 = inlined_call_operand.vmem [shape: f32[4,36], index: 5, kind: input, shape index: {}]
  %s6 = inlined_call_operand.vmem [shape: f32[2,8,16], index: 6, kind: input, shape index: {}]
  %s7 = inlined_call_operand.vmem [shape: f32[2,256], index: 7, kind: input, shape index: {}]
  %s8 = inlined_call_operand.vmem [shape: f32[2,4,256], index: 8, kind: output, shape index: {}]
  %s9 = sld [smem:[#allocation0]]
  $region65: #{upscale_forward.1} parent=0
    _
  %s11 = ssub.s32 1, %s9
  %s12 = scalar_select 0, %s11, %s9
  loop: start=0, step=1, limit=4
  $region2: #{upscale_forward.1} parent=0 // loop_pre_header
    _
  $region3: #{upscale_forward.1} parent=0 // loop_header
    %s14 = sphi 0, %s18
    %p15 = scmp.ge.s32.totalorder %s14, 4
    %s24 = sphi 0, %s26
    %s27 = sphi 0, %s24
    %s28 = sphi 0, %s27
    %s44 = sphi 0, %s28
    %s50 = sphi 0, %s52
    %s53 = sphi 0, %s50
    %s54 = sphi 0, %s53
    %s70 = sphi 0, %s54
    %s74 = sphi 0, %s74
    %s76 = sphi 0, %s74
    %s77 = sphi 0, %s76
    %s91 = sphi 0, %s77
    %s95 = sphi 0, %s95
    %s97 = sphi 0, %s95
    %s98 = sphi 0, %s97
    %s112 = sphi 0, %s98
    %s116 = sphi 0, %s116
    %s118 = sphi 0, %s116
    %s119 = sphi 0, %s118
    %s133 = sphi 0, %s119
    %s137 = sphi 0, %s137
    %s139 = sphi 0, %s137
    %s140 = sphi 0, %s139
    %s154 = sphi 0, %s140
    %s158 = sphi 0, %s158
    %s160 = sphi 0, %s158
    %s161 = sphi 0, %s160
    %s175 = sphi 0, %s161
    %s179 = sphi 0, %s179
    %s181 = sphi 0, %s179
    %s182 = sphi 0, %s181
    %s196 = sphi 0, %s182
    %s202 = sphi 0, %s204
    %s205 = sphi 0, %s202
    %s206 = sphi 0, %s205
    %s222 = sphi 0, %s206
  $region4: #{upscale_forward.1} parent=0 // loop_header_branch
    %17 = sbr.rel (%p15) target = $region8
  $region5: #{upscale_forward.1} parent=0 // loop_body
    %s19 = ssub.s32 %s14, 1
    %s20 = ssub.s32 %s14, 2
    %s21 = sadd.s32 %s14, 1
    %s22 = ssub.s32 %s14, %s21
    %p23 = scmp.eq.s32.totalorder %s22, 0
    %s25 = sadd.s32 %s24, 1
    %s26 = scalar_select %p23, %s24, %s25
    %p29 = pneg %p23
    %p30 = scmp.eq.s32.totalorder %s14, 1
    %p31 = por %p29, %p30
    %p32 = scmp.ne.s32.totalorder %s24, %s27
    %p33 = scmp.eq.s32.totalorder %s14, 0
    %p34 = por %p32, %p33
    %p35 = scmp.ne.s32.totalorder %s24, %s27
    %p36 = scmp.eq.s32.totalorder %s19, 1
    %p37 = por %p35, %p36
    %p38 = scmp.ne.s32.totalorder %s27, %s28
    %p39 = scmp.eq.s32.totalorder %s19, 0
    %p40 = por %p38, %p39
    %p41 = scmp.ne.s32.totalorder %s27, %s28
    %p42 = scmp.eq.s32.totalorder %s20, 1
    %p43 = por %p41, %p42
    %p45 = scmp.ne.s32.totalorder %s28, %s44
    %p46 = scmp.eq.s32.totalorder %s20, 0
    %p47 = por %p45, %p46
    %s48 = ssub.s32 %s14, %s21
    %p49 = scmp.eq.s32.totalorder %s48, 0
    %s51 = sadd.s32 %s50, 1
    %s52 = scalar_select %p49, %s50, %s51
    %p55 = pneg %p49
    %p56 = scmp.eq.s32.totalorder %s14, 1
    %p57 = por %p55, %p56
    %p58 = scmp.ne.s32.totalorder %s50, %s53
    %p59 = scmp.eq.s32.totalorder %s14, 0
    %p60 = por %p58, %p59
    %p61 = scmp.ne.s32.totalorder %s50, %s53
    %p62 = scmp.eq.s32.totalorder %s19, 1
    %p63 = por %p61, %p62
    %p64 = scmp.ne.s32.totalorder %s53, %s54
    %p65 = scmp.eq.s32.totalorder %s19, 0
    %p66 = por %p64, %p65
    %p67 = scmp.ne.s32.totalorder %s53, %s54
    %p68 = scmp.eq.s32.totalorder %s20, 1
    %p69 = por %p67, %p68
    %p71 = scmp.ne.s32.totalorder %s54, %s70
    %p72 = scmp.eq.s32.totalorder %s20, 0
    %p73 = por %p71, %p72
    %s75 = sadd.s32 %s74, 1
    %p78 = scmp.eq.s32.totalorder %s14, 1
    %p79 = scmp.ne.s32.totalorder %s74, %s76
    %p80 = scmp.eq.s32.totalorder %s14, 0
    %p81 = por %p79, %p80
    %p82 = scmp.ne.s32.totalorder %s74, %s76
    %p83 = scmp.eq.s32.totalorder %s19, 1
    %p84 = por %p82, %p83
    %p85 = scmp.ne.s32.totalorder %s76, %s77
    %p86 = scmp.eq.s32.totalorder %s19, 0
    %p87 = por %p85, %p86
    %p88 = scmp.ne.s32.totalorder %s76, %s77
    %p89 = scmp.eq.s32.totalorder %s20, 1
    %p90 = por %p88, %p89
    %p92 = scmp.ne.s32.totalorder %s77, %s91
    %p93 = scmp.eq.s32.totalorder %s20, 0
    %p94 = por %p92, %p93
    %s96 = sadd.s32 %s95, 1
    %p99 = scmp.eq.s32.totalorder %s14, 1
    %p100 = scmp.ne.s32.totalorder %s95, %s97
    %p101 = scmp.eq.s32.totalorder %s14, 0
    %p102 = por %p100, %p101
    %p103 = scmp.ne.s32.totalorder %s95, %s97
    %p104 = scmp.eq.s32.totalorder %s19, 1
    %p105 = por %p103, %p104
    %p106 = scmp.ne.s32.totalorder %s97, %s98
    %p107 = scmp.eq.s32.totalorder %s19, 0
    %p108 = por %p106, %p107
    %p109 = scmp.ne.s32.totalorder %s97, %s98
    %p110 = scmp.eq.s32.totalorder %s20, 1
    %p111 = por %p109, %p110
    %p113 = scmp.ne.s32.totalorder %s98, %s112
    %p114 = scmp.eq.s32.totalorder %s20, 0
    %p115 = por %p113, %p114
    %s117 = sadd.s32 %s116, 1
    %p120 = scmp.eq.s32.totalorder %s14, 1
    %p121 = scmp.ne.s32.totalorder %s116, %s118
    %p122 = scmp.eq.s32.totalorder %s14, 0
    %p123 = por %p121, %p122
    %p124 = scmp.ne.s32.totalorder %s116, %s118
    %p125 = scmp.eq.s32.totalorder %s19, 1
    %p126 = por %p124, %p125
    %p127 = scmp.ne.s32.totalorder %s118, %s119
    %p128 = scmp.eq.s32.totalorder %s19, 0
    %p129 = por %p127, %p128
    %p130 = scmp.ne.s32.totalorder %s118, %s119
    %p131 = scmp.eq.s32.totalorder %s20, 1
    %p132 = por %p130, %p131
    %p134 = scmp.ne.s32.totalorder %s119, %s133
    %p135 = scmp.eq.s32.totalorder %s20, 0
    %p136 = por %p134, %p135
    %s138 = sadd.s32 %s137, 1
    %p141 = scmp.eq.s32.totalorder %s14, 1
    %p142 = scmp.ne.s32.totalorder %s137, %s139
    %p143 = scmp.eq.s32.totalorder %s14, 0
    %p144 = por %p142, %p143
    %p145 = scmp.ne.s32.totalorder %s137, %s139
    %p146 = scmp.eq.s32.totalorder %s19, 1
    %p147 = por %p145, %p146
    %p148 = scmp.ne.s32.totalorder %s139, %s140
    %p149 = scmp.eq.s32.totalorder %s19, 0
    %p150 = por %p148, %p149
    %p151 = scmp.ne.s32.totalorder %s139, %s140
    %p152 = scmp.eq.s32.totalorder %s20, 1
    %p153 = por %p151, %p152
    %p155 = scmp.ne.s32.totalorder %s140, %s154
    %p156 = scmp.eq.s32.totalorder %s20, 0
    %p157 = por %p155, %p156
    %s159 = sadd.s32 %s158, 1
    %p162 = scmp.eq.s32.totalorder %s14, 1
    %p163 = scmp.ne.s32.totalorder %s158, %s160
    %p164 = scmp.eq.s32.totalorder %s14, 0
    %p165 = por %p163, %p164
    %p166 = scmp.ne.s32.totalorder %s158, %s160
    %p167 = scmp.eq.s32.totalorder %s19, 1
    %p168 = por %p166, %p167
    %p169 = scmp.ne.s32.totalorder %s160, %s161
    %p170 = scmp.eq.s32.totalorder %s19, 0
    %p171 = por %p169, %p170
    %p172 = scmp.ne.s32.totalorder %s160, %s161
    %p173 = scmp.eq.s32.totalorder %s20, 1
    %p174 = por %p172, %p173
    %p176 = scmp.ne.s32.totalorder %s161, %s175
    %p177 = scmp.eq.s32.totalorder %s20, 0
    %p178 = por %p176, %p177
    %s180 = sadd.s32 %s179, 1
    %p183 = scmp.eq.s32.totalorder %s14, 1
    %p184 = scmp.ne.s32.totalorder %s179, %s181
    %p185 = scmp.eq.s32.totalorder %s14, 0
    %p186 = por %p184, %p185
    %p187 = scmp.ne.s32.totalorder %s179, %s181
    %p188 = scmp.eq.s32.totalorder %s19, 1
    %p189 = por %p187, %p188
    %p190 = scmp.ne.s32.totalorder %s181, %s182
    %p191 = scmp.eq.s32.totalorder %s19, 0
    %p192 = por %p190, %p191
    %p193 = scmp.ne.s32.totalorder %s181, %s182
    %p194 = scmp.eq.s32.totalorder %s20, 1
    %p195 = por %p193, %p194
    %p197 = scmp.ne.s32.totalorder %s182, %s196
    %p198 = scmp.eq.s32.totalorder %s20, 0
    %p199 = por %p197, %p198
    %s200 = ssub.s32 %s14, %s21
    %p201 = scmp.eq.s32.totalorder %s200, 0
    %s203 = sadd.s32 %s202, 1
    %s204 = scalar_select %p201, %s202, %s203
    %p207 = pneg %p201
    %p208 = scmp.eq.s32.totalorder %s14, 1
    %p209 = por %p207, %p208
    %p210 = scmp.ne.s32.totalorder %s202, %s205
    %p211 = scmp.eq.s32.totalorder %s14, 0
    %p212 = por %p210, %p211
    %p213 = scmp.ne.s32.totalorder %s202, %s205
    %p214 = scmp.eq.s32.totalorder %s19, 1
    %p215 = por %p213, %p214
    %p216 = scmp.ne.s32.totalorder %s205, %s206
    %p217 = scmp.eq.s32.totalorder %s19, 0
    %p218 = por %p216, %p217
    %p219 = scmp.ne.s32.totalorder %s205, %s206
    %p220 = scmp.eq.s32.totalorder %s20, 1
    %p221 = por %p219, %p220
    %p223 = scmp.ne.s32.totalorder %s206, %s222
    %p224 = scmp.eq.s32.totalorder %s20, 0
    %p225 = por %p223, %p224
    %p226 = scmp.le.s32.totalorder 1, %s14
    %p227 = scmp.lt.s32.totalorder %s14, 3
    %p228 = pnand %p226, %p227
    %p229 = pneg %p228
    // Predicated region
    $region9: #{upscale_forward.1} parent=5 // pred_check
      _
    $region10: #{upscale_forward.1} parent=5 // pred_check_branch
      %231 = sbr.rel (%p228) target = $region12
    $region11: #{upscale_forward.1} parent=5 // pred_region
      %s232 = ssub.s32 %s14, 1
      // Predicated region
      $region13: #{upscale_forward.1} parent=11 // pred_check
        %p233 = pneg %p87
      $region14: #{upscale_forward.1} parent=11 // pred_check_branch
        %235 = sbr.rel (%p233) target = $region16
      $region15: #{upscale_forward.1} parent=11 // pred_region
        _
      $region16: #{upscale_forward.1} parent=11 // pred_fallthru
        _
      // Predicated region
      $region17: #{upscale_forward.1} parent=11 // pred_check
        %p236 = pneg %p108
      $region18: #{upscale_forward.1} parent=11 // pred_check_branch
        %238 = sbr.rel (%p236) target = $region20
      $region19: #{upscale_forward.1} parent=11 // pred_region
        _
      $region20: #{upscale_forward.1} parent=11 // pred_fallthru
        _
      // Predicated region
      $region21: #{upscale_forward.1} parent=11 // pred_check
        %p239 = pneg %p129
      $region22: #{upscale_forward.1} parent=11 // pred_check_branch
        %241 = sbr.rel (%p239) target = $region24
      $region23: #{upscale_forward.1} parent=11 // pred_region
        _
      $region24: #{upscale_forward.1} parent=11 // pred_fallthru
        _
      // Predicated region
      $region25: #{upscale_forward.1} parent=11 // pred_check
        %p242 = pneg %p150
      $region26: #{upscale_forward.1} parent=11 // pred_check_branch
        %244 = sbr.rel (%p242) target = $region28
      $region27: #{upscale_forward.1} parent=11 // pred_region
        _
      $region28: #{upscale_forward.1} parent=11 // pred_fallthru
        _
      // Predicated region
      $region29: #{upscale_forward.1} parent=11 // pred_check
        %p245 = pneg %p171
      $region30: #{upscale_forward.1} parent=11 // pred_check_branch
        %247 = sbr.rel (%p245) target = $region32
      $region31: #{upscale_forward.1} parent=11 // pred_region
        _
      $region32: #{upscale_forward.1} parent=11 // pred_fallthru
        _
      // Predicated region
      $region33: #{upscale_forward.1} parent=11 // pred_check
        %p248 = pneg %p192
      $region34: #{upscale_forward.1} parent=11 // pred_check_branch
        %250 = sbr.rel (%p248) target = $region36
      $region35: #{upscale_forward.1} parent=11 // pred_region
        _
      $region36: #{upscale_forward.1} parent=11 // pred_fallthru
        _
    $region12: #{upscale_forward.1} parent=5 // pred_fallthru
      _
    %p251 = scmp.lt.s32.totalorder %s14, 2
    // Predicated region
    $region37: #{upscale_forward.1} parent=5 // pred_check
      %p252 = pneg %p251
    $region38: #{upscale_forward.1} parent=5 // pred_check_branch
      %254 = sbr.rel (%p252) target = $region40
    $region39: #{upscale_forward.1} parent=5 // pred_region
      // Predicated region
      $region41: #{upscale_forward.1} parent=39 // pred_check
        %p255 = pneg %p34
      $region42: #{upscale_forward.1} parent=39 // pred_check_branch
        %257 = sbr.rel (%p255) target = $region44
      $region43: #{upscale_forward.1} parent=39 // pred_region
        %p258 = scmp.lt.s32.totalorder %s14, 1
        %s259 = scalar_select %p258, %s14, 1
        %s260 = smul.addr %s259, 8
        %s261 = scalar_lea.vmem %s0, %s260
      $region44: #{upscale_forward.1} parent=39 // pred_fallthru
        _
      // Predicated region
      $region45: #{upscale_forward.1} parent=39 // pred_check
        %p262 = pneg %p60
      $region46: #{upscale_forward.1} parent=39 // pred_check_branch
        %264 = sbr.rel (%p262) target = $region48
      $region47: #{upscale_forward.1} parent=39 // pred_region
        %p265 = scmp.lt.s32.totalorder %s14, 1
        %s266 = scalar_select %p265, %s14, 1
        %s267 = smul.addr %s266, 2
        %s268 = smul.addr %s267, 4
        %s269 = scalar_lea.vmem %s1, %s268
      $region48: #{upscale_forward.1} parent=39 // pred_fallthru
        _
    $region40: #{upscale_forward.1} parent=5 // pred_fallthru
      _
    %p270 = scmp.le.s32.totalorder 1, %s14
    %p271 = scmp.lt.s32.totalorder %s14, 3
    %p272 = pnand %p270, %p271
    %p273 = pneg %p272
    // Predicated region
    $region49: #{upscale_forward.1} parent=5 // pred_check
      _
    $region50: #{upscale_forward.1} parent=5 // pred_check_branch
      %275 = sbr.rel (%p272) target = $region52
    $region51: #{upscale_forward.1} parent=5 // pred_region
      %s276 = ssub.s32 %s14, 1
      %p277 = scmp.lt.s32.totalorder %s19, 1
      %s278 = scalar_select %p277, %s19, 1
      %s279 = smul.addr %s278, 8
      %s280 = scalar_lea.vmem %s0, %s279
      %p281 = pneg %p40
      %p282 = pneg %p37
      %p283 = scmp.lt.s32.totalorder %s19, 1
      %s284 = scalar_select %p283, %s19, 1
      %s285 = smul.addr %s284, 2
      %s286 = smul.addr %s285, 4
      %s287 = scalar_lea.vmem %s1, %s286
      %p288 = pneg %p66
      %p289 = pneg %p63
      %p290 = pneg %p87
      %p291 = pneg %p84
      %p292 = pneg %p108
      %p293 = pneg %p105
      %p294 = pneg %p129
      %p295 = pneg %p126
      %p296 = pneg %p150
      %p297 = pneg %p147
      %p298 = pneg %p171
      %p299 = pneg %p168
      %p300 = pneg %p192
      %p301 = pneg %p189
      %p302 = pneg %p218
      %p303 = pneg %p215
      %p304 = scmp.lt.s32.totalorder %s19, 1
      %s305 = scalar_select %p304, %s19, 1
      %s306 = smul.addr %s305, 2
      %s307 = smul.addr %s306, 4
      %s308 = scalar_lea.vmem %s8, %s307
      %p309 = scmp.lt.s32.totalorder %s19, 1
      %s310 = scalar_select %p309, %s19, 1
      %s311 = smul.addr %s310, 8
      %s312 = scalar_lea.vmem %s0, %s311
      %p313 = scmp.lt.s32.totalorder %s19, 1
      %s314 = scalar_select %p313, %s19, 1
      %s315 = smul.addr %s314, 2
      %s316 = smul.addr %s315, 4
      %s317 = scalar_lea.vmem %s1, %s316
      %p318 = scmp.lt.s32.totalorder %s19, 1
      %s319 = scalar_select %p318, %s19, 1
      %s320 = smul.addr %s319, 2
      %s321 = smul.addr %s320, 4
      %s322 = scalar_lea.vmem %s8, %s321
      %v323 = vld [vmem:[%s2] sm:$0xff]
      %v324 = vld [vmem:[%s2 + $0x8] sm:$0xff]
      %v325 = vld [vmem:[%s312] sm:$0xff]
      %v326 = vld [vmem:[%s3] sm:$0xff]
      %v327 = vld [vmem:[%s3 + $0x8] sm:$0xff]
      %329 = vset.pattern.permute.xlu0 0
      %330 = vperm.xlu0 %329, %v326
      %v331 = vpop.permute.xlu0 %330
      %334 = vset.pattern.permute.xlu0 0
      %335 = vperm.xlu0 %334, %v327
      %v336 = vpop.permute.xlu0 %335
      %vm338 = vcmask 64512
      %v340 = vsel %vm338, %v323, 0
      %v343 = vsel %vm338, %v324, 0
      %345 = vmatprep.subr.mxu0 0.0
      %346 = vmatpush1.msra.mxu0 0.0
      %347 = vmatprep.subr.mxu0 0.0
      %348 = vmatpush1.msra.mxu0 0.0
      %349 = vmatprep.subr.mxu0 0.0
      %350 = vmatpush1.msra.mxu0 0.0
      %351 = vmatprep.subr.mxu0 0.0
      %352 = vmatpush1.msra.mxu0 0.0
      %353 = vmatprep.subr.mxu0 0.0
      %354 = vmatpush1.msra.mxu0 0.0
      %355 = vmatprep.subr.mxu0 0.0
      %356 = vmatpush1.msra.mxu0 0.0
      %357 = vmatprep.subr.mxu0 0.0
      %358 = vmatpush1.msra.mxu0 0.0
      %359 = vmatprep.subr.mxu0 0.0
      %360 = vmatpush1.msra.mxu0 0.0
      %361 = vmatprep.subr.mxu0 0.0
      %362 = vmatpush1.msra.mxu0 0.0
      %363 = vmatprep.subr.mxu0 0.0
      %364 = vmatpush1.msra.mxu0 0.0
      %365 = vmatprep.subr.mxu0 0.0
      %366 = vmatpush1.msra.mxu0 0.0
      %367 = vmatprep.subr.mxu0 0.0
      %368 = vmatpush1.msra.mxu0 0.0
      %369 = vmatprep.subr.mxu0 0.0
      %370 = vmatpush1.msra.mxu0 0.0
      %371 = vmatprep.subr.mxu0 0.0
      %372 = vmatpush1.msra.mxu0 0.0
      %373 = vmatprep.subr.mxu0 0.0
      %374 = vmatpush1.msra.mxu0 0.0
      %375 = vmatprep.subr.mxu0 0.0
      %376 = vmatpush1.msra.mxu0 %v325
      %377 = vmatprep.subr.mxu0 0.0
      %378 = vmatpush2.msra.mxu0 0.0
      %379 = vmatprep.subr.mxu0 0.0
      %380 = vmatpush2.msra.mxu0 0.0
      %381 = vmatprep.subr.mxu0 0.0
      %382 = vmatpush2.msra.mxu0 0.0
      %383 = vmatprep.subr.mxu0 0.0
      %384 = vmatpush2.msra.mxu0 0.0
      %385 = vmatprep.subr.mxu0 0.0
      %386 = vmatpush2.msra.mxu0 0.0
      %387 = vmatprep.subr.mxu0 0.0
      %388 = vmatpush2.msra.mxu0 0.0
      %389 = vmatprep.subr.mxu0 0.0
      %390 = vmatpush2.msra.mxu0 0.0
      %391 = vmatprep.subr.mxu0 0.0
      %392 = vmatpush2.msra.mxu0 0.0
      %393 = vmatprep.subr.mxu0 0.0
      %394 = vmatpush2.msra.mxu0 0.0
      %395 = vmatprep.subr.mxu0 0.0
      %396 = vmatpush2.msra.mxu0 0.0
      %397 = vmatprep.subr.mxu0 0.0
      %398 = vmatpush2.msra.mxu0 0.0
      %399 = vmatprep.subr.mxu0 0.0
      %400 = vmatpush2.msra.mxu0 0.0
      %401 = vmatprep.subr.mxu0 0.0
      %402 = vmatpush2.msra.mxu0 0.0
      %403 = vmatprep.subr.mxu0 0.0
      %404 = vmatpush2.msra.mxu0 0.0
      %405 = vmatprep.subr.mxu0 0.0
      %406 = vmatpush2.msra.mxu0 0.0
      %407 = vmatprep.subr.mxu0 0.0
      %408 = vmatpush2.msra.mxu0 0.0
      %409 = vmatprep.mubr.f32.mxu0 0.0
      %410 = vmatmul.mubr.f32.gmra.mxu0 %v340
      %v411 = vpop.f32.mrf.mxu0
      %v412 = vadd.f32 %v331, %v411
      %v413 = vpop.f32.mrf.mxu0
      %414 = vmatprep.mubr.f32.mxu0 0.0
      %415 = vmatmul.mubr.f32.gmra.mxu0 %v343
      %v416 = vpop.f32.mrf.mxu0
      %v417 = vadd.f32 %v336, %v416
      %v418 = vpop.f32.mrf.mxu0
      %419 = vdwg.mxu0
      %v420 = vld [vmem:[%s6] sm:$0xff]
      %s421 = scalar_lea.vmem %s6, 8
      %v422 = vld [vmem:[%s421] sm:$0xff]
      %v424 = vsel %vm338, %v412, 0
      %v427 = vsel %vm338, %v417, 0
      %429 = vmatprep.subr.mxu0 0.0
      %430 = vmatpush1.msra.mxu0 0.0
      %431 = vmatprep.subr.mxu0 0.0
      %432 = vmatpush1.msra.mxu0 0.0
      %433 = vmatprep.subr.mxu0 0.0
      %434 = vmatpush1.msra.mxu0 0.0
      %435 = vmatprep.subr.mxu0 0.0
      %436 = vmatpush1.msra.mxu0 0.0
      %437 = vmatprep.subr.mxu0 0.0
      %438 = vmatpush1.msra.mxu0 0.0
      %439 = vmatprep.subr.mxu0 0.0
      %440 = vmatpush1.msra.mxu0 0.0
      %441 = vmatprep.subr.mxu0 0.0
      %442 = vmatpush1.msra.mxu0 0.0
      %443 = vmatprep.subr.mxu0 0.0
      %444 = vmatpush1.msra.mxu0 0.0
      %445 = vmatprep.subr.mxu0 0.0
      %446 = vmatpush1.msra.mxu0 0.0
      %447 = vmatprep.subr.mxu0 0.0
      %448 = vmatpush1.msra.mxu0 0.0
      %449 = vmatprep.subr.mxu0 0.0
      %450 = vmatpush1.msra.mxu0 0.0
      %451 = vmatprep.subr.mxu0 0.0
      %452 = vmatpush1.msra.mxu0 0.0
      %453 = vmatprep.subr.mxu0 0.0
      %454 = vmatpush1.msra.mxu0 0.0
      %455 = vmatprep.subr.mxu0 0.0
      %456 = vmatpush1.msra.mxu0 0.0
      %457 = vmatprep.subr.mxu0 0.0
      %458 = vmatpush1.msra.mxu0 0.0
      %459 = vmatprep.subr.mxu0 0.0
      %460 = vmatpush1.msra.mxu0 %v420
      %461 = vmatprep.subr.mxu0 0.0
      %462 = vmatpush2.msra.mxu0 0.0
      %463 = vmatprep.subr.mxu0 0.0
      %464 = vmatpush2.msra.mxu0 0.0
      %465 = vmatprep.subr.mxu0 0.0
      %466 = vmatpush2.msra.mxu0 0.0
      %467 = vmatprep.subr.mxu0 0.0
      %468 = vmatpush2.msra.mxu0 0.0
      %469 = vmatprep.subr.mxu0 0.0
      %470 = vmatpush2.msra.mxu0 0.0
      %471 = vmatprep.subr.mxu0 0.0
      %472 = vmatpush2.msra.mxu0 0.0
      %473 = vmatprep.subr.mxu0 0.0
      %474 = vmatpush2.msra.mxu0 0.0
      %475 = vmatprep.subr.mxu0 0.0
      %476 = vmatpush2.msra.mxu0 0.0
      %477 = vmatprep.subr.mxu0 0.0
      %478 = vmatpush2.msra.mxu0 0.0
      %479 = vmatprep.subr.mxu0 0.0
      %480 = vmatpush2.msra.mxu0 0.0
      %481 = vmatprep.subr.mxu0 0.0
      %482 = vmatpush2.msra.mxu0 0.0
      %483 = vmatprep.subr.mxu0 0.0
      %484 = vmatpush2.msra.mxu0 0.0
      %485 = vmatprep.subr.mxu0 0.0
      %486 = vmatpush2.msra.mxu0 0.0
      %487 = vmatprep.subr.mxu0 0.0
      %488 = vmatpush2.msra.mxu0 0.0
      %489 = vmatprep.subr.mxu0 0.0
      %490 = vmatpush2.msra.mxu0 0.0
      %491 = vmatprep.subr.mxu0 0.0
      %492 = vmatpush2.msra.mxu0 0.0
      %493 = vmatprep.mubr.f32.mxu0 0.0
      %494 = vmatmul.mubr.f32.gmra.mxu0 %v424
      %v495 = vpop.f32.mrf.mxu0
      %v496 = vadd.f32 0.0, %v495
      %v497 = vpop.f32.mrf.mxu0
      %498 = vmatprep.mubr.f32.mxu0 0.0
      %499 = vmatmul.mubr.f32.gmra.mxu0 %v427
      %v500 = vpop.f32.mrf.mxu0
      %v501 = vadd.f32 0.0, %v500
      %v502 = vpop.f32.mrf.mxu0
      %503 = vdwg.mxu0
      %504 = vmatprep.subr.mxu0 0.0
      %505 = vmatpush1.msra.mxu0 0.0
      %506 = vmatprep.subr.mxu0 0.0
      %507 = vmatpush1.msra.mxu0 0.0
      %508 = vmatprep.subr.mxu0 0.0
      %509 = vmatpush1.msra.mxu0 0.0
      %510 = vmatprep.subr.mxu0 0.0
      %511 = vmatpush1.msra.mxu0 0.0
      %512 = vmatprep.subr.mxu0 0.0
      %513 = vmatpush1.msra.mxu0 0.0
      %514 = vmatprep.subr.mxu0 0.0
      %515 = vmatpush1.msra.mxu0 0.0
      %516 = vmatprep.subr.mxu0 0.0
      %517 = vmatpush1.msra.mxu0 0.0
      %518 = vmatprep.subr.mxu0 0.0
      %519 = vmatpush1.msra.mxu0 0.0
      %520 = vmatprep.subr.mxu0 0.0
      %521 = vmatpush1.msra.mxu0 0.0
      %522 = vmatprep.subr.mxu0 0.0
      %523 = vmatpush1.msra.mxu0 0.0
      %524 = vmatprep.subr.mxu0 0.0
      %525 = vmatpush1.msra.mxu0 0.0
      %526 = vmatprep.subr.mxu0 0.0
      %527 = vmatpush1.msra.mxu0 0.0
      %528 = vmatprep.subr.mxu0 0.0
      %529 = vmatpush1.msra.mxu0 0.0
      %530 = vmatprep.subr.mxu0 0.0
      %531 = vmatpush1.msra.mxu0 0.0
      %532 = vmatprep.subr.mxu0 0.0
      %533 = vmatpush1.msra.mxu0 0.0
      %534 = vmatprep.subr.mxu0 0.0
      %535 = vmatpush1.msra.mxu0 %v422
      %536 = vmatprep.subr.mxu0 0.0
      %537 = vmatpush2.msra.mxu0 0.0
      %538 = vmatprep.subr.mxu0 0.0
      %539 = vmatpush2.msra.mxu0 0.0
      %540 = vmatprep.subr.mxu0 0.0
      %541 = vmatpush2.msra.mxu0 0.0
      %542 = vmatprep.subr.mxu0 0.0
      %543 = vmatpush2.msra.mxu0 0.0
      %544 = vmatprep.subr.mxu0 0.0
      %545 = vmatpush2.msra.mxu0 0.0
      %546 = vmatprep.subr.mxu0 0.0
      %547 = vmatpush2.msra.mxu0 0.0
      %548 = vmatprep.subr.mxu0 0.0
      %549 = vmatpush2.msra.mxu0 0.0
      %550 = vmatprep.subr.mxu0 0.0
      %551 = vmatpush2.msra.mxu0 0.0
      %552 = vmatprep.subr.mxu0 0.0
      %553 = vmatpush2.msra.mxu0 0.0
      %554 = vmatprep.subr.mxu0 0.0
      %555 = vmatpush2.msra.mxu0 0.0
      %556 = vmatprep.subr.mxu0 0.0
      %557 = vmatpush2.msra.mxu0 0.0
      %558 = vmatprep.subr.mxu0 0.0
      %559 = vmatpush2.msra.mxu0 0.0
      %560 = vmatprep.subr.mxu0 0.0
      %561 = vmatpush2.msra.mxu0 0.0
      %562 = vmatprep.subr.mxu0 0.0
      %563 = vmatpush2.msra.mxu0 0.0
      %564 = vmatprep.subr.mxu0 0.0
      %565 = vmatpush2.msra.mxu0 0.0
      %566 = vmatprep.subr.mxu0 0.0
      %567 = vmatpush2.msra.mxu0 0.0
      %568 = vmatprep.mubr.f32.mxu0 0.0
      %569 = vmatmul.mubr.f32.gmra.mxu0 %v424
      %v570 = vpop.f32.mrf.mxu0
      %v571 = vadd.f32 0.0, %v570
      %v572 = vpop.f32.mrf.mxu0
      %573 = vmatprep.mubr.f32.mxu0 0.0
      %574 = vmatmul.mubr.f32.gmra.mxu0 %v427
      %v575 = vpop.f32.mrf.mxu0
      %v576 = vadd.f32 0.0, %v575
      %v577 = vpop.f32.mrf.mxu0
      %578 = vdwg.mxu0
      %v580 = vrot.slane %v571, 4
      %v582 = vadd.f32 %v496, %v580
      %vm583 = vcmask 125952
      %584 = vst.msk [vmem:[#allocation2] sm:$0xf] %vm583, %v582
      %v586 = vrot.slane %v576, 4
      %v588 = vadd.f32 %v501, %v586
      %590 = vrot.lane.b32.xlu0 %v588, 16
      %v591 = vpop.permute.xlu0 %590
      %vm593 = vcmask 257152
      %594 = vst.msk [vmem:[#allocation2] sm:$0xf] %vm593, %v591
      %595 = vrot.lane.b32.xlu0 %v412, 120
      %v596 = vpop.permute.xlu0 %595
      %597 = vrot.lane.b32.xlu0 %v417, 120
      %v598 = vpop.permute.xlu0 %597
      %v599 = vsel %vm338, %v596, 0
      %v601 = vsel %vm338, %v598, 0
      %603 = vmatprep.subr.mxu0 0.0
      %604 = vmatpush1.msra.mxu0 0.0
      %605 = vmatprep.subr.mxu0 0.0
      %606 = vmatpush1.msra.mxu0 0.0
      %607 = vmatprep.subr.mxu0 0.0
      %608 = vmatpush1.msra.mxu0 0.0
      %609 = vmatprep.subr.mxu0 0.0
      %610 = vmatpush1.msra.mxu0 0.0
      %611 = vmatprep.subr.mxu0 0.0
      %612 = vmatpush1.msra.mxu0 0.0
      %613 = vmatprep.subr.mxu0 0.0
      %614 = vmatpush1.msra.mxu0 0.0
      %615 = vmatprep.subr.mxu0 0.0
      %616 = vmatpush1.msra.mxu0 0.0
      %617 = vmatprep.subr.mxu0 0.0
      %618 = vmatpush1.msra.mxu0 0.0
      %619 = vmatprep.subr.mxu0 0.0
      %620 = vmatpush1.msra.mxu0 0.0
      %621 = vmatprep.subr.mxu0 0.0
      %622 = vmatpush1.msra.mxu0 0.0
      %623 = vmatprep.subr.mxu0 0.0
      %624 = vmatpush1.msra.mxu0 0.0
      %625 = vmatprep.subr.mxu0 0.0
      %626 = vmatpush1.msra.mxu0 0.0
      %627 = vmatprep.subr.mxu0 0.0
      %628 = vmatpush1.msra.mxu0 0.0
      %629 = vmatprep.subr.mxu0 0.0
      %630 = vmatpush1.msra.mxu0 0.0
      %631 = vmatprep.subr.mxu0 0.0
      %632 = vmatpush1.msra.mxu0 0.0
      %633 = vmatprep.subr.mxu0 0.0
      %634 = vmatpush1.msra.mxu0 %v420
      %635 = vmatprep.subr.mxu0 0.0
      %636 = vmatpush2.msra.mxu0 0.0
      %637 = vmatprep.subr.mxu0 0.0
      %638 = vmatpush2.msra.mxu0 0.0
      %639 = vmatprep.subr.mxu0 0.0
      %640 = vmatpush2.msra.mxu0 0.0
      %641 = vmatprep.subr.mxu0 0.0
      %642 = vmatpush2.msra.mxu0 0.0
      %643 = vmatprep.subr.mxu0 0.0
      %644 = vmatpush2.msra.mxu0 0.0
      %645 = vmatprep.subr.mxu0 0.0
      %646 = vmatpush2.msra.mxu0 0.0
      %647 = vmatprep.subr.mxu0 0.0
      %648 = vmatpush2.msra.mxu0 0.0
      %649 = vmatprep.subr.mxu0 0.0
      %650 = vmatpush2.msra.mxu0 0.0
      %651 = vmatprep.subr.mxu0 0.0
      %652 = vmatpush2.msra.mxu0 0.0
      %653 = vmatprep.subr.mxu0 0.0
      %654 = vmatpush2.msra.mxu0 0.0
      %655 = vmatprep.subr.mxu0 0.0
      %656 = vmatpush2.msra.mxu0 0.0
      %657 = vmatprep.subr.mxu0 0.0
      %658 = vmatpush2.msra.mxu0 0.0
      %659 = vmatprep.subr.mxu0 0.0
      %660 = vmatpush2.msra.mxu0 0.0
      %661 = vmatprep.subr.mxu0 0.0
      %662 = vmatpush2.msra.mxu0 0.0
      %663 = vmatprep.subr.mxu0 0.0
      %664 = vmatpush2.msra.mxu0 0.0
      %665 = vmatprep.subr.mxu0 0.0
      %666 = vmatpush2.msra.mxu0 0.0
      %667 = vmatprep.mubr.f32.mxu0 0.0
      %668 = vmatmul.mubr.f32.gmra.mxu0 %v599
      %v669 = vpop.f32.mrf.mxu0
      %v670 = vadd.f32 0.0, %v669
      %v671 = vpop.f32.mrf.mxu0
      %672 = vmatprep.mubr.f32.mxu0 0.0
      %673 = vmatmul.mubr.f32.gmra.mxu0 %v601
      %v674 = vpop.f32.mrf.mxu0
      %v675 = vadd.f32 0.0, %v674
      %v676 = vpop.f32.mrf.mxu0
      %677 = vdwg.mxu0
      %678 = vmatprep.subr.mxu0 0.0
      %679 = vmatpush1.msra.mxu0 0.0
      %680 = vmatprep.subr.mxu0 0.0
      %681 = vmatpush1.msra.mxu0 0.0
      %682 = vmatprep.subr.mxu0 0.0
      %683 = vmatpush1.msra.mxu0 0.0
      %684 = vmatprep.subr.mxu0 0.0
      %685 = vmatpush1.msra.mxu0 0.0
      %686 = vmatprep.subr.mxu0 0.0
      %687 = vmatpush1.msra.mxu0 0.0
      %688 = vmatprep.subr.mxu0 0.0
      %689 = vmatpush1.msra.mxu0 0.0
      %690 = vmatprep.subr.mxu0 0.0
      %691 = vmatpush1.msra.mxu0 0.0
      %692 = vmatprep.subr.mxu0 0.0
      %693 = vmatpush1.msra.mxu0 0.0
      %694 = vmatprep.subr.mxu0 0.0
      %695 = vmatpush1.msra.mxu0 0.0
      %696 = vmatprep.subr.mxu0 0.0
      %697 = vmatpush1.msra.mxu0 0.0
      %698 = vmatprep.subr.mxu0 0.0
      %699 = vmatpush1.msra.mxu0 0.0
      %700 = vmatprep.subr.mxu0 0.0
      %701 = vmatpush1.msra.mxu0 0.0
      %702 = vmatprep.subr.mxu0 0.0
      %703 = vmatpush1.msra.mxu0 0.0
      %704 = vmatprep.subr.mxu0 0.0
      %705 = vmatpush1.msra.mxu0 0.0
      %706 = vmatprep.subr.mxu0 0.0
      %707 = vmatpush1.msra.mxu0 0.0
      %708 = vmatprep.subr.mxu0 0.0
      %709 = vmatpush1.msra.mxu0 %v422
      %710 = vmatprep.subr.mxu0 0.0
      %711 = vmatpush2.msra.mxu0 0.0
      %712 = vmatprep.subr.mxu0 0.0
      %713 = vmatpush2.msra.mxu0 0.0
      %714 = vmatprep.subr.mxu0 0.0
      %715 = vmatpush2.msra.mxu0 0.0
      %716 = vmatprep.subr.mxu0 0.0
      %717 = vmatpush2.msra.mxu0 0.0
      %718 = vmatprep.subr.mxu0 0.0
      %719 = vmatpush2.msra.mxu0 0.0
      %720 = vmatprep.subr.mxu0 0.0
      %721 = vmatpush2.msra.mxu0 0.0
      %722 = vmatprep.subr.mxu0 0.0
      %723 = vmatpush2.msra.mxu0 0.0
      %724 = vmatprep.subr.mxu0 0.0
      %725 = vmatpush2.msra.mxu0 0.0
      %726 = vmatprep.subr.mxu0 0.0
      %727 = vmatpush2.msra.mxu0 0.0
      %728 = vmatprep.subr.mxu0 0.0
      %729 = vmatpush2.msra.mxu0 0.0
      %730 = vmatprep.subr.mxu0 0.0
      %731 = vmatpush2.msra.mxu0 0.0
      %732 = vmatprep.subr.mxu0 0.0
      %733 = vmatpush2.msra.mxu0 0.0
      %734 = vmatprep.subr.mxu0 0.0
      %735 = vmatpush2.msra.mxu0 0.0
      %736 = vmatprep.subr.mxu0 0.0
      %737 = vmatpush2.msra.mxu0 0.0
      %738 = vmatprep.subr.mxu0 0.0
      %739 = vmatpush2.msra.mxu0 0.0
      %740 = vmatprep.subr.mxu0 0.0
      %741 = vmatpush2.msra.mxu0 0.0
      %742 = vmatprep.mubr.f32.mxu0 0.0
      %743 = vmatmul.mubr.f32.gmra.mxu0 %v599
      %v744 = vpop.f32.mrf.mxu0
      %v745 = vadd.f32 0.0, %v744
      %v746 = vpop.f32.mrf.mxu0
      %747 = vmatprep.mubr.f32.mxu0 0.0
      %748 = vmatmul.mubr.f32.gmra.mxu0 %v601
      %v749 = vpop.f32.mrf.mxu0
      %v750 = vadd.f32 0.0, %v749
      %v751 = vpop.f32.mrf.mxu0
      %752 = vdwg.mxu0
      %v754 = vrot.slane %v745, 4
      %v756 = vadd.f32 %v670, %v754
      %758 = vrot.lane.b32.xlu0 %v756, 32
      %v759 = vpop.permute.xlu0 %758
      %vm761 = vcmask 388352
      %762 = vst.msk [vmem:[#allocation2] sm:$0xf] %vm761, %v759
      %v764 = vrot.slane %v750, 4
      %v766 = vadd.f32 %v675, %v764
      %768 = vrot.lane.b32.xlu0 %v766, 48
      %v769 = vpop.permute.xlu0 %768
      %vm771 = vcmask 519552
      %772 = vst.msk [vmem:[#allocation2] sm:$0xf] %vm771, %v769
      %773 = vrot.lane.b32.xlu0 %v412, 112
      %v774 = vpop.permute.xlu0 %773
      %775 = vrot.lane.b32.xlu0 %v417, 112
      %v776 = vpop.permute.xlu0 %775
      %v777 = vsel %vm338, %v774, 0
      %v779 = vsel %vm338, %v776, 0
      %781 = vmatprep.subr.mxu0 0.0
      %782 = vmatpush1.msra.mxu0 0.0
      %783 = vmatprep.subr.mxu0 0.0
      %784 = vmatpush1.msra.mxu0 0.0
      %785 = vmatprep.subr.mxu0 0.0
      %786 = vmatpush1.msra.mxu0 0.0
      %787 = vmatprep.subr.mxu0 0.0
      %788 = vmatpush1.msra.mxu0 0.0
      %789 = vmatprep.subr.mxu0 0.0
      %790 = vmatpush1.msra.mxu0 0.0
      %791 = vmatprep.subr.mxu0 0.0
      %792 = vmatpush1.msra.mxu0 0.0
      %793 = vmatprep.subr.mxu0 0.0
      %794 = vmatpush1.msra.mxu0 0.0
      %795 = vmatprep.subr.mxu0 0.0
      %796 = vmatpush1.msra.mxu0 0.0
      %797 = vmatprep.subr.mxu0 0.0
      %798 = vmatpush1.msra.mxu0 0.0
      %799 = vmatprep.subr.mxu0 0.0
      %800 = vmatpush1.msra.mxu0 0.0
      %801 = vmatprep.subr.mxu0 0.0
      %802 = vmatpush1.msra.mxu0 0.0
      %803 = vmatprep.subr.mxu0 0.0
      %804 = vmatpush1.msra.mxu0 0.0
      %805 = vmatprep.subr.mxu0 0.0
      %806 = vmatpush1.msra.mxu0 0.0
      %807 = vmatprep.subr.mxu0 0.0
      %808 = vmatpush1.msra.mxu0 0.0
      %809 = vmatprep.subr.mxu0 0.0
      %810 = vmatpush1.msra.mxu0 0.0
      %811 = vmatprep.subr.mxu0 0.0
      %812 = vmatpush1.msra.mxu0 %v420
      %813 = vmatprep.subr.mxu0 0.0
      %814 = vmatpush2.msra.mxu0 0.0
      %815 = vmatprep.subr.mxu0 0.0
      %816 = vmatpush2.msra.mxu0 0.0
      %817 = vmatprep.subr.mxu0 0.0
      %818 = vmatpush2.msra.mxu0 0.0
      %819 = vmatprep.subr.mxu0 0.0
      %820 = vmatpush2.msra.mxu0 0.0
      %821 = vmatprep.subr.mxu0 0.0
      %822 = vmatpush2.msra.mxu0 0.0
      %823 = vmatprep.subr.mxu0 0.0
      %824 = vmatpush2.msra.mxu0 0.0
      %825 = vmatprep.subr.mxu0 0.0
      %826 = vmatpush2.msra.mxu0 0.0
      %827 = vmatprep.subr.mxu0 0.0
      %828 = vmatpush2.msra.mxu0 0.0
      %829 = vmatprep.subr.mxu0 0.0
      %830 = vmatpush2.msra.mxu0 0.0
      %831 = vmatprep.subr.mxu0 0.0
      %832 = vmatpush2.msra.mxu0 0.0
      %833 = vmatprep.subr.mxu0 0.0
      %834 = vmatpush2.msra.mxu0 0.0
      %835 = vmatprep.subr.mxu0 0.0
      %836 = vmatpush2.msra.mxu0 0.0
      %837 = vmatprep.subr.mxu0 0.0
      %838 = vmatpush2.msra.mxu0 0.0
      %839 = vmatprep.subr.mxu0 0.0
      %840 = vmatpush2.msra.mxu0 0.0
      %841 = vmatprep.subr.mxu0 0.0
      %842 = vmatpush2.msra.mxu0 0.0
      %843 = vmatprep.subr.mxu0 0.0
      %844 = vmatpush2.msra.mxu0 0.0
      %845 = vmatprep.mubr.f32.mxu0 0.0
      %846 = vmatmul.mubr.f32.gmra.mxu0 %v777
      %v847 = vpop.f32.mrf.mxu0
      %v848 = vadd.f32 0.0, %v847
      %v849 = vpop.f32.mrf.mxu0
      %850 = vmatprep.mubr.f32.mxu0 0.0
      %851 = vmatmul.mubr.f32.gmra.mxu0 %v779
      %v852 = vpop.f32.mrf.mxu0
      %v853 = vadd.f32 0.0, %v852
      %v854 = vpop.f32.mrf.mxu0
      %855 = vdwg.mxu0
      %856 = vmatprep.subr.mxu0 0.0
      %857 = vmatpush1.msra.mxu0 0.0
      %858 = vmatprep.subr.mxu0 0.0
      %859 = vmatpush1.msra.mxu0 0.0
      %860 = vmatprep.subr.mxu0 0.0
      %861 = vmatpush1.msra.mxu0 0.0
      %862 = vmatprep.subr.mxu0 0.0
      %863 = vmatpush1.msra.mxu0 0.0
      %864 = vmatprep.subr.mxu0 0.0
      %865 = vmatpush1.msra.mxu0 0.0
      %866 = vmatprep.subr.mxu0 0.0
      %867 = vmatpush1.msra.mxu0 0.0
      %868 = vmatprep.subr.mxu0 0.0
      %869 = vmatpush1.msra.mxu0 0.0
      %870 = vmatprep.subr.mxu0 0.0
      %871 = vmatpush1.msra.mxu0 0.0
      %872 = vmatprep.subr.mxu0 0.0
      %873 = vmatpush1.msra.mxu0 0.0
      %874 = vmatprep.subr.mxu0 0.0
      %875 = vmatpush1.msra.mxu0 0.0
      %876 = vmatprep.subr.mxu0 0.0
      %877 = vmatpush1.msra.mxu0 0.0
      %878 = vmatprep.subr.mxu0 0.0
      %879 = vmatpush1.msra.mxu0 0.0
      %880 = vmatprep.subr.mxu0 0.0
      %881 = vmatpush1.msra.mxu0 0.0
      %882 = vmatprep.subr.mxu0 0.0
      %883 = vmatpush1.msra.mxu0 0.0
      %884 = vmatprep.subr.mxu0 0.0
      %885 = vmatpush1.msra.mxu0 0.0
      %886 = vmatprep.subr.mxu0 0.0
      %887 = vmatpush1.msra.mxu0 %v422
      %888 = vmatprep.subr.mxu0 0.0
      %889 = vmatpush2.msra.mxu0 0.0
      %890 = vmatprep.subr.mxu0 0.0
      %891 = vmatpush2.msra.mxu0 0.0
      %892 = vmatprep.subr.mxu0 0.0
      %893 = vmatpush2.msra.mxu0 0.0
      %894 = vmatprep.subr.mxu0 0.0
      %895 = vmatpush2.msra.mxu0 0.0
      %896 = vmatprep.subr.mxu0 0.0
      %897 = vmatpush2.msra.mxu0 0.0
      %898 = vmatprep.subr.mxu0 0.0
      %899 = vmatpush2.msra.mxu0 0.0
      %900 = vmatprep.subr.mxu0 0.0
      %901 = vmatpush2.msra.mxu0 0.0
      %902 = vmatprep.subr.mxu0 0.0
      %903 = vmatpush2.msra.mxu0 0.0
      %904 = vmatprep.subr.mxu0 0.0
      %905 = vmatpush2.msra.mxu0 0.0
      %906 = vmatprep.subr.mxu0 0.0
      %907 = vmatpush2.msra.mxu0 0.0
      %908 = vmatprep.subr.mxu0 0.0
      %909 = vmatpush2.msra.mxu0 0.0
      %910 = vmatprep.subr.mxu0 0.0
      %911 = vmatpush2.msra.mxu0 0.0
      %912 = vmatprep.subr.mxu0 0.0
      %913 = vmatpush2.msra.mxu0 0.0
      %914 = vmatprep.subr.mxu0 0.0
      %915 = vmatpush2.msra.mxu0 0.0
      %916 = vmatprep.subr.mxu0 0.0
      %917 = vmatpush2.msra.mxu0 0.0
      %918 = vmatprep.subr.mxu0 0.0
      %919 = vmatpush2.msra.mxu0 0.0
      %920 = vmatprep.mubr.f32.mxu0 0.0
      %921 = vmatmul.mubr.f32.gmra.mxu0 %v777
      %v922 = vpop.f32.mrf.mxu0
      %v923 = vadd.f32 0.0, %v922
      %v924 = vpop.f32.mrf.mxu0
      %925 = vmatprep.mubr.f32.mxu0 0.0
      %926 = vmatmul.mubr.f32.gmra.mxu0 %v779
      %v927 = vpop.f32.mrf.mxu0
      %v928 = vadd.f32 0.0, %v927
      %v929 = vpop.f32.mrf.mxu0
      %930 = vdwg.mxu0
      %v932 = vrot.slane %v923, 4
      %v934 = vadd.f32 %v848, %v932
      %936 = vrot.lane.b32.xlu0 %v934, 64
      %v937 = vpop.permute.xlu0 %936
      %vm939 = vcmask 650752
      %940 = vst.msk [vmem:[#allocation2] sm:$0xf] %vm939, %v937
      %v942 = vrot.slane %v928, 4
      %v944 = vadd.f32 %v853, %v942
      %946 = vrot.lane.b32.xlu0 %v944, 80
      %v947 = vpop.permute.xlu0 %946
      %vm949 = vcmask 781952
      %950 = vst.msk [vmem:[#allocation2] sm:$0xf] %vm949, %v947
      %951 = vrot.lane.b32.xlu0 %v412, 104
      %v952 = vpop.permute.xlu0 %951
      %953 = vrot.lane.b32.xlu0 %v417, 104
      %v954 = vpop.permute.xlu0 %953
      %v955 = vsel %vm338, %v952, 0
      %v957 = vsel %vm338, %v954, 0
      %959 = vmatprep.subr.mxu0 0.0
      %960 = vmatpush1.msra.mxu0 0.0
      %961 = vmatprep.subr.mxu0 0.0
      %962 = vmatpush1.msra.mxu0 0.0
      %963 = vmatprep.subr.mxu0 0.0
      %964 = vmatpush1.msra.mxu0 0.0
      %965 = vmatprep.subr.mxu0 0.0
      %966 = vmatpush1.msra.mxu0 0.0
      %967 = vmatprep.subr.mxu0 0.0
      %968 = vmatpush1.msra.mxu0 0.0
      %969 = vmatprep.subr.mxu0 0.0
      %970 = vmatpush1.msra.mxu0 0.0
      %971 = vmatprep.subr.mxu0 0.0
      %972 = vmatpush1.msra.mxu0 0.0
      %973 = vmatprep.subr.mxu0 0.0
      %974 = vmatpush1.msra.mxu0 0.0
      %975 = vmatprep.subr.mxu0 0.0
      %976 = vmatpush1.msra.mxu0 0.0
      %977 = vmatprep.subr.mxu0 0.0
      %978 = vmatpush1.msra.mxu0 0.0
      %979 = vmatprep.subr.mxu0 0.0
      %980 = vmatpush1.msra.mxu0 0.0
      %981 = vmatprep.subr.mxu0 0.0
      %982 = vmatpush1.msra.mxu0 0.0
      %983 = vmatprep.subr.mxu0 0.0
      %984 = vmatpush1.msra.mxu0 0.0
      %985 = vmatprep.subr.mxu0 0.0
      %986 = vmatpush1.msra.mxu0 0.0
      %987 = vmatprep.subr.mxu0 0.0
      %988 = vmatpush1.msra.mxu0 0.0
      %989 = vmatprep.subr.mxu0 0.0
      %990 = vmatpush1.msra.mxu0 %v420
      %991 = vmatprep.subr.mxu0 0.0
      %992 = vmatpush2.msra.mxu0 0.0
      %993 = vmatprep.subr.mxu0 0.0
      %994 = vmatpush2.msra.mxu0 0.0
      %995 = vmatprep.subr.mxu0 0.0
      %996 = vmatpush2.msra.mxu0 0.0
      %997 = vmatprep.subr.mxu0 0.0
      %998 = vmatpush2.msra.mxu0 0.0
      %999 = vmatprep.subr.mxu0 0.0
      %1000 = vmatpush2.msra.mxu0 0.0
      %1001 = vmatprep.subr.mxu0 0.0
      %1002 = vmatpush2.msra.mxu0 0.0
      %1003 = vmatprep.subr.mxu0 0.0
      %1004 = vmatpush2.msra.mxu0 0.0
      %1005 = vmatprep.subr.mxu0 0.0
      %1006 = vmatpush2.msra.mxu0 0.0
      %1007 = vmatprep.subr.mxu0 0.0
      %1008 = vmatpush2.msra.mxu0 0.0
      %1009 = vmatprep.subr.mxu0 0.0
      %1010 = vmatpush2.msra.mxu0 0.0
      %1011 = vmatprep.subr.mxu0 0.0
      %1012 = vmatpush2.msra.mxu0 0.0
      %1013 = vmatprep.subr.mxu0 0.0
      %1014 = vmatpush2.msra.mxu0 0.0
      %1015 = vmatprep.subr.mxu0 0.0
      %1016 = vmatpush2.msra.mxu0 0.0
      %1017 = vmatprep.subr.mxu0 0.0
      %1018 = vmatpush2.msra.mxu0 0.0
      %1019 = vmatprep.subr.mxu0 0.0
      %1020 = vmatpush2.msra.mxu0 0.0
      %1021 = vmatprep.subr.mxu0 0.0
      %1022 = vmatpush2.msra.mxu0 0.0
      %1023 = vmatprep.mubr.f32.mxu0 0.0
      %1024 = vmatmul.mubr.f32.gmra.mxu0 %v955
      %v1025 = vpop.f32.mrf.mxu0
      %v1026 = vadd.f32 0.0, %v1025
      %v1027 = vpop.f32.mrf.mxu0
      %1028 = vmatprep.mubr.f32.mxu0 0.0
      %1029 = vmatmul.mubr.f32.gmra.mxu0 %v957
      %v1030 = vpop.f32.mrf.mxu0
      %v1031 = vadd.f32 0.0, %v1030
      %v1032 = vpop.f32.mrf.mxu0
      %1033 = vdwg.mxu0
      %1034 = vmatprep.subr.mxu0 0.0
      %1035 = vmatpush1.msra.mxu0 0.0
      %1036 = vmatprep.subr.mxu0 0.0
      %1037 = vmatpush1.msra.mxu0 0.0
      %1038 = vmatprep.subr.mxu0 0.0
      %1039 = vmatpush1.msra.mxu0 0.0
      %1040 = vmatprep.subr.mxu0 0.0
      %1041 = vmatpush1.msra.mxu0 0.0
      %1042 = vmatprep.subr.mxu0 0.0
      %1043 = vmatpush1.msra.mxu0 0.0
      %1044 = vmatprep.subr.mxu0 0.0
      %1045 = vmatpush1.msra.mxu0 0.0
      %1046 = vmatprep.subr.mxu0 0.0
      %1047 = vmatpush1.msra.mxu0 0.0
      %1048 = vmatprep.subr.mxu0 0.0
      %1049 = vmatpush1.msra.mxu0 0.0
      %1050 = vmatprep.subr.mxu0 0.0
      %1051 = vmatpush1.msra.mxu0 0.0
      %1052 = vmatprep.subr.mxu0 0.0
      %1053 = vmatpush1.msra.mxu0 0.0
      %1054 = vmatprep.subr.mxu0 0.0
      %1055 = vmatpush1.msra.mxu0 0.0
      %1056 = vmatprep.subr.mxu0 0.0
      %1057 = vmatpush1.msra.mxu0 0.0
      %1058 = vmatprep.subr.mxu0 0.0
      %1059 = vmatpush1.msra.mxu0 0.0
      %1060 = vmatprep.subr.mxu0 0.0
      %1061 = vmatpush1.msra.mxu0 0.0
      %1062 = vmatprep.subr.mxu0 0.0
      %1063 = vmatpush1.msra.mxu0 0.0
      %1064 = vmatprep.subr.mxu0 0.0
      %1065 = vmatpush1.msra.mxu0 %v422
      %1066 = vmatprep.subr.mxu0 0.0
      %1067 = vmatpush2.msra.mxu0 0.0
      %1068 = vmatprep.subr.mxu0 0.0
      %1069 = vmatpush2.msra.mxu0 0.0
      %1070 = vmatprep.subr.mxu0 0.0
      %1071 = vmatpush2.msra.mxu0 0.0
      %1072 = vmatprep.subr.mxu0 0.0
      %1073 = vmatpush2.msra.mxu0 0.0
      %1074 = vmatprep.subr.mxu0 0.0
      %1075 = vmatpush2.msra.mxu0 0.0
      %1076 = vmatprep.subr.mxu0 0.0
      %1077 = vmatpush2.msra.mxu0 0.0
      %1078 = vmatprep.subr.mxu0 0.0
      %1079 = vmatpush2.msra.mxu0 0.0
      %1080 = vmatprep.subr.mxu0 0.0
      %1081 = vmatpush2.msra.mxu0 0.0
      %1082 = vmatprep.subr.mxu0 0.0
      %1083 = vmatpush2.msra.mxu0 0.0
      %1084 = vmatprep.subr.mxu0 0.0
      %1085 = vmatpush2.msra.mxu0 0.0
      %1086 = vmatprep.subr.mxu0 0.0
      %1087 = vmatpush2.msra.mxu0 0.0
      %1088 = vmatprep.subr.mxu0 0.0
      %1089 = vmatpush2.msra.mxu0 0.0
      %1090 = vmatprep.subr.mxu0 0.0
      %1091 = vmatpush2.msra.mxu0 0.0
      %1092 = vmatprep.subr.mxu0 0.0
      %1093 = vmatpush2.msra.mxu0 0.0
      %1094 = vmatprep.subr.mxu0 0.0
      %1095 = vmatpush2.msra.mxu0 0.0
      %1096 = vmatprep.subr.mxu0 0.0
      %1097 = vmatpush2.msra.mxu0 0.0
      %1098 = vmatprep.mubr.f32.mxu0 0.0
      %1099 = vmatmul.mubr.f32.gmra.mxu0 %v955
      %v1100 = vpop.f32.mrf.mxu0
      %v1101 = vadd.f32 0.0, %v1100
      %v1102 = vpop.f32.mrf.mxu0
      %1103 = vmatprep.mubr.f32.mxu0 0.0
      %1104 = vmatmul.mubr.f32.gmra.mxu0 %v957
      %v1105 = vpop.f32.mrf.mxu0
      %v1106 = vadd.f32 0.0, %v1105
      %v1107 = vpop.f32.mrf.mxu0
      %1108 = vdwg.mxu0
      %v1110 = vrot.slane %v1101, 4
      %v1112 = vadd.f32 %v1026, %v1110
      %1114 = vrot.lane.b32.xlu0 %v1112, 96
      %v1115 = vpop.permute.xlu0 %1114
      %vm1117 = vcmask 913152
      %1118 = vst.msk [vmem:[#allocation2] sm:$0xf] %vm1117, %v1115
      %v1120 = vrot.slane %v1106, 4
      %v1122 = vadd.f32 %v1031, %v1120
      %1124 = vrot.lane.b32.xlu0 %v1122, 112
      %v1125 = vpop.permute.xlu0 %1124
      %vm1127 = vcmask 1044352
      %1128 = vst.msk [vmem:[#allocation2] sm:$0xf] %vm1127, %v1125
      %1129 = vrot.lane.b32.xlu0 %v412, 96
      %v1130 = vpop.permute.xlu0 %1129
      %1131 = vrot.lane.b32.xlu0 %v417, 96
      %v1132 = vpop.permute.xlu0 %1131
      %v1133 = vsel %vm338, %v1130, 0
      %v1135 = vsel %vm338, %v1132, 0
      %1137 = vmatprep.subr.mxu0 0.0
      %1138 = vmatpush1.msra.mxu0 0.0
      %1139 = vmatprep.subr.mxu0 0.0
      %1140 = vmatpush1.msra.mxu0 0.0
      %1141 = vmatprep.subr.mxu0 0.0
      %1142 = vmatpush1.msra.mxu0 0.0
      %1143 = vmatprep.subr.mxu0 0.0
      %1144 = vmatpush1.msra.mxu0 0.0
      %1145 = vmatprep.subr.mxu0 0.0
      %1146 = vmatpush1.msra.mxu0 0.0
      %1147 = vmatprep.subr.mxu0 0.0
      %1148 = vmatpush1.msra.mxu0 0.0
      %1149 = vmatprep.subr.mxu0 0.0
      %1150 = vmatpush1.msra.mxu0 0.0
      %1151 = vmatprep.subr.mxu0 0.0
      %1152 = vmatpush1.msra.mxu0 0.0
      %1153 = vmatprep.subr.mxu0 0.0
      %1154 = vmatpush1.msra.mxu0 0.0
      %1155 = vmatprep.subr.mxu0 0.0
      %1156 = vmatpush1.msra.mxu0 0.0
      %1157 = vmatprep.subr.mxu0 0.0
      %1158 = vmatpush1.msra.mxu0 0.0
      %1159 = vmatprep.subr.mxu0 0.0
      %1160 = vmatpush1.msra.mxu0 0.0
      %1161 = vmatprep.subr.mxu0 0.0
      %1162 = vmatpush1.msra.mxu0 0.0
      %1163 = vmatprep.subr.mxu0 0.0
      %1164 = vmatpush1.msra.mxu0 0.0
      %1165 = vmatprep.subr.mxu0 0.0
      %1166 = vmatpush1.msra.mxu0 0.0
      %1167 = vmatprep.subr.mxu0 0.0
      %1168 = vmatpush1.msra.mxu0 %v420
      %1169 = vmatprep.subr.mxu0 0.0
      %1170 = vmatpush2.msra.mxu0 0.0
      %1171 = vmatprep.subr.mxu0 0.0
      %1172 = vmatpush2.msra.mxu0 0.0
      %1173 = vmatprep.subr.mxu0 0.0
      %1174 = vmatpush2.msra.mxu0 0.0
      %1175 = vmatprep.subr.mxu0 0.0
      %1176 = vmatpush2.msra.mxu0 0.0
      %1177 = vmatprep.subr.mxu0 0.0
      %1178 = vmatpush2.msra.mxu0 0.0
      %1179 = vmatprep.subr.mxu0 0.0
      %1180 = vmatpush2.msra.mxu0 0.0
      %1181 = vmatprep.subr.mxu0 0.0
      %1182 = vmatpush2.msra.mxu0 0.0
      %1183 = vmatprep.subr.mxu0 0.0
      %1184 = vmatpush2.msra.mxu0 0.0
      %1185 = vmatprep.subr.mxu0 0.0
      %1186 = vmatpush2.msra.mxu0 0.0
      %1187 = vmatprep.subr.mxu0 0.0
      %1188 = vmatpush2.msra.mxu0 0.0
      %1189 = vmatprep.subr.mxu0 0.0
      %1190 = vmatpush2.msra.mxu0 0.0
      %1191 = vmatprep.subr.mxu0 0.0
      %1192 = vmatpush2.msra.mxu0 0.0
      %1193 = vmatprep.subr.mxu0 0.0
      %1194 = vmatpush2.msra.mxu0 0.0
      %1195 = vmatprep.subr.mxu0 0.0
      %1196 = vmatpush2.msra.mxu0 0.0
      %1197 = vmatprep.subr.mxu0 0.0
      %1198 = vmatpush2.msra.mxu0 0.0
      %1199 = vmatprep.subr.mxu0 0.0
      %1200 = vmatpush2.msra.mxu0 0.0
      %1201 = vmatprep.mubr.f32.mxu0 0.0
      %1202 = vmatmul.mubr.f32.gmra.mxu0 %v1133
      %v1203 = vpop.f32.mrf.mxu0
      %v1204 = vadd.f32 0.0, %v1203
      %v1205 = vpop.f32.mrf.mxu0
      %1206 = vmatprep.mubr.f32.mxu0 0.0
      %1207 = vmatmul.mubr.f32.gmra.mxu0 %v1135
      %v1208 = vpop.f32.mrf.mxu0
      %v1209 = vadd.f32 0.0, %v1208
      %v1210 = vpop.f32.mrf.mxu0
      %1211 = vdwg.mxu0
      %1212 = vmatprep.subr.mxu0 0.0
      %1213 = vmatpush1.msra.mxu0 0.0
      %1214 = vmatprep.subr.mxu0 0.0
      %1215 = vmatpush1.msra.mxu0 0.0
      %1216 = vmatprep.subr.mxu0 0.0
      %1217 = vmatpush1.msra.mxu0 0.0
      %1218 = vmatprep.subr.mxu0 0.0
      %1219 = vmatpush1.msra.mxu0 0.0
      %1220 = vmatprep.subr.mxu0 0.0
      %1221 = vmatpush1.msra.mxu0 0.0
      %1222 = vmatprep.subr.mxu0 0.0
      %1223 = vmatpush1.msra.mxu0 0.0
      %1224 = vmatprep.subr.mxu0 0.0
      %1225 = vmatpush1.msra.mxu0 0.0
      %1226 = vmatprep.subr.mxu0 0.0
      %1227 = vmatpush1.msra.mxu0 0.0
      %1228 = vmatprep.subr.mxu0 0.0
      %1229 = vmatpush1.msra.mxu0 0.0
      %1230 = vmatprep.subr.mxu0 0.0
      %1231 = vmatpush1.msra.mxu0 0.0
      %1232 = vmatprep.subr.mxu0 0.0
      %1233 = vmatpush1.msra.mxu0 0.0
      %1234 = vmatprep.subr.mxu0 0.0
      %1235 = vmatpush1.msra.mxu0 0.0
      %1236 = vmatprep.subr.mxu0 0.0
      %1237 = vmatpush1.msra.mxu0 0.0
      %1238 = vmatprep.subr.mxu0 0.0
      %1239 = vmatpush1.msra.mxu0 0.0
      %1240 = vmatprep.subr.mxu0 0.0
      %1241 = vmatpush1.msra.mxu0 0.0
      %1242 = vmatprep.subr.mxu0 0.0
      %1243 = vmatpush1.msra.mxu0 %v422
      %1244 = vmatprep.subr.mxu0 0.0
      %1245 = vmatpush2.msra.mxu0 0.0
      %1246 = vmatprep.subr.mxu0 0.0
      %1247 = vmatpush2.msra.mxu0 0.0
      %1248 = vmatprep.subr.mxu0 0.0
      %1249 = vmatpush2.msra.mxu0 0.0
      %1250 = vmatprep.subr.mxu0 0.0
      %1251 = vmatpush2.msra.mxu0 0.0
      %1252 = vmatprep.subr.mxu0 0.0
      %1253 = vmatpush2.msra.mxu0 0.0
      %1254 = vmatprep.subr.mxu0 0.0
      %1255 = vmatpush2.msra.mxu0 0.0
      %1256 = vmatprep.subr.mxu0 0.0
      %1257 = vmatpush2.msra.mxu0 0.0
      %1258 = vmatprep.subr.mxu0 0.0
      %1259 = vmatpush2.msra.mxu0 0.0
      %1260 = vmatprep.subr.mxu0 0.0
      %1261 = vmatpush2.msra.mxu0 0.0
      %1262 = vmatprep.subr.mxu0 0.0
      %1263 = vmatpush2.msra.mxu0 0.0
      %1264 = vmatprep.subr.mxu0 0.0
      %1265 = vmatpush2.msra.mxu0 0.0
      %1266 = vmatprep.subr.mxu0 0.0
      %1267 = vmatpush2.msra.mxu0 0.0
      %1268 = vmatprep.subr.mxu0 0.0
      %1269 = vmatpush2.msra.mxu0 0.0
      %1270 = vmatprep.subr.mxu0 0.0
      %1271 = vmatpush2.msra.mxu0 0.0
      %1272 = vmatprep.subr.mxu0 0.0
      %1273 = vmatpush2.msra.mxu0 0.0
      %1274 = vmatprep.subr.mxu0 0.0
      %1275 = vmatpush2.msra.mxu0 0.0
      %1276 = vmatprep.mubr.f32.mxu0 0.0
      %1277 = vmatmul.mubr.f32.gmra.mxu0 %v1133
      %v1278 = vpop.f32.mrf.mxu0
      %v1279 = vadd.f32 0.0, %v1278
      %v1280 = vpop.f32.mrf.mxu0
      %1281 = vmatprep.mubr.f32.mxu0 0.0
      %1282 = vmatmul.mubr.f32.gmra.mxu0 %v1135
      %v1283 = vpop.f32.mrf.mxu0
      %v1284 = vadd.f32 0.0, %v1283
      %v1285 = vpop.f32.mrf.mxu0
      %1286 = vdwg.mxu0
      %v1288 = vrot.slane %v1279, 4
      %v1290 = vadd.f32 %v1204, %v1288
      %1291 = vst.msk [vmem:[#allocation2 + $0x4] sm:$0xf] %vm583, %v1290
      %v1293 = vrot.slane %v1284, 4
      %v1295 = vadd.f32 %v1209, %v1293
      %1297 = vrot.lane.b32.xlu0 %v1295, 16
      %v1298 = vpop.permute.xlu0 %1297
      %1300 = vst.msk [vmem:[#allocation2 + $0x4] sm:$0xf] %vm593, %v1298
      %1301 = vrot.lane.b32.xlu0 %v412, 88
      %v1302 = vpop.permute.xlu0 %1301
      %1303 = vrot.lane.b32.xlu0 %v417, 88
      %v1304 = vpop.permute.xlu0 %1303
      %v1305 = vsel %vm338, %v1302, 0
      %v1307 = vsel %vm338, %v1304, 0
      %1309 = vmatprep.subr.mxu0 0.0
      %1310 = vmatpush1.msra.mxu0 0.0
      %1311 = vmatprep.subr.mxu0 0.0
      %1312 = vmatpush1.msra.mxu0 0.0
      %1313 = vmatprep.subr.mxu0 0.0
      %1314 = vmatpush1.msra.mxu0 0.0
      %1315 = vmatprep.subr.mxu0 0.0
      %1316 = vmatpush1.msra.mxu0 0.0
      %1317 = vmatprep.subr.mxu0 0.0
      %1318 = vmatpush1.msra.mxu0 0.0
      %1319 = vmatprep.subr.mxu0 0.0
      %1320 = vmatpush1.msra.mxu0 0.0
      %1321 = vmatprep.subr.mxu0 0.0
      %1322 = vmatpush1.msra.mxu0 0.0
      %1323 = vmatprep.subr.mxu0 0.0
      %1324 = vmatpush1.msra.mxu0 0.0
      %1325 = vmatprep.subr.mxu0 0.0
      %1326 = vmatpush1.msra.mxu0 0.0
      %1327 = vmatprep.subr.mxu0 0.0
      %1328 = vmatpush1.msra.mxu0 0.0
      %1329 = vmatprep.subr.mxu0 0.0
      %1330 = vmatpush1.msra.mxu0 0.0
      %1331 = vmatprep.subr.mxu0 0.0
      %1332 = vmatpush1.msra.mxu0 0.0
      %1333 = vmatprep.subr.mxu0 0.0
      %1334 = vmatpush1.msra.mxu0 0.0
      %1335 = vmatprep.subr.mxu0 0.0
      %1336 = vmatpush1.msra.mxu0 0.0
      %1337 = vmatprep.subr.mxu0 0.0
      %1338 = vmatpush1.msra.mxu0 0.0
      %1339 = vmatprep.subr.mxu0 0.0
      %1340 = vmatpush1.msra.mxu0 %v420
      %1341 = vmatprep.subr.mxu0 0.0
      %1342 = vmatpush2.msra.mxu0 0.0
      %1343 = vmatprep.subr.mxu0 0.0
      %1344 = vmatpush2.msra.mxu0 0.0
      %1345 = vmatprep.subr.mxu0 0.0
      %1346 = vmatpush2.msra.mxu0 0.0
      %1347 = vmatprep.subr.mxu0 0.0
      %1348 = vmatpush2.msra.mxu0 0.0
      %1349 = vmatprep.subr.mxu0 0.0
      %1350 = vmatpush2.msra.mxu0 0.0
      %1351 = vmatprep.subr.mxu0 0.0
      %1352 = vmatpush2.msra.mxu0 0.0
      %1353 = vmatprep.subr.mxu0 0.0
      %1354 = vmatpush2.msra.mxu0 0.0
      %1355 = vmatprep.subr.mxu0 0.0
      %1356 = vmatpush2.msra.mxu0 0.0
      %1357 = vmatprep.subr.mxu0 0.0
      %1358 = vmatpush2.msra.mxu0 0.0
      %1359 = vmatprep.subr.mxu0 0.0
      %1360 = vmatpush2.msra.mxu0 0.0
      %1361 = vmatprep.subr.mxu0 0.0
      %1362 = vmatpush2.msra.mxu0 0.0
      %1363 = vmatprep.subr.mxu0 0.0
      %1364 = vmatpush2.msra.mxu0 0.0
      %1365 = vmatprep.subr.mxu0 0.0
      %1366 = vmatpush2.msra.mxu0 0.0
      %1367 = vmatprep.subr.mxu0 0.0
      %1368 = vmatpush2.msra.mxu0 0.0
      %1369 = vmatprep.subr.mxu0 0.0
      %1370 = vmatpush2.msra.mxu0 0.0
      %1371 = vmatprep.subr.mxu0 0.0
      %1372 = vmatpush2.msra.mxu0 0.0
      %1373 = vmatprep.mubr.f32.mxu0 0.0
      %1374 = vmatmul.mubr.f32.gmra.mxu0 %v1305
      %v1375 = vpop.f32.mrf.mxu0
      %v1376 = vadd.f32 0.0, %v1375
      %v1377 = vpop.f32.mrf.mxu0
      %1378 = vmatprep.mubr.f32.mxu0 0.0
      %1379 = vmatmul.mubr.f32.gmra.mxu0 %v1307
      %v1380 = vpop.f32.mrf.mxu0
      %v1381 = vadd.f32 0.0, %v1380
      %v1382 = vpop.f32.mrf.mxu0
      %1383 = vdwg.mxu0
      %1384 = vmatprep.subr.mxu0 0.0
      %1385 = vmatpush1.msra.mxu0 0.0
      %1386 = vmatprep.subr.mxu0 0.0
      %1387 = vmatpush1.msra.mxu0 0.0
      %1388 = vmatprep.subr.mxu0 0.0
      %1389 = vmatpush1.msra.mxu0 0.0
      %1390 = vmatprep.subr.mxu0 0.0
      %1391 = vmatpush1.msra.mxu0 0.0
      %1392 = vmatprep.subr.mxu0 0.0
      %1393 = vmatpush1.msra.mxu0 0.0
      %1394 = vmatprep.subr.mxu0 0.0
      %1395 = vmatpush1.msra.mxu0 0.0
      %1396 = vmatprep.subr.mxu0 0.0
      %1397 = vmatpush1.msra.mxu0 0.0
      %1398 = vmatprep.subr.mxu0 0.0
      %1399 = vmatpush1.msra.mxu0 0.0
      %1400 = vmatprep.subr.mxu0 0.0
      %1401 = vmatpush1.msra.mxu0 0.0
      %1402 = vmatprep.subr.mxu0 0.0
      %1403 = vmatpush1.msra.mxu0 0.0
      %1404 = vmatprep.subr.mxu0 0.0
      %1405 = vmatpush1.msra.mxu0 0.0
      %1406 = vmatprep.subr.mxu0 0.0
      %1407 = vmatpush1.msra.mxu0 0.0
      %1408 = vmatprep.subr.mxu0 0.0
      %1409 = vmatpush1.msra.mxu0 0.0
      %1410 = vmatprep.subr.mxu0 0.0
      %1411 = vmatpush1.msra.mxu0 0.0
      %1412 = vmatprep.subr.mxu0 0.0
      %1413 = vmatpush1.msra.mxu0 0.0
      %1414 = vmatprep.subr.mxu0 0.0
      %1415 = vmatpush1.msra.mxu0 %v422
      %1416 = vmatprep.subr.mxu0 0.0
      %1417 = vmatpush2.msra.mxu0 0.0
      %1418 = vmatprep.subr.mxu0 0.0
      %1419 = vmatpush2.msra.mxu0 0.0
      %1420 = vmatprep.subr.mxu0 0.0
      %1421 = vmatpush2.msra.mxu0 0.0
      %1422 = vmatprep.subr.mxu0 0.0
      %1423 = vmatpush2.msra.mxu0 0.0
      %1424 = vmatprep.subr.mxu0 0.0
      %1425 = vmatpush2.msra.mxu0 0.0
      %1426 = vmatprep.subr.mxu0 0.0
      %1427 = vmatpush2.msra.mxu0 0.0
      %1428 = vmatprep.subr.mxu0 0.0
      %1429 = vmatpush2.msra.mxu0 0.0
      %1430 = vmatprep.subr.mxu0 0.0
      %1431 = vmatpush2.msra.mxu0 0.0
      %1432 = vmatprep.subr.mxu0 0.0
      %1433 = vmatpush2.msra.mxu0 0.0
      %1434 = vmatprep.subr.mxu0 0.0
      %1435 = vmatpush2.msra.mxu0 0.0
      %1436 = vmatprep.subr.mxu0 0.0
      %1437 = vmatpush2.msra.mxu0 0.0
      %1438 = vmatprep.subr.mxu0 0.0
      %1439 = vmatpush2.msra.mxu0 0.0
      %1440 = vmatprep.subr.mxu0 0.0
      %1441 = vmatpush2.msra.mxu0 0.0
      %1442 = vmatprep.subr.mxu0 0.0
      %1443 = vmatpush2.msra.mxu0 0.0
      %1444 = vmatprep.subr.mxu0 0.0
      %1445 = vmatpush2.msra.mxu0 0.0
      %1446 = vmatprep.subr.mxu0 0.0
      %1447 = vmatpush2.msra.mxu0 0.0
      %1448 = vmatprep.mubr.f32.mxu0 0.0
      %1449 = vmatmul.mubr.f32.gmra.mxu0 %v1305
      %v1450 = vpop.f32.mrf.mxu0
      %v1451 = vadd.f32 0.0, %v1450
      %v1452 = vpop.f32.mrf.mxu0
      %1453 = vmatprep.mubr.f32.mxu0 0.0
      %1454 = vmatmul.mubr.f32.gmra.mxu0 %v1307
      %v1455 = vpop.f32.mrf.mxu0
      %v1456 = vadd.f32 0.0, %v1455
      %v1457 = vpop.f32.mrf.mxu0
      %1458 = vdwg.mxu0
      %v1460 = vrot.slane %v1451, 4
      %v1462 = vadd.f32 %v1376, %v1460
      %1464 = vrot.lane.b32.xlu0 %v1462, 32
      %v1465 = vpop.permute.xlu0 %1464
      %1467 = vst.msk [vmem:[#allocation2 + $0x4] sm:$0xf] %vm761, %v1465
      %v1469 = vrot.slane %v1456, 4
      %v1471 = vadd.f32 %v1381, %v1469
      %1473 = vrot.lane.b32.xlu0 %v1471, 48
      %v1474 = vpop.permute.xlu0 %1473
      %1476 = vst.msk [vmem:[#allocation2 + $0x4] sm:$0xf] %vm771, %v1474
      %1477 = vrot.lane.b32.xlu0 %v412, 80
      %v1478 = vpop.permute.xlu0 %1477
      %1479 = vrot.lane.b32.xlu0 %v417, 80
      %v1480 = vpop.permute.xlu0 %1479
      %v1481 = vsel %vm338, %v1478, 0
      %v1483 = vsel %vm338, %v1480, 0
      %1485 = vmatprep.subr.mxu0 0.0
      %1486 = vmatpush1.msra.mxu0 0.0
      %1487 = vmatprep.subr.mxu0 0.0
      %1488 = vmatpush1.msra.mxu0 0.0
      %1489 = vmatprep.subr.mxu0 0.0
      %1490 = vmatpush1.msra.mxu0 0.0
      %1491 = vmatprep.subr.mxu0 0.0
      %1492 = vmatpush1.msra.mxu0 0.0
      %1493 = vmatprep.subr.mxu0 0.0
      %1494 = vmatpush1.msra.mxu0 0.0
      %1495 = vmatprep.subr.mxu0 0.0
      %1496 = vmatpush1.msra.mxu0 0.0
      %1497 = vmatprep.subr.mxu0 0.0
      %1498 = vmatpush1.msra.mxu0 0.0
      %1499 = vmatprep.subr.mxu0 0.0
      %1500 = vmatpush1.msra.mxu0 0.0
      %1501 = vmatprep.subr.mxu0 0.0
      %1502 = vmatpush1.msra.mxu0 0.0
      %1503 = vmatprep.subr.mxu0 0.0
      %1504 = vmatpush1.msra.mxu0 0.0
      %1505 = vmatprep.subr.mxu0 0.0
      %1506 = vmatpush1.msra.mxu0 0.0
      %1507 = vmatprep.subr.mxu0 0.0
      %1508 = vmatpush1.msra.mxu0 0.0
      %1509 = vmatprep.subr.mxu0 0.0
      %1510 = vmatpush1.msra.mxu0 0.0
      %1511 = vmatprep.subr.mxu0 0.0
      %1512 = vmatpush1.msra.mxu0 0.0
      %1513 = vmatprep.subr.mxu0 0.0
      %1514 = vmatpush1.msra.mxu0 0.0
      %1515 = vmatprep.subr.mxu0 0.0
      %1516 = vmatpush1.msra.mxu0 %v420
      %1517 = vmatprep.subr.mxu0 0.0
      %1518 = vmatpush2.msra.mxu0 0.0
      %1519 = vmatprep.subr.mxu0 0.0
      %1520 = vmatpush2.msra.mxu0 0.0
      %1521 = vmatprep.subr.mxu0 0.0
      %1522 = vmatpush2.msra.mxu0 0.0
      %1523 = vmatprep.subr.mxu0 0.0
      %1524 = vmatpush2.msra.mxu0 0.0
      %1525 = vmatprep.subr.mxu0 0.0
      %1526 = vmatpush2.msra.mxu0 0.0
      %1527 = vmatprep.subr.mxu0 0.0
      %1528 = vmatpush2.msra.mxu0 0.0
      %1529 = vmatprep.subr.mxu0 0.0
      %1530 = vmatpush2.msra.mxu0 0.0
      %1531 = vmatprep.subr.mxu0 0.0
      %1532 = vmatpush2.msra.mxu0 0.0
      %1533 = vmatprep.subr.mxu0 0.0
      %1534 = vmatpush2.msra.mxu0 0.0
      %1535 = vmatprep.subr.mxu0 0.0
      %1536 = vmatpush2.msra.mxu0 0.0
      %1537 = vmatprep.subr.mxu0 0.0
      %1538 = vmatpush2.msra.mxu0 0.0
      %1539 = vmatprep.subr.mxu0 0.0
      %1540 = vmatpush2.msra.mxu0 0.0
      %1541 = vmatprep.subr.mxu0 0.0
      %1542 = vmatpush2.msra.mxu0 0.0
      %1543 = vmatprep.subr.mxu0 0.0
      %1544 = vmatpush2.msra.mxu0 0.0
      %1545 = vmatprep.subr.mxu0 0.0
      %1546 = vmatpush2.msra.mxu0 0.0
      %1547 = vmatprep.subr.mxu0 0.0
      %1548 = vmatpush2.msra.mxu0 0.0
      %1549 = vmatprep.mubr.f32.mxu0 0.0
      %1550 = vmatmul.mubr.f32.gmra.mxu0 %v1481
      %v1551 = vpop.f32.mrf.mxu0
      %v1552 = vadd.f32 0.0, %v1551
      %v1553 = vpop.f32.mrf.mxu0
      %1554 = vmatprep.mubr.f32.mxu0 0.0
      %1555 = vmatmul.mubr.f32.gmra.mxu0 %v1483
      %v1556 = vpop.f32.mrf.mxu0
      %v1557 = vadd.f32 0.0, %v1556
      %v1558 = vpop.f32.mrf.mxu0
      %1559 = vdwg.mxu0
      %1560 = vmatprep.subr.mxu0 0.0
      %1561 = vmatpush1.msra.mxu0 0.0
      %1562 = vmatprep.subr.mxu0 0.0
      %1563 = vmatpush1.msra.mxu0 0.0
      %1564 = vmatprep.subr.mxu0 0.0
      %1565 = vmatpush1.msra.mxu0 0.0
      %1566 = vmatprep.subr.mxu0 0.0
      %1567 = vmatpush1.msra.mxu0 0.0
      %1568 = vmatprep.subr.mxu0 0.0
      %1569 = vmatpush1.msra.mxu0 0.0
      %1570 = vmatprep.subr.mxu0 0.0
      %1571 = vmatpush1.msra.mxu0 0.0
      %1572 = vmatprep.subr.mxu0 0.0
      %1573 = vmatpush1.msra.mxu0 0.0
      %1574 = vmatprep.subr.mxu0 0.0
      %1575 = vmatpush1.msra.mxu0 0.0
      %1576 = vmatprep.subr.mxu0 0.0
      %1577 = vmatpush1.msra.mxu0 0.0
      %1578 = vmatprep.subr.mxu0 0.0
      %1579 = vmatpush1.msra.mxu0 0.0
      %1580 = vmatprep.subr.mxu0 0.0
      %1581 = vmatpush1.msra.mxu0 0.0
      %1582 = vmatprep.subr.mxu0 0.0
      %1583 = vmatpush1.msra.mxu0 0.0
      %1584 = vmatprep.subr.mxu0 0.0
      %1585 = vmatpush1.msra.mxu0 0.0
      %1586 = vmatprep.subr.mxu0 0.0
      %1587 = vmatpush1.msra.mxu0 0.0
      %1588 = vmatprep.subr.mxu0 0.0
      %1589 = vmatpush1.msra.mxu0 0.0
      %1590 = vmatprep.subr.mxu0 0.0
      %1591 = vmatpush1.msra.mxu0 %v422
      %1592 = vmatprep.subr.mxu0 0.0
      %1593 = vmatpush2.msra.mxu0 0.0
      %1594 = vmatprep.subr.mxu0 0.0
      %1595 = vmatpush2.msra.mxu0 0.0
      %1596 = vmatprep.subr.mxu0 0.0
      %1597 = vmatpush2.msra.mxu0 0.0
      %1598 = vmatprep.subr.mxu0 0.0
      %1599 = vmatpush2.msra.mxu0 0.0
      %1600 = vmatprep.subr.mxu0 0.0
      %1601 = vmatpush2.msra.mxu0 0.0
      %1602 = vmatprep.subr.mxu0 0.0
      %1603 = vmatpush2.msra.mxu0 0.0
      %1604 = vmatprep.subr.mxu0 0.0
      %1605 = vmatpush2.msra.mxu0 0.0
      %1606 = vmatprep.subr.mxu0 0.0
      %1607 = vmatpush2.msra.mxu0 0.0
      %1608 = vmatprep.subr.mxu0 0.0
      %1609 = vmatpush2.msra.mxu0 0.0
      %1610 = vmatprep.subr.mxu0 0.0
      %1611 = vmatpush2.msra.mxu0 0.0
      %1612 = vmatprep.subr.mxu0 0.0
      %1613 = vmatpush2.msra.mxu0 0.0
      %1614 = vmatprep.subr.mxu0 0.0
      %1615 = vmatpush2.msra.mxu0 0.0
      %1616 = vmatprep.subr.mxu0 0.0
      %1617 = vmatpush2.msra.mxu0 0.0
      %1618 = vmatprep.subr.mxu0 0.0
      %1619 = vmatpush2.msra.mxu0 0.0
      %1620 = vmatprep.subr.mxu0 0.0
      %1621 = vmatpush2.msra.mxu0 0.0
      %1622 = vmatprep.subr.mxu0 0.0
      %1623 = vmatpush2.msra.mxu0 0.0
      %1624 = vmatprep.mubr.f32.mxu0 0.0
      %1625 = vmatmul.mubr.f32.gmra.mxu0 %v1481
      %v1626 = vpop.f32.mrf.mxu0
      %v1627 = vadd.f32 0.0, %v1626
      %v1628 = vpop.f32.mrf.mxu0
      %1629 = vmatprep.mubr.f32.mxu0 0.0
      %1630 = vmatmul.mubr.f32.gmra.mxu0 %v1483
      %v1631 = vpop.f32.mrf.mxu0
      %v1632 = vadd.f32 0.0, %v1631
      %v1633 = vpop.f32.mrf.mxu0
      %1634 = vdwg.mxu0
      %v1636 = vrot.slane %v1627, 4
      %v1638 = vadd.f32 %v1552, %v1636
      %1640 = vrot.lane.b32.xlu0 %v1638, 64
      %v1641 = vpop.permute.xlu0 %1640
      %1643 = vst.msk [vmem:[#allocation2 + $0x4] sm:$0xf] %vm939, %v1641
      %v1645 = vrot.slane %v1632, 4
      %v1647 = vadd.f32 %v1557, %v1645
      %1649 = vrot.lane.b32.xlu0 %v1647, 80
      %v1650 = vpop.permute.xlu0 %1649
      %1652 = vst.msk [vmem:[#allocation2 + $0x4] sm:$0xf] %vm949, %v1650
      %1653 = vrot.lane.b32.xlu0 %v412, 72
      %v1654 = vpop.permute.xlu0 %1653
      %1655 = vrot.lane.b32.xlu0 %v417, 72
      %v1656 = vpop.permute.xlu0 %1655
      %v1657 = vsel %vm338, %v1654, 0
      %v1659 = vsel %vm338, %v1656, 0
      %1661 = vmatprep.subr.mxu0 0.0
      %1662 = vmatpush1.msra.mxu0 0.0
      %1663 = vmatprep.subr.mxu0 0.0
      %1664 = vmatpush1.msra.mxu0 0.0
      %1665 = vmatprep.subr.mxu0 0.0
      %1666 = vmatpush1.msra.mxu0 0.0
      %1667 = vmatprep.subr.mxu0 0.0
      %1668 = vmatpush1.msra.mxu0 0.0
      %1669 = vmatprep.subr.mxu0 0.0
      %1670 = vmatpush1.msra.mxu0 0.0
      %1671 = vmatprep.subr.mxu0 0.0
      %1672 = vmatpush1.msra.mxu0 0.0
      %1673 = vmatprep.subr.mxu0 0.0
      %1674 = vmatpush1.msra.mxu0 0.0
      %1675 = vmatprep.subr.mxu0 0.0
      %1676 = vmatpush1.msra.mxu0 0.0
      %1677 = vmatprep.subr.mxu0 0.0
      %1678 = vmatpush1.msra.mxu0 0.0
      %1679 = vmatprep.subr.mxu0 0.0
      %1680 = vmatpush1.msra.mxu0 0.0
      %1681 = vmatprep.subr.mxu0 0.0
      %1682 = vmatpush1.msra.mxu0 0.0
      %1683 = vmatprep.subr.mxu0 0.0
      %1684 = vmatpush1.msra.mxu0 0.0
      %1685 = vmatprep.subr.mxu0 0.0
      %1686 = vmatpush1.msra.mxu0 0.0
      %1687 = vmatprep.subr.mxu0 0.0
      %1688 = vmatpush1.msra.mxu0 0.0
      %1689 = vmatprep.subr.mxu0 0.0
      %1690 = vmatpush1.msra.mxu0 0.0
      %1691 = vmatprep.subr.mxu0 0.0
      %1692 = vmatpush1.msra.mxu0 %v420
      %1693 = vmatprep.subr.mxu0 0.0
      %1694 = vmatpush2.msra.mxu0 0.0
      %1695 = vmatprep.subr.mxu0 0.0
      %1696 = vmatpush2.msra.mxu0 0.0
      %1697 = vmatprep.subr.mxu0 0.0
      %1698 = vmatpush2.msra.mxu0 0.0
      %1699 = vmatprep.subr.mxu0 0.0
      %1700 = vmatpush2.msra.mxu0 0.0
      %1701 = vmatprep.subr.mxu0 0.0
      %1702 = vmatpush2.msra.mxu0 0.0
      %1703 = vmatprep.subr.mxu0 0.0
      %1704 = vmatpush2.msra.mxu0 0.0
      %1705 = vmatprep.subr.mxu0 0.0
      %1706 = vmatpush2.msra.mxu0 0.0
      %1707 = vmatprep.subr.mxu0 0.0
      %1708 = vmatpush2.msra.mxu0 0.0
      %1709 = vmatprep.subr.mxu0 0.0
      %1710 = vmatpush2.msra.mxu0 0.0
      %1711 = vmatprep.subr.mxu0 0.0
      %1712 = vmatpush2.msra.mxu0 0.0
      %1713 = vmatprep.subr.mxu0 0.0
      %1714 = vmatpush2.msra.mxu0 0.0
      %1715 = vmatprep.subr.mxu0 0.0
      %1716 = vmatpush2.msra.mxu0 0.0
      %1717 = vmatprep.subr.mxu0 0.0
      %1718 = vmatpush2.msra.mxu0 0.0
      %1719 = vmatprep.subr.mxu0 0.0
      %1720 = vmatpush2.msra.mxu0 0.0
      %1721 = vmatprep.subr.mxu0 0.0
      %1722 = vmatpush2.msra.mxu0 0.0
      %1723 = vmatprep.subr.mxu0 0.0
      %1724 = vmatpush2.msra.mxu0 0.0
      %1725 = vmatprep.mubr.f32.mxu0 0.0
      %1726 = vmatmul.mubr.f32.gmra.mxu0 %v1657
      %v1727 = vpop.f32.mrf.mxu0
      %v1728 = vadd.f32 0.0, %v1727
      %v1729 = vpop.f32.mrf.mxu0
      %1730 = vmatprep.mubr.f32.mxu0 0.0
      %1731 = vmatmul.mubr.f32.gmra.mxu0 %v1659
      %v1732 = vpop.f32.mrf.mxu0
      %v1733 = vadd.f32 0.0, %v1732
      %v1734 = vpop.f32.mrf.mxu0
      %1735 = vdwg.mxu0
      %1736 = vmatprep.subr.mxu0 0.0
      %1737 = vmatpush1.msra.mxu0 0.0
      %1738 = vmatprep.subr.mxu0 0.0
      %1739 = vmatpush1.msra.mxu0 0.0
      %1740 = vmatprep.subr.mxu0 0.0
      %1741 = vmatpush1.msra.mxu0 0.0
      %1742 = vmatprep.subr.mxu0 0.0
      %1743 = vmatpush1.msra.mxu0 0.0
      %1744 = vmatprep.subr.mxu0 0.0
      %1745 = vmatpush1.msra.mxu0 0.0
      %1746 = vmatprep.subr.mxu0 0.0
      %1747 = vmatpush1.msra.mxu0 0.0
      %1748 = vmatprep.subr.mxu0 0.0
      %1749 = vmatpush1.msra.mxu0 0.0
      %1750 = vmatprep.subr.mxu0 0.0
      %1751 = vmatpush1.msra.mxu0 0.0
      %1752 = vmatprep.subr.mxu0 0.0
      %1753 = vmatpush1.msra.mxu0 0.0
      %1754 = vmatprep.subr.mxu0 0.0
      %1755 = vmatpush1.msra.mxu0 0.0
      %1756 = vmatprep.subr.mxu0 0.0
      %1757 = vmatpush1.msra.mxu0 0.0
      %1758 = vmatprep.subr.mxu0 0.0
      %1759 = vmatpush1.msra.mxu0 0.0
      %1760 = vmatprep.subr.mxu0 0.0
      %1761 = vmatpush1.msra.mxu0 0.0
      %1762 = vmatprep.subr.mxu0 0.0
      %1763 = vmatpush1.msra.mxu0 0.0
      %1764 = vmatprep.subr.mxu0 0.0
      %1765 = vmatpush1.msra.mxu0 0.0
      %1766 = vmatprep.subr.mxu0 0.0
      %1767 = vmatpush1.msra.mxu0 %v422
      %1768 = vmatprep.subr.mxu0 0.0
      %1769 = vmatpush2.msra.mxu0 0.0
      %1770 = vmatprep.subr.mxu0 0.0
      %1771 = vmatpush2.msra.mxu0 0.0
      %1772 = vmatprep.subr.mxu0 0.0
      %1773 = vmatpush2.msra.mxu0 0.0
      %1774 = vmatprep.subr.mxu0 0.0
      %1775 = vmatpush2.msra.mxu0 0.0
      %1776 = vmatprep.subr.mxu0 0.0
      %1777 = vmatpush2.msra.mxu0 0.0
      %1778 = vmatprep.subr.mxu0 0.0
      %1779 = vmatpush2.msra.mxu0 0.0
      %1780 = vmatprep.subr.mxu0 0.0
      %1781 = vmatpush2.msra.mxu0 0.0
      %1782 = vmatprep.subr.mxu0 0.0
      %1783 = vmatpush2.msra.mxu0 0.0
      %1784 = vmatprep.subr.mxu0 0.0
      %1785 = vmatpush2.msra.mxu0 0.0
      %1786 = vmatprep.subr.mxu0 0.0
      %1787 = vmatpush2.msra.mxu0 0.0
      %1788 = vmatprep.subr.mxu0 0.0
      %1789 = vmatpush2.msra.mxu0 0.0
      %1790 = vmatprep.subr.mxu0 0.0
      %1791 = vmatpush2.msra.mxu0 0.0
      %1792 = vmatprep.subr.mxu0 0.0
      %1793 = vmatpush2.msra.mxu0 0.0
      %1794 = vmatprep.subr.mxu0 0.0
      %1795 = vmatpush2.msra.mxu0 0.0
      %1796 = vmatprep.subr.mxu0 0.0
      %1797 = vmatpush2.msra.mxu0 0.0
      %1798 = vmatprep.subr.mxu0 0.0
      %1799 = vmatpush2.msra.mxu0 0.0
      %1800 = vmatprep.mubr.f32.mxu0 0.0
      %1801 = vmatmul.mubr.f32.gmra.mxu0 %v1657
      %v1802 = vpop.f32.mrf.mxu0
      %v1803 = vadd.f32 0.0, %v1802
      %v1804 = vpop.f32.mrf.mxu0
      %1805 = vmatprep.mubr.f32.mxu0 0.0
      %1806 = vmatmul.mubr.f32.gmra.mxu0 %v1659
      %v1807 = vpop.f32.mrf.mxu0
      %v1808 = vadd.f32 0.0, %v1807
      %v1809 = vpop.f32.mrf.mxu0
      %1810 = vdwg.mxu0
      %v1812 = vrot.slane %v1803, 4
      %v1814 = vadd.f32 %v1728, %v1812
      %1816 = vrot.lane.b32.xlu0 %v1814, 96
      %v1817 = vpop.permute.xlu0 %1816
      %1819 = vst.msk [vmem:[#allocation2 + $0x4] sm:$0xf] %vm1117, %v1817
      %v1821 = vrot.slane %v1808, 4
      %v1823 = vadd.f32 %v1733, %v1821
      %1825 = vrot.lane.b32.xlu0 %v1823, 112
      %v1826 = vpop.permute.xlu0 %1825
      %1828 = vst.msk [vmem:[#allocation2 + $0x4] sm:$0xf] %vm1127, %v1826
      %v1829 = vld [vmem:[%s7] ss:$2 sm:$0x3]
      %s1830 = scalar_lea.vmem %s7, 1
      %v1831 = vld [vmem:[%s1830] ss:$2 sm:$0x3]
      %v1832 = vld [vmem:[#allocation2] sm:$0xff]
      %v1833 = vld [vmem:[%s317] sm:$0xff]
      %v1835 = vcombine.high %v1832, %v1832
      %1836 = vrot.lane.b32.xlu0 %v1832, 17
      %v1837 = vpop.permute.xlu0 %1836
      %1838 = vrot.lane.b32.xlu0 %v1835, 17
      %v1839 = vpop.permute.xlu0 %1838
      %vm1840 = vcmask 138240
      %v1841 = vsel %vm1840, %v1837, %v1839
      %v1845 = vsel %vm1840, 0.0, %v1837
      %v1846 = vsel %vm1840, %v1839, 0.0
      %v1848 = vlaneseq
      %v1849 = vshrl.u32 %v1848, 7
      %v1850 = vsub.s32 0, %v1849
      %v1851 = vrot.slane %v1829, %v1850
      %v1852 = vlaneseq
      %v1853 = vshrl.u32 %v1852, 7
      %v1854 = vsub.s32 1, %v1853
      %v1855 = vrot.slane %v1829, %v1854
      %v1858 = vmul.f32 %v1845, %v1851
      %v1859 = vmul.f32 %v1841, %v1855
      %v1860 = vld [vmem:[%s4] sm:$0xf]
      %1862 = vrot.lane.b32.xlu0 %v1860, 120
      %v1863 = vpop.permute.xlu0 %1862
      %1866 = vrot.lane.b32.xlu0 %v1845, 127
      %v1867 = vpop.permute.xlu0 %1866
      %1868 = vrot.lane.b32.xlu0 %v1841, 127
      %v1869 = vpop.permute.xlu0 %1868
      %1870 = vrot.lane.b32.xlu0 %v1846, 127
      %v1871 = vpop.permute.xlu0 %1870
      %vm1872 = vcmask 1039360
      %v1873 = vsel %vm1872, %v1867, %v1869
      %v1874 = vsel %vm1872, %v1869, %v1871
      %vm1875 = vcmask 31744
      %v1876 = vsel %vm1875, %v1863, 0
      %vm1878 = vcmask 1043456
      %v1879 = vsel %vm1878, %v1873, 0
      %v1881 = vsel %vm1878, %v1874, 0
      %1883 = vmatprep.subr.mxu0 0.0
      %1884 = vmatpush1.msra.mxu0 0.0
      %1885 = vmatprep.subr.mxu0 0.0
      %1886 = vmatpush1.msra.mxu0 0.0
      %1887 = vmatprep.subr.mxu0 0.0
      %1888 = vmatpush1.msra.mxu0 0.0
      %1889 = vmatprep.subr.mxu0 0.0
      %1890 = vmatpush1.msra.mxu0 0.0
      %1891 = vmatprep.subr.mxu0 0.0
      %1892 = vmatpush1.msra.mxu0 0.0
      %1893 = vmatprep.subr.mxu0 0.0
      %1894 = vmatpush1.msra.mxu0 0.0
      %1895 = vmatprep.subr.mxu0 0.0
      %1896 = vmatpush1.msra.mxu0 0.0
      %1897 = vmatprep.subr.mxu0 0.0
      %1898 = vmatpush1.msra.mxu0 0.0
      %1899 = vmatprep.subr.mxu0 0.0
      %1900 = vmatpush1.msra.mxu0 0.0
      %1901 = vmatprep.subr.mxu0 0.0
      %1902 = vmatpush1.msra.mxu0 0.0
      %1903 = vmatprep.subr.mxu0 0.0
      %1904 = vmatpush1.msra.mxu0 0.0
      %1905 = vmatprep.subr.mxu0 0.0
      %1906 = vmatpush1.msra.mxu0 0.0
      %1907 = vmatprep.subr.mxu0 0.0
      %1908 = vmatpush1.msra.mxu0 0.0
      %1909 = vmatprep.subr.mxu0 0.0
      %1910 = vmatpush1.msra.mxu0 0.0
      %1911 = vmatprep.subr.mxu0 0.0
      %1912 = vmatpush1.msra.mxu0 0.0
      %1913 = vmatprep.subr.mxu0 %v1881
      %1914 = vmatpush1.msra.mxu0 %v1879
      %1915 = vmatprep.subr.mxu0 0.0
      %1916 = vmatpush2.msra.mxu0 0.0
      %1917 = vmatprep.subr.mxu0 0.0
      %1918 = vmatpush2.msra.mxu0 0.0
      %1919 = vmatprep.subr.mxu0 0.0
      %1920 = vmatpush2.msra.mxu0 0.0
      %1921 = vmatprep.subr.mxu0 0.0
      %1922 = vmatpush2.msra.mxu0 0.0
      %1923 = vmatprep.subr.mxu0 0.0
      %1924 = vmatpush2.msra.mxu0 0.0
      %1925 = vmatprep.subr.mxu0 0.0
      %1926 = vmatpush2.msra.mxu0 0.0
      %1927 = vmatprep.subr.mxu0 0.0
      %1928 = vmatpush2.msra.mxu0 0.0
      %1929 = vmatprep.subr.mxu0 0.0
      %1930 = vmatpush2.msra.mxu0 0.0
      %1931 = vmatprep.subr.mxu0 0.0
      %1932 = vmatpush2.msra.mxu0 0.0
      %1933 = vmatprep.subr.mxu0 0.0
      %1934 = vmatpush2.msra.mxu0 0.0
      %1935 = vmatprep.subr.mxu0 0.0
      %1936 = vmatpush2.msra.mxu0 0.0
      %1937 = vmatprep.subr.mxu0 0.0
      %1938 = vmatpush2.msra.mxu0 0.0
      %1939 = vmatprep.subr.mxu0 0.0
      %1940 = vmatpush2.msra.mxu0 0.0
      %1941 = vmatprep.subr.mxu0 0.0
      %1942 = vmatpush2.msra.mxu0 0.0
      %1943 = vmatprep.subr.mxu0 0.0
      %1944 = vmatpush2.msra.mxu0 0.0
      %1945 = vmatprep.subr.mxu0 0.0
      %1946 = vmatpush2.msra.mxu0 0.0
      %1947 = vmatprep.mubr.f32.mxu0 0.0
      %1948 = vmatmul.mubr.f32.gmra.mxu0 %v1876
      %v1949 = vpop.f32.mrf.mxu0
      %v1950 = vadd.f32 0.0, %v1949
      %v1951 = vpop.f32.mrf.mxu0
      %v1952 = vadd.f32 0.0, %v1951
      %1953 = vdwg.mxu0
      %v1954 = vsel %vm1875, %v1860, 0
      %v1957 = vsel %vm1878, %v1858, 0
      %v1960 = vsel %vm1878, %v1859, 0
      %1962 = vmatprep.subr.mxu0 0.0
      %1963 = vmatpush1.msra.mxu0 0.0
      %1964 = vmatprep.subr.mxu0 0.0
      %1965 = vmatpush1.msra.mxu0 0.0
      %1966 = vmatprep.subr.mxu0 0.0
      %1967 = vmatpush1.msra.mxu0 0.0
      %1968 = vmatprep.subr.mxu0 0.0
      %1969 = vmatpush1.msra.mxu0 0.0
      %1970 = vmatprep.subr.mxu0 0.0
      %1971 = vmatpush1.msra.mxu0 0.0
      %1972 = vmatprep.subr.mxu0 0.0
      %1973 = vmatpush1.msra.mxu0 0.0
      %1974 = vmatprep.subr.mxu0 0.0
      %1975 = vmatpush1.msra.mxu0 0.0
      %1976 = vmatprep.subr.mxu0 0.0
      %1977 = vmatpush1.msra.mxu0 0.0
      %1978 = vmatprep.subr.mxu0 0.0
      %1979 = vmatpush1.msra.mxu0 0.0
      %1980 = vmatprep.subr.mxu0 0.0
      %1981 = vmatpush1.msra.mxu0 0.0
      %1982 = vmatprep.subr.mxu0 0.0
      %1983 = vmatpush1.msra.mxu0 0.0
      %1984 = vmatprep.subr.mxu0 0.0
      %1985 = vmatpush1.msra.mxu0 0.0
      %1986 = vmatprep.subr.mxu0 0.0
      %1987 = vmatpush1.msra.mxu0 0.0
      %1988 = vmatprep.subr.mxu0 0.0
      %1989 = vmatpush1.msra.mxu0 0.0
      %1990 = vmatprep.subr.mxu0 0.0
      %1991 = vmatpush1.msra.mxu0 0.0
      %1992 = vmatprep.subr.mxu0 %v1960
      %1993 = vmatpush1.msra.mxu0 %v1957
      %1994 = vmatprep.subr.mxu0 0.0
      %1995 = vmatpush2.msra.mxu0 0.0
      %1996 = vmatprep.subr.mxu0 0.0
      %1997 = vmatpush2.msra.mxu0 0.0
      %1998 = vmatprep.subr.mxu0 0.0
      %1999 = vmatpush2.msra.mxu0 0.0
      %2000 = vmatprep.subr.mxu0 0.0
      %2001 = vmatpush2.msra.mxu0 0.0
      %2002 = vmatprep.subr.mxu0 0.0
      %2003 = vmatpush2.msra.mxu0 0.0
      %2004 = vmatprep.subr.mxu0 0.0
      %2005 = vmatpush2.msra.mxu0 0.0
      %2006 = vmatprep.subr.mxu0 0.0
      %2007 = vmatpush2.msra.mxu0 0.0
      %2008 = vmatprep.subr.mxu0 0.0
      %2009 = vmatpush2.msra.mxu0 0.0
      %2010 = vmatprep.subr.mxu0 0.0
      %2011 = vmatpush2.msra.mxu0 0.0
      %2012 = vmatprep.subr.mxu0 0.0
      %2013 = vmatpush2.msra.mxu0 0.0
      %2014 = vmatprep.subr.mxu0 0.0
      %2015 = vmatpush2.msra.mxu0 0.0
      %2016 = vmatprep.subr.mxu0 0.0
      %2017 = vmatpush2.msra.mxu0 0.0
      %2018 = vmatprep.subr.mxu0 0.0
      %2019 = vmatpush2.msra.mxu0 0.0
      %2020 = vmatprep.subr.mxu0 0.0
      %2021 = vmatpush2.msra.mxu0 0.0
      %2022 = vmatprep.subr.mxu0 0.0
      %2023 = vmatpush2.msra.mxu0 0.0
      %2024 = vmatprep.subr.mxu0 0.0
      %2025 = vmatpush2.msra.mxu0 0.0
      %2026 = vmatprep.mubr.f32.mxu0 0.0
      %2027 = vmatmul.mubr.f32.gmra.mxu0 %v1954
      %v2028 = vpop.f32.mrf.mxu0
      %v2029 = vadd.f32 %v1950, %v2028
      %v2030 = vpop.f32.mrf.mxu0
      %v2031 = vadd.f32 %v1952, %v2030
      %2032 = vdwg.mxu0
      %v2034 = vlaneseq
      %v2035 = vshrl.u32 %v2034, 7
      %v2036 = vsub.s32 0, %v2035
      %v2037 = vrot.slane %v1831, %v2036
      %v2038 = vlaneseq
      %v2039 = vshrl.u32 %v2038, 7
      %v2040 = vsub.s32 1, %v2039
      %v2041 = vrot.slane %v1831, %v2040
      %2042 = vrot.lane.b32.xlu0 %v2037, 2
      %v2043 = vpop.permute.xlu0 %2042
      %2044 = vrot.lane.b32.xlu0 %v2041, 2
      %v2045 = vpop.permute.xlu0 %2044
      %vm2046 = vcmask 15360
      %v2047 = vsel %vm2046, %v2043, %v2045
      %v2051 = vmul.f32 %v1845, %v2043
      %v2052 = vmul.f32 %v1841, %v2047
      %v2053 = vmul.f32 %v1846, %v2045
      %2054 = vrot.lane.b32.xlu0 %v1860, 112
      %v2055 = vpop.permute.xlu0 %2054
      %2059 = vrot.lane.b32.xlu0 %v2051, 126
      %v2060 = vpop.permute.xlu0 %2059
      %2061 = vrot.lane.b32.xlu0 %v2052, 126
      %v2062 = vpop.permute.xlu0 %2061
      %2063 = vrot.lane.b32.xlu0 %v2053, 126
      %v2064 = vpop.permute.xlu0 %2063
      %vm2065 = vcmask 1031168
      %v2066 = vsel %vm2065, %v2060, %v2062
      %v2067 = vsel %vm2065, %v2062, %v2064
      %v2068 = vsel %vm1875, %v2055, 0
      %v2070 = vsel %vm1878, %v2066, 0
      %v2072 = vsel %vm1878, %v2067, 0
      %2074 = vmatprep.subr.mxu0 0.0
      %2075 = vmatpush1.msra.mxu0 0.0
      %2076 = vmatprep.subr.mxu0 0.0
      %2077 = vmatpush1.msra.mxu0 0.0
      %2078 = vmatprep.subr.mxu0 0.0
      %2079 = vmatpush1.msra.mxu0 0.0
      %2080 = vmatprep.subr.mxu0 0.0
      %2081 = vmatpush1.msra.mxu0 0.0
      %2082 = vmatprep.subr.mxu0 0.0
      %2083 = vmatpush1.msra.mxu0 0.0
      %2084 = vmatprep.subr.mxu0 0.0
      %2085 = vmatpush1.msra.mxu0 0.0
      %2086 = vmatprep.subr.mxu0 0.0
      %2087 = vmatpush1.msra.mxu0 0.0
      %2088 = vmatprep.subr.mxu0 0.0
      %2089 = vmatpush1.msra.mxu0 0.0
      %2090 = vmatprep.subr.mxu0 0.0
      %2091 = vmatpush1.msra.mxu0 0.0
      %2092 = vmatprep.subr.mxu0 0.0
      %2093 = vmatpush1.msra.mxu0 0.0
      %2094 = vmatprep.subr.mxu0 0.0
      %2095 = vmatpush1.msra.mxu0 0.0
      %2096 = vmatprep.subr.mxu0 0.0
      %2097 = vmatpush1.msra.mxu0 0.0
      %2098 = vmatprep.subr.mxu0 0.0
      %2099 = vmatpush1.msra.mxu0 0.0
      %2100 = vmatprep.subr.mxu0 0.0
      %2101 = vmatpush1.msra.mxu0 0.0
      %2102 = vmatprep.subr.mxu0 0.0
      %2103 = vmatpush1.msra.mxu0 0.0
      %2104 = vmatprep.subr.mxu0 %v2072
      %2105 = vmatpush1.msra.mxu0 %v2070
      %2106 = vmatprep.subr.mxu0 0.0
      %2107 = vmatpush2.msra.mxu0 0.0
      %2108 = vmatprep.subr.mxu0 0.0
      %2109 = vmatpush2.msra.mxu0 0.0
      %2110 = vmatprep.subr.mxu0 0.0
      %2111 = vmatpush2.msra.mxu0 0.0
      %2112 = vmatprep.subr.mxu0 0.0
      %2113 = vmatpush2.msra.mxu0 0.0
      %2114 = vmatprep.subr.mxu0 0.0
      %2115 = vmatpush2.msra.mxu0 0.0
      %2116 = vmatprep.subr.mxu0 0.0
      %2117 = vmatpush2.msra.mxu0 0.0
      %2118 = vmatprep.subr.mxu0 0.0
      %2119 = vmatpush2.msra.mxu0 0.0
      %2120 = vmatprep.subr.mxu0 0.0
      %2121 = vmatpush2.msra.mxu0 0.0
      %2122 = vmatprep.subr.mxu0 0.0
      %2123 = vmatpush2.msra.mxu0 0.0
      %2124 = vmatprep.subr.mxu0 0.0
      %2125 = vmatpush2.msra.mxu0 0.0
      %2126 = vmatprep.subr.mxu0 0.0
      %2127 = vmatpush2.msra.mxu0 0.0
      %2128 = vmatprep.subr.mxu0 0.0
      %2129 = vmatpush2.msra.mxu0 0.0
      %2130 = vmatprep.subr.mxu0 0.0
      %2131 = vmatpush2.msra.mxu0 0.0
      %2132 = vmatprep.subr.mxu0 0.0
      %2133 = vmatpush2.msra.mxu0 0.0
      %2134 = vmatprep.subr.mxu0 0.0
      %2135 = vmatpush2.msra.mxu0 0.0
      %2136 = vmatprep.subr.mxu0 0.0
      %2137 = vmatpush2.msra.mxu0 0.0
      %2138 = vmatprep.mubr.f32.mxu0 0.0
      %2139 = vmatmul.mubr.f32.gmra.mxu0 %v2068
      %v2140 = vpop.f32.mrf.mxu0
      %v2141 = vadd.f32 0.0, %v2140
      %v2142 = vpop.f32.mrf.mxu0
      %v2143 = vadd.f32 0.0, %v2142
      %2144 = vdwg.mxu0
      %v2145 = vadd.f32 %v2029, %v2141
      %v2146 = vadd.f32 %v2031, %v2143
      %2147 = vrot.lane.b32.xlu0 %v1851, 16
      %v2148 = vpop.permute.xlu0 %2147
      %2149 = vrot.lane.b32.xlu0 %v1855, 16
      %v2150 = vpop.permute.xlu0 %2149
      %vm2151 = vcmask 130048
      %v2152 = vsel %vm2151, %v2148, %v2150
      %v2156 = vmul.f32 %v1845, %v2148
      %v2157 = vmul.f32 %v1841, %v2152
      %v2158 = vmul.f32 %v1846, %v2150
      %2159 = vrot.lane.b32.xlu0 %v1860, 104
      %v2160 = vpop.permute.xlu0 %2159
      %2164 = vrot.lane.b32.xlu0 %v2156, 112
      %v2165 = vpop.permute.xlu0 %2164
      %2166 = vrot.lane.b32.xlu0 %v2157, 112
      %v2167 = vpop.permute.xlu0 %2166
      %2168 = vrot.lane.b32.xlu0 %v2158, 112
      %v2169 = vpop.permute.xlu0 %2168
      %vm2170 = vcmask 916480
      %v2171 = vsel %vm2170, %v2165, %v2167
      %v2172 = vsel %vm2170, %v2167, %v2169
      %v2173 = vsel %vm1875, %v2160, 0
      %v2175 = vsel %vm1878, %v2171, 0
      %v2177 = vsel %vm1878, %v2172, 0
      %2179 = vmatprep.subr.mxu0 0.0
      %2180 = vmatpush1.msra.mxu0 0.0
      %2181 = vmatprep.subr.mxu0 0.0
      %2182 = vmatpush1.msra.mxu0 0.0
      %2183 = vmatprep.subr.mxu0 0.0
      %2184 = vmatpush1.msra.mxu0 0.0
      %2185 = vmatprep.subr.mxu0 0.0
      %2186 = vmatpush1.msra.mxu0 0.0
      %2187 = vmatprep.subr.mxu0 0.0
      %2188 = vmatpush1.msra.mxu0 0.0
      %2189 = vmatprep.subr.mxu0 0.0
      %2190 = vmatpush1.msra.mxu0 0.0
      %2191 = vmatprep.subr.mxu0 0.0
      %2192 = vmatpush1.msra.mxu0 0.0
      %2193 = vmatprep.subr.mxu0 0.0
      %2194 = vmatpush1.msra.mxu0 0.0
      %2195 = vmatprep.subr.mxu0 0.0
      %2196 = vmatpush1.msra.mxu0 0.0
      %2197 = vmatprep.subr.mxu0 0.0
      %2198 = vmatpush1.msra.mxu0 0.0
      %2199 = vmatprep.subr.mxu0 0.0
      %2200 = vmatpush1.msra.mxu0 0.0
      %2201 = vmatprep.subr.mxu0 0.0
      %2202 = vmatpush1.msra.mxu0 0.0
      %2203 = vmatprep.subr.mxu0 0.0
      %2204 = vmatpush1.msra.mxu0 0.0
      %2205 = vmatprep.subr.mxu0 0.0
      %2206 = vmatpush1.msra.mxu0 0.0
      %2207 = vmatprep.subr.mxu0 0.0
      %2208 = vmatpush1.msra.mxu0 0.0
      %2209 = vmatprep.subr.mxu0 %v2177
      %2210 = vmatpush1.msra.mxu0 %v2175
      %2211 = vmatprep.subr.mxu0 0.0
      %2212 = vmatpush2.msra.mxu0 0.0
      %2213 = vmatprep.subr.mxu0 0.0
      %2214 = vmatpush2.msra.mxu0 0.0
      %2215 = vmatprep.subr.mxu0 0.0
      %2216 = vmatpush2.msra.mxu0 0.0
      %2217 = vmatprep.subr.mxu0 0.0
      %2218 = vmatpush2.msra.mxu0 0.0
      %2219 = vmatprep.subr.mxu0 0.0
      %2220 = vmatpush2.msra.mxu0 0.0
      %2221 = vmatprep.subr.mxu0 0.0
      %2222 = vmatpush2.msra.mxu0 0.0
      %2223 = vmatprep.subr.mxu0 0.0
      %2224 = vmatpush2.msra.mxu0 0.0
      %2225 = vmatprep.subr.mxu0 0.0
      %2226 = vmatpush2.msra.mxu0 0.0
      %2227 = vmatprep.subr.mxu0 0.0
      %2228 = vmatpush2.msra.mxu0 0.0
      %2229 = vmatprep.subr.mxu0 0.0
      %2230 = vmatpush2.msra.mxu0 0.0
      %2231 = vmatprep.subr.mxu0 0.0
      %2232 = vmatpush2.msra.mxu0 0.0
      %2233 = vmatprep.subr.mxu0 0.0
      %2234 = vmatpush2.msra.mxu0 0.0
      %2235 = vmatprep.subr.mxu0 0.0
      %2236 = vmatpush2.msra.mxu0 0.0
      %2237 = vmatprep.subr.mxu0 0.0
      %2238 = vmatpush2.msra.mxu0 0.0
      %2239 = vmatprep.subr.mxu0 0.0
      %2240 = vmatpush2.msra.mxu0 0.0
      %2241 = vmatprep.subr.mxu0 0.0
      %2242 = vmatpush2.msra.mxu0 0.0
      %2243 = vmatprep.mubr.f32.mxu0 0.0
      %2244 = vmatmul.mubr.f32.gmra.mxu0 %v2173
      %v2245 = vpop.f32.mrf.mxu0
      %v2246 = vadd.f32 0.0, %v2245
      %v2247 = vpop.f32.mrf.mxu0
      %v2248 = vadd.f32 0.0, %v2247
      %2249 = vdwg.mxu0
      %v2250 = vadd.f32 %v2145, %v2246
      %v2251 = vadd.f32 %v2146, %v2248
      %2252 = vrot.lane.b32.xlu0 %v1860, 96
      %v2253 = vpop.permute.xlu0 %2252
      %2254 = vrot.lane.b32.xlu0 %v1845, 111
      %v2255 = vpop.permute.xlu0 %2254
      %2256 = vrot.lane.b32.xlu0 %v1841, 111
      %v2257 = vpop.permute.xlu0 %2256
      %2258 = vrot.lane.b32.xlu0 %v1846, 111
      %v2259 = vpop.permute.xlu0 %2258
      %vm2260 = vcmask 908288
      %v2261 = vsel %vm2260, %v2255, %v2257
      %v2262 = vsel %vm2260, %v2257, %v2259
      %v2263 = vsel %vm1875, %v2253, 0
      %v2265 = vsel %vm1878, %v2261, 0
      %v2267 = vsel %vm1878, %v2262, 0
      %2269 = vmatprep.subr.mxu0 0.0
      %2270 = vmatpush1.msra.mxu0 0.0
      %2271 = vmatprep.subr.mxu0 0.0
      %2272 = vmatpush1.msra.mxu0 0.0
      %2273 = vmatprep.subr.mxu0 0.0
      %2274 = vmatpush1.msra.mxu0 0.0
      %2275 = vmatprep.subr.mxu0 0.0
      %2276 = vmatpush1.msra.mxu0 0.0
      %2277 = vmatprep.subr.mxu0 0.0
      %2278 = vmatpush1.msra.mxu0 0.0
      %2279 = vmatprep.subr.mxu0 0.0
      %2280 = vmatpush1.msra.mxu0 0.0
      %2281 = vmatprep.subr.mxu0 0.0
      %2282 = vmatpush1.msra.mxu0 0.0
      %2283 = vmatprep.subr.mxu0 0.0
      %2284 = vmatpush1.msra.mxu0 0.0
      %2285 = vmatprep.subr.mxu0 0.0
      %2286 = vmatpush1.msra.mxu0 0.0
      %2287 = vmatprep.subr.mxu0 0.0
      %2288 = vmatpush1.msra.mxu0 0.0
      %2289 = vmatprep.subr.mxu0 0.0
      %2290 = vmatpush1.msra.mxu0 0.0
      %2291 = vmatprep.subr.mxu0 0.0
      %2292 = vmatpush1.msra.mxu0 0.0
      %2293 = vmatprep.subr.mxu0 0.0
      %2294 = vmatpush1.msra.mxu0 0.0
      %2295 = vmatprep.subr.mxu0 0.0
      %2296 = vmatpush1.msra.mxu0 0.0
      %2297 = vmatprep.subr.mxu0 0.0
      %2298 = vmatpush1.msra.mxu0 0.0
      %2299 = vmatprep.subr.mxu0 %v2267
      %2300 = vmatpush1.msra.mxu0 %v2265
      %2301 = vmatprep.subr.mxu0 0.0
      %2302 = vmatpush2.msra.mxu0 0.0
      %2303 = vmatprep.subr.mxu0 0.0
      %2304 = vmatpush2.msra.mxu0 0.0
      %2305 = vmatprep.subr.mxu0 0.0
      %2306 = vmatpush2.msra.mxu0 0.0
      %2307 = vmatprep.subr.mxu0 0.0
      %2308 = vmatpush2.msra.mxu0 0.0
      %2309 = vmatprep.subr.mxu0 0.0
      %2310 = vmatpush2.msra.mxu0 0.0
      %2311 = vmatprep.subr.mxu0 0.0
      %2312 = vmatpush2.msra.mxu0 0.0
      %2313 = vmatprep.subr.mxu0 0.0
      %2314 = vmatpush2.msra.mxu0 0.0
      %2315 = vmatprep.subr.mxu0 0.0
      %2316 = vmatpush2.msra.mxu0 0.0
      %2317 = vmatprep.subr.mxu0 0.0
      %2318 = vmatpush2.msra.mxu0 0.0
      %2319 = vmatprep.subr.mxu0 0.0
      %2320 = vmatpush2.msra.mxu0 0.0
      %2321 = vmatprep.subr.mxu0 0.0
      %2322 = vmatpush2.msra.mxu0 0.0
      %2323 = vmatprep.subr.mxu0 0.0
      %2324 = vmatpush2.msra.mxu0 0.0
      %2325 = vmatprep.subr.mxu0 0.0
      %2326 = vmatpush2.msra.mxu0 0.0
      %2327 = vmatprep.subr.mxu0 0.0
      %2328 = vmatpush2.msra.mxu0 0.0
      %2329 = vmatprep.subr.mxu0 0.0
      %2330 = vmatpush2.msra.mxu0 0.0
      %2331 = vmatprep.subr.mxu0 0.0
      %2332 = vmatpush2.msra.mxu0 0.0
      %2333 = vmatprep.mubr.f32.mxu0 0.0
      %2334 = vmatmul.mubr.f32.gmra.mxu0 %v2263
      %v2335 = vpop.f32.mrf.mxu0
      %v2336 = vadd.f32 0.0, %v2335
      %v2337 = vpop.f32.mrf.mxu0
      %v2338 = vadd.f32 0.0, %v2337
      %2339 = vdwg.mxu0
      %v2340 = vadd.f32 %v2250, %v2336
      %v2341 = vadd.f32 %v2251, %v2338
      %2342 = vrot.lane.b32.xlu0 %v2037, 18
      %v2343 = vpop.permute.xlu0 %2342
      %2344 = vrot.lane.b32.xlu0 %v2041, 18
      %v2345 = vpop.permute.xlu0 %2344
      %vm2346 = vcmask 146432
      %v2347 = vsel %vm2346, %v2343, %v2345
      %v2351 = vmul.f32 %v1845, %v2343
      %v2352 = vmul.f32 %v1841, %v2347
      %v2353 = vmul.f32 %v1846, %v2345
      %2354 = vrot.lane.b32.xlu0 %v1860, 88
      %v2355 = vpop.permute.xlu0 %2354
      %2359 = vrot.lane.b32.xlu0 %v2351, 110
      %v2360 = vpop.permute.xlu0 %2359
      %2361 = vrot.lane.b32.xlu0 %v2352, 110
      %v2362 = vpop.permute.xlu0 %2361
      %2363 = vrot.lane.b32.xlu0 %v2353, 110
      %v2364 = vpop.permute.xlu0 %2363
      %vm2365 = vcmask 900096
      %v2366 = vsel %vm2365, %v2360, %v2362
      %v2367 = vsel %vm2365, %v2362, %v2364
      %v2368 = vsel %vm1875, %v2355, 0
      %v2370 = vsel %vm1878, %v2366, 0
      %v2372 = vsel %vm1878, %v2367, 0
      %2374 = vmatprep.subr.mxu0 0.0
      %2375 = vmatpush1.msra.mxu0 0.0
      %2376 = vmatprep.subr.mxu0 0.0
      %2377 = vmatpush1.msra.mxu0 0.0
      %2378 = vmatprep.subr.mxu0 0.0
      %2379 = vmatpush1.msra.mxu0 0.0
      %2380 = vmatprep.subr.mxu0 0.0
      %2381 = vmatpush1.msra.mxu0 0.0
      %2382 = vmatprep.subr.mxu0 0.0
      %2383 = vmatpush1.msra.mxu0 0.0
      %2384 = vmatprep.subr.mxu0 0.0
      %2385 = vmatpush1.msra.mxu0 0.0
      %2386 = vmatprep.subr.mxu0 0.0
      %2387 = vmatpush1.msra.mxu0 0.0
      %2388 = vmatprep.subr.mxu0 0.0
      %2389 = vmatpush1.msra.mxu0 0.0
      %2390 = vmatprep.subr.mxu0 0.0
      %2391 = vmatpush1.msra.mxu0 0.0
      %2392 = vmatprep.subr.mxu0 0.0
      %2393 = vmatpush1.msra.mxu0 0.0
      %2394 = vmatprep.subr.mxu0 0.0
      %2395 = vmatpush1.msra.mxu0 0.0
      %2396 = vmatprep.subr.mxu0 0.0
      %2397 = vmatpush1.msra.mxu0 0.0
      %2398 = vmatprep.subr.mxu0 0.0
      %2399 = vmatpush1.msra.mxu0 0.0
      %2400 = vmatprep.subr.mxu0 0.0
      %2401 = vmatpush1.msra.mxu0 0.0
      %2402 = vmatprep.subr.mxu0 0.0
      %2403 = vmatpush1.msra.mxu0 0.0
      %2404 = vmatprep.subr.mxu0 %v2372
      %2405 = vmatpush1.msra.mxu0 %v2370
      %2406 = vmatprep.subr.mxu0 0.0
      %2407 = vmatpush2.msra.mxu0 0.0
      %2408 = vmatprep.subr.mxu0 0.0
      %2409 = vmatpush2.msra.mxu0 0.0
      %2410 = vmatprep.subr.mxu0 0.0
      %2411 = vmatpush2.msra.mxu0 0.0
      %2412 = vmatprep.subr.mxu0 0.0
      %2413 = vmatpush2.msra.mxu0 0.0
      %2414 = vmatprep.subr.mxu0 0.0
      %2415 = vmatpush2.msra.mxu0 0.0
      %2416 = vmatprep.subr.mxu0 0.0
      %2417 = vmatpush2.msra.mxu0 0.0
      %2418 = vmatprep.subr.mxu0 0.0
      %2419 = vmatpush2.msra.mxu0 0.0
      %2420 = vmatprep.subr.mxu0 0.0
      %2421 = vmatpush2.msra.mxu0 0.0
      %2422 = vmatprep.subr.mxu0 0.0
      %2423 = vmatpush2.msra.mxu0 0.0
      %2424 = vmatprep.subr.mxu0 0.0
      %2425 = vmatpush2.msra.mxu0 0.0
      %2426 = vmatprep.subr.mxu0 0.0
      %2427 = vmatpush2.msra.mxu0 0.0
      %2428 = vmatprep.subr.mxu0 0.0
      %2429 = vmatpush2.msra.mxu0 0.0
      %2430 = vmatprep.subr.mxu0 0.0
      %2431 = vmatpush2.msra.mxu0 0.0
      %2432 = vmatprep.subr.mxu0 0.0
      %2433 = vmatpush2.msra.mxu0 0.0
      %2434 = vmatprep.subr.mxu0 0.0
      %2435 = vmatpush2.msra.mxu0 0.0
      %2436 = vmatprep.subr.mxu0 0.0
      %2437 = vmatpush2.msra.mxu0 0.0
      %2438 = vmatprep.mubr.f32.mxu0 0.0
      %2439 = vmatmul.mubr.f32.gmra.mxu0 %v2368
      %v2440 = vpop.f32.mrf.mxu0
      %v2441 = vadd.f32 0.0, %v2440
      %v2442 = vpop.f32.mrf.mxu0
      %v2443 = vadd.f32 0.0, %v2442
      %2444 = vdwg.mxu0
      %v2445 = vadd.f32 %v2340, %v2441
      %v2446 = vadd.f32 %v2341, %v2443
      %2447 = vrot.lane.b32.xlu0 %v1851, 32
      %v2448 = vpop.permute.xlu0 %2447
      %2449 = vrot.lane.b32.xlu0 %v1855, 32
      %v2450 = vpop.permute.xlu0 %2449
      %vm2451 = vcmask 261120
      %v2452 = vsel %vm2451, %v2448, %v2450
      %v2456 = vmul.f32 %v1845, %v2448
      %v2457 = vmul.f32 %v1841, %v2452
      %v2458 = vmul.f32 %v1846, %v2450
      %2459 = vrot.lane.b32.xlu0 %v1860, 80
      %v2460 = vpop.permute.xlu0 %2459
      %2464 = vrot.lane.b32.xlu0 %v2456, 96
      %v2465 = vpop.permute.xlu0 %2464
      %2466 = vrot.lane.b32.xlu0 %v2457, 96
      %v2467 = vpop.permute.xlu0 %2466
      %2468 = vrot.lane.b32.xlu0 %v2458, 96
      %v2469 = vpop.permute.xlu0 %2468
      %vm2470 = vcmask 785408
      %v2471 = vsel %vm2470, %v2465, %v2467
      %v2472 = vsel %vm2470, %v2467, %v2469
      %v2473 = vsel %vm1875, %v2460, 0
      %v2475 = vsel %vm1878, %v2471, 0
      %v2477 = vsel %vm1878, %v2472, 0
      %2479 = vmatprep.subr.mxu0 0.0
      %2480 = vmatpush1.msra.mxu0 0.0
      %2481 = vmatprep.subr.mxu0 0.0
      %2482 = vmatpush1.msra.mxu0 0.0
      %2483 = vmatprep.subr.mxu0 0.0
      %2484 = vmatpush1.msra.mxu0 0.0
      %2485 = vmatprep.subr.mxu0 0.0
      %2486 = vmatpush1.msra.mxu0 0.0
      %2487 = vmatprep.subr.mxu0 0.0
      %2488 = vmatpush1.msra.mxu0 0.0
      %2489 = vmatprep.subr.mxu0 0.0
      %2490 = vmatpush1.msra.mxu0 0.0
      %2491 = vmatprep.subr.mxu0 0.0
      %2492 = vmatpush1.msra.mxu0 0.0
      %2493 = vmatprep.subr.mxu0 0.0
      %2494 = vmatpush1.msra.mxu0 0.0
      %2495 = vmatprep.subr.mxu0 0.0
      %2496 = vmatpush1.msra.mxu0 0.0
      %2497 = vmatprep.subr.mxu0 0.0
      %2498 = vmatpush1.msra.mxu0 0.0
      %2499 = vmatprep.subr.mxu0 0.0
      %2500 = vmatpush1.msra.mxu0 0.0
      %2501 = vmatprep.subr.mxu0 0.0
      %2502 = vmatpush1.msra.mxu0 0.0
      %2503 = vmatprep.subr.mxu0 0.0
      %2504 = vmatpush1.msra.mxu0 0.0
      %2505 = vmatprep.subr.mxu0 0.0
      %2506 = vmatpush1.msra.mxu0 0.0
      %2507 = vmatprep.subr.mxu0 0.0
      %2508 = vmatpush1.msra.mxu0 0.0
      %2509 = vmatprep.subr.mxu0 %v2477
      %2510 = vmatpush1.msra.mxu0 %v2475
      %2511 = vmatprep.subr.mxu0 0.0
      %2512 = vmatpush2.msra.mxu0 0.0
      %2513 = vmatprep.subr.mxu0 0.0
      %2514 = vmatpush2.msra.mxu0 0.0
      %2515 = vmatprep.subr.mxu0 0.0
      %2516 = vmatpush2.msra.mxu0 0.0
      %2517 = vmatprep.subr.mxu0 0.0
      %2518 = vmatpush2.msra.mxu0 0.0
      %2519 = vmatprep.subr.mxu0 0.0
      %2520 = vmatpush2.msra.mxu0 0.0
      %2521 = vmatprep.subr.mxu0 0.0
      %2522 = vmatpush2.msra.mxu0 0.0
      %2523 = vmatprep.subr.mxu0 0.0
      %2524 = vmatpush2.msra.mxu0 0.0
      %2525 = vmatprep.subr.mxu0 0.0
      %2526 = vmatpush2.msra.mxu0 0.0
      %2527 = vmatprep.subr.mxu0 0.0
      %2528 = vmatpush2.msra.mxu0 0.0
      %2529 = vmatprep.subr.mxu0 0.0
      %2530 = vmatpush2.msra.mxu0 0.0
      %2531 = vmatprep.subr.mxu0 0.0
      %2532 = vmatpush2.msra.mxu0 0.0
      %2533 = vmatprep.subr.mxu0 0.0
      %2534 = vmatpush2.msra.mxu0 0.0
      %2535 = vmatprep.subr.mxu0 0.0
      %2536 = vmatpush2.msra.mxu0 0.0
      %2537 = vmatprep.subr.mxu0 0.0
      %2538 = vmatpush2.msra.mxu0 0.0
      %2539 = vmatprep.subr.mxu0 0.0
      %2540 = vmatpush2.msra.mxu0 0.0
      %2541 = vmatprep.subr.mxu0 0.0
      %2542 = vmatpush2.msra.mxu0 0.0
      %2543 = vmatprep.mubr.f32.mxu0 0.0
      %2544 = vmatmul.mubr.f32.gmra.mxu0 %v2473
      %v2545 = vpop.f32.mrf.mxu0
      %v2546 = vadd.f32 0.0, %v2545
      %v2547 = vpop.f32.mrf.mxu0
      %v2548 = vadd.f32 0.0, %v2547
      %2549 = vdwg.mxu0
      %v2550 = vadd.f32 %v2445, %v2546
      %v2551 = vadd.f32 %v2446, %v2548
      %2552 = vrot.lane.b32.xlu0 %v1860, 72
      %v2553 = vpop.permute.xlu0 %2552
      %2554 = vrot.lane.b32.xlu0 %v1845, 95
      %v2555 = vpop.permute.xlu0 %2554
      %2556 = vrot.lane.b32.xlu0 %v1841, 95
      %v2557 = vpop.permute.xlu0 %2556
      %2558 = vrot.lane.b32.xlu0 %v1846, 95
      %v2559 = vpop.permute.xlu0 %2558
      %vm2560 = vcmask 777216
      %v2561 = vsel %vm2560, %v2555, %v2557
      %v2562 = vsel %vm2560, %v2557, %v2559
      %v2563 = vsel %vm1875, %v2553, 0
      %v2565 = vsel %vm1878, %v2561, 0
      %v2567 = vsel %vm1878, %v2562, 0
      %2569 = vmatprep.subr.mxu0 0.0
      %2570 = vmatpush1.msra.mxu0 0.0
      %2571 = vmatprep.subr.mxu0 0.0
      %2572 = vmatpush1.msra.mxu0 0.0
      %2573 = vmatprep.subr.mxu0 0.0
      %2574 = vmatpush1.msra.mxu0 0.0
      %2575 = vmatprep.subr.mxu0 0.0
      %2576 = vmatpush1.msra.mxu0 0.0
      %2577 = vmatprep.subr.mxu0 0.0
      %2578 = vmatpush1.msra.mxu0 0.0
      %2579 = vmatprep.subr.mxu0 0.0
      %2580 = vmatpush1.msra.mxu0 0.0
      %2581 = vmatprep.subr.mxu0 0.0
      %2582 = vmatpush1.msra.mxu0 0.0
      %2583 = vmatprep.subr.mxu0 0.0
      %2584 = vmatpush1.msra.mxu0 0.0
      %2585 = vmatprep.subr.mxu0 0.0
      %2586 = vmatpush1.msra.mxu0 0.0
      %2587 = vmatprep.subr.mxu0 0.0
      %2588 = vmatpush1.msra.mxu0 0.0
      %2589 = vmatprep.subr.mxu0 0.0
      %2590 = vmatpush1.msra.mxu0 0.0
      %2591 = vmatprep.subr.mxu0 0.0
      %2592 = vmatpush1.msra.mxu0 0.0
      %2593 = vmatprep.subr.mxu0 0.0
      %2594 = vmatpush1.msra.mxu0 0.0
      %2595 = vmatprep.subr.mxu0 0.0
      %2596 = vmatpush1.msra.mxu0 0.0
      %2597 = vmatprep.subr.mxu0 0.0
      %2598 = vmatpush1.msra.mxu0 0.0
      %2599 = vmatprep.subr.mxu0 %v2567
      %2600 = vmatpush1.msra.mxu0 %v2565
      %2601 = vmatprep.subr.mxu0 0.0
      %2602 = vmatpush2.msra.mxu0 0.0
      %2603 = vmatprep.subr.mxu0 0.0
      %2604 = vmatpush2.msra.mxu0 0.0
      %2605 = vmatprep.subr.mxu0 0.0
      %2606 = vmatpush2.msra.mxu0 0.0
      %2607 = vmatprep.subr.mxu0 0.0
      %2608 = vmatpush2.msra.mxu0 0.0
      %2609 = vmatprep.subr.mxu0 0.0
      %2610 = vmatpush2.msra.mxu0 0.0
      %2611 = vmatprep.subr.mxu0 0.0
      %2612 = vmatpush2.msra.mxu0 0.0
      %2613 = vmatprep.subr.mxu0 0.0
      %2614 = vmatpush2.msra.mxu0 0.0
      %2615 = vmatprep.subr.mxu0 0.0
      %2616 = vmatpush2.msra.mxu0 0.0
      %2617 = vmatprep.subr.mxu0 0.0
      %2618 = vmatpush2.msra.mxu0 0.0
      %2619 = vmatprep.subr.mxu0 0.0
      %2620 = vmatpush2.msra.mxu0 0.0
      %2621 = vmatprep.subr.mxu0 0.0
      %2622 = vmatpush2.msra.mxu0 0.0
      %2623 = vmatprep.subr.mxu0 0.0
      %2624 = vmatpush2.msra.mxu0 0.0
      %2625 = vmatprep.subr.mxu0 0.0
      %2626 = vmatpush2.msra.mxu0 0.0
      %2627 = vmatprep.subr.mxu0 0.0
      %2628 = vmatpush2.msra.mxu0 0.0
      %2629 = vmatprep.subr.mxu0 0.0
      %2630 = vmatpush2.msra.mxu0 0.0
      %2631 = vmatprep.subr.mxu0 0.0
      %2632 = vmatpush2.msra.mxu0 0.0
      %2633 = vmatprep.mubr.f32.mxu0 0.0
      %2634 = vmatmul.mubr.f32.gmra.mxu0 %v2563
      %v2635 = vpop.f32.mrf.mxu0
      %v2636 = vadd.f32 0.0, %v2635
      %v2637 = vpop.f32.mrf.mxu0
      %v2638 = vadd.f32 0.0, %v2637
      %2639 = vdwg.mxu0
      %v2640 = vadd.f32 %v2550, %v2636
      %v2641 = vadd.f32 %v2551, %v2638
      %2642 = vrot.lane.b32.xlu0 %v2037, 34
      %v2643 = vpop.permute.xlu0 %2642
      %2644 = vrot.lane.b32.xlu0 %v2041, 34
      %v2645 = vpop.permute.xlu0 %2644
      %vm2646 = vcmask 277504
      %v2647 = vsel %vm2646, %v2643, %v2645
      %v2651 = vmul.f32 %v1845, %v2643
      %v2652 = vmul.f32 %v1841, %v2647
      %v2653 = vmul.f32 %v1846, %v2645
      %2654 = vrot.lane.b32.xlu0 %v1860, 64
      %v2655 = vpop.permute.xlu0 %2654
      %2659 = vrot.lane.b32.xlu0 %v2651, 94
      %v2660 = vpop.permute.xlu0 %2659
      %2661 = vrot.lane.b32.xlu0 %v2652, 94
      %v2662 = vpop.permute.xlu0 %2661
      %2663 = vrot.lane.b32.xlu0 %v2653, 94
      %v2664 = vpop.permute.xlu0 %2663
      %vm2665 = vcmask 769024
      %v2666 = vsel %vm2665, %v2660, %v2662
      %v2667 = vsel %vm2665, %v2662, %v2664
      %v2668 = vsel %vm1875, %v2655, 0
      %v2670 = vsel %vm1878, %v2666, 0
      %v2672 = vsel %vm1878, %v2667, 0
      %2674 = vmatprep.subr.mxu0 0.0
      %2675 = vmatpush1.msra.mxu0 0.0
      %2676 = vmatprep.subr.mxu0 0.0
      %2677 = vmatpush1.msra.mxu0 0.0
      %2678 = vmatprep.subr.mxu0 0.0
      %2679 = vmatpush1.msra.mxu0 0.0
      %2680 = vmatprep.subr.mxu0 0.0
      %2681 = vmatpush1.msra.mxu0 0.0
      %2682 = vmatprep.subr.mxu0 0.0
      %2683 = vmatpush1.msra.mxu0 0.0
      %2684 = vmatprep.subr.mxu0 0.0
      %2685 = vmatpush1.msra.mxu0 0.0
      %2686 = vmatprep.subr.mxu0 0.0
      %2687 = vmatpush1.msra.mxu0 0.0
      %2688 = vmatprep.subr.mxu0 0.0
      %2689 = vmatpush1.msra.mxu0 0.0
      %2690 = vmatprep.subr.mxu0 0.0
      %2691 = vmatpush1.msra.mxu0 0.0
      %2692 = vmatprep.subr.mxu0 0.0
      %2693 = vmatpush1.msra.mxu0 0.0
      %2694 = vmatprep.subr.mxu0 0.0
      %2695 = vmatpush1.msra.mxu0 0.0
      %2696 = vmatprep.subr.mxu0 0.0
      %2697 = vmatpush1.msra.mxu0 0.0
      %2698 = vmatprep.subr.mxu0 0.0
      %2699 = vmatpush1.msra.mxu0 0.0
      %2700 = vmatprep.subr.mxu0 0.0
      %2701 = vmatpush1.msra.mxu0 0.0
      %2702 = vmatprep.subr.mxu0 0.0
      %2703 = vmatpush1.msra.mxu0 0.0
      %2704 = vmatprep.subr.mxu0 %v2672
      %2705 = vmatpush1.msra.mxu0 %v2670
      %2706 = vmatprep.subr.mxu0 0.0
      %2707 = vmatpush2.msra.mxu0 0.0
      %2708 = vmatprep.subr.mxu0 0.0
      %2709 = vmatpush2.msra.mxu0 0.0
      %2710 = vmatprep.subr.mxu0 0.0
      %2711 = vmatpush2.msra.mxu0 0.0
      %2712 = vmatprep.subr.mxu0 0.0
      %2713 = vmatpush2.msra.mxu0 0.0
      %2714 = vmatprep.subr.mxu0 0.0
      %2715 = vmatpush2.msra.mxu0 0.0
      %2716 = vmatprep.subr.mxu0 0.0
      %2717 = vmatpush2.msra.mxu0 0.0
      %2718 = vmatprep.subr.mxu0 0.0
      %2719 = vmatpush2.msra.mxu0 0.0
      %2720 = vmatprep.subr.mxu0 0.0
      %2721 = vmatpush2.msra.mxu0 0.0
      %2722 = vmatprep.subr.mxu0 0.0
      %2723 = vmatpush2.msra.mxu0 0.0
      %2724 = vmatprep.subr.mxu0 0.0
      %2725 = vmatpush2.msra.mxu0 0.0
      %2726 = vmatprep.subr.mxu0 0.0
      %2727 = vmatpush2.msra.mxu0 0.0
      %2728 = vmatprep.subr.mxu0 0.0
      %2729 = vmatpush2.msra.mxu0 0.0
      %2730 = vmatprep.subr.mxu0 0.0
      %2731 = vmatpush2.msra.mxu0 0.0
      %2732 = vmatprep.subr.mxu0 0.0
      %2733 = vmatpush2.msra.mxu0 0.0
      %2734 = vmatprep.subr.mxu0 0.0
      %2735 = vmatpush2.msra.mxu0 0.0
      %2736 = vmatprep.subr.mxu0 0.0
      %2737 = vmatpush2.msra.mxu0 0.0
      %2738 = vmatprep.mubr.f32.mxu0 0.0
      %2739 = vmatmul.mubr.f32.gmra.mxu0 %v2668
      %v2740 = vpop.f32.mrf.mxu0
      %v2741 = vadd.f32 0.0, %v2740
      %v2742 = vpop.f32.mrf.mxu0
      %v2743 = vadd.f32 0.0, %v2742
      %2744 = vdwg.mxu0
      %v2745 = vadd.f32 %v2640, %v2741
      %v2746 = vadd.f32 %v2641, %v2743
      %v2748 = vcombine.high %v1833, %v1833
      %2749 = vrot.lane.b32.xlu0 %v1833, 17
      %v2750 = vpop.permute.xlu0 %2749
      %2751 = vrot.lane.b32.xlu0 %v2748, 17
      %v2752 = vpop.permute.xlu0 %2751
      %v2753 = vsel %vm1840, %v2750, %v2752
      %v2757 = vsel %vm1840, 0.0, %v2750
      %v2758 = vsel %vm1840, %v2752, 0.0
      %v2759 = vmul.f32 %v2757, %v1851
      %v2760 = vmul.f32 %v2753, %v1855
      %v2761 = vld [vmem:[%s4] sm:$0xf]
      %2763 = vrot.lane.b32.xlu0 %v2761, 116
      %v2764 = vpop.permute.xlu0 %2763
      %2767 = vrot.lane.b32.xlu0 %v2757, 127
      %v2768 = vpop.permute.xlu0 %2767
      %2769 = vrot.lane.b32.xlu0 %v2753, 127
      %v2770 = vpop.permute.xlu0 %2769
      %2771 = vrot.lane.b32.xlu0 %v2758, 127
      %v2772 = vpop.permute.xlu0 %2771
      %v2773 = vsel %vm1872, %v2768, %v2770
      %v2774 = vsel %vm1872, %v2770, %v2772
      %v2775 = vsel %vm1875, %v2764, 0
      %v2777 = vsel %vm1878, %v2773, 0
      %v2779 = vsel %vm1878, %v2774, 0
      %2781 = vmatprep.subr.mxu0 0.0
      %2782 = vmatpush1.msra.mxu0 0.0
      %2783 = vmatprep.subr.mxu0 0.0
      %2784 = vmatpush1.msra.mxu0 0.0
      %2785 = vmatprep.subr.mxu0 0.0
      %2786 = vmatpush1.msra.mxu0 0.0
      %2787 = vmatprep.subr.mxu0 0.0
      %2788 = vmatpush1.msra.mxu0 0.0
      %2789 = vmatprep.subr.mxu0 0.0
      %2790 = vmatpush1.msra.mxu0 0.0
      %2791 = vmatprep.subr.mxu0 0.0
      %2792 = vmatpush1.msra.mxu0 0.0
      %2793 = vmatprep.subr.mxu0 0.0
      %2794 = vmatpush1.msra.mxu0 0.0
      %2795 = vmatprep.subr.mxu0 0.0
      %2796 = vmatpush1.msra.mxu0 0.0
      %2797 = vmatprep.subr.mxu0 0.0
      %2798 = vmatpush1.msra.mxu0 0.0
      %2799 = vmatprep.subr.mxu0 0.0
      %2800 = vmatpush1.msra.mxu0 0.0
      %2801 = vmatprep.subr.mxu0 0.0
      %2802 = vmatpush1.msra.mxu0 0.0
      %2803 = vmatprep.subr.mxu0 0.0
      %2804 = vmatpush1.msra.mxu0 0.0
      %2805 = vmatprep.subr.mxu0 0.0
      %2806 = vmatpush1.msra.mxu0 0.0
      %2807 = vmatprep.subr.mxu0 0.0
      %2808 = vmatpush1.msra.mxu0 0.0
      %2809 = vmatprep.subr.mxu0 0.0
      %2810 = vmatpush1.msra.mxu0 0.0
      %2811 = vmatprep.subr.mxu0 %v2779
      %2812 = vmatpush1.msra.mxu0 %v2777
      %2813 = vmatprep.subr.mxu0 0.0
      %2814 = vmatpush2.msra.mxu0 0.0
      %2815 = vmatprep.subr.mxu0 0.0
      %2816 = vmatpush2.msra.mxu0 0.0
      %2817 = vmatprep.subr.mxu0 0.0
      %2818 = vmatpush2.msra.mxu0 0.0
      %2819 = vmatprep.subr.mxu0 0.0
      %2820 = vmatpush2.msra.mxu0 0.0
      %2821 = vmatprep.subr.mxu0 0.0
      %2822 = vmatpush2.msra.mxu0 0.0
      %2823 = vmatprep.subr.mxu0 0.0
      %2824 = vmatpush2.msra.mxu0 0.0
      %2825 = vmatprep.subr.mxu0 0.0
      %2826 = vmatpush2.msra.mxu0 0.0
      %2827 = vmatprep.subr.mxu0 0.0
      %2828 = vmatpush2.msra.mxu0 0.0
      %2829 = vmatprep.subr.mxu0 0.0
      %2830 = vmatpush2.msra.mxu0 0.0
      %2831 = vmatprep.subr.mxu0 0.0
      %2832 = vmatpush2.msra.mxu0 0.0
      %2833 = vmatprep.subr.mxu0 0.0
      %2834 = vmatpush2.msra.mxu0 0.0
      %2835 = vmatprep.subr.mxu0 0.0
      %2836 = vmatpush2.msra.mxu0 0.0
      %2837 = vmatprep.subr.mxu0 0.0
      %2838 = vmatpush2.msra.mxu0 0.0
      %2839 = vmatprep.subr.mxu0 0.0
      %2840 = vmatpush2.msra.mxu0 0.0
      %2841 = vmatprep.subr.mxu0 0.0
      %2842 = vmatpush2.msra.mxu0 0.0
      %2843 = vmatprep.subr.mxu0 0.0
      %2844 = vmatpush2.msra.mxu0 0.0
      %2845 = vmatprep.mubr.f32.mxu0 0.0
      %2846 = vmatmul.mubr.f32.gmra.mxu0 %v2775
      %v2847 = vpop.f32.mrf.mxu0
      %v2848 = vadd.f32 0.0, %v2847
      %v2849 = vpop.f32.mrf.mxu0
      %v2850 = vadd.f32 0.0, %v2849
      %2851 = vdwg.mxu0
      %2852 = vrot.lane.b32.xlu0 %v2761, 124
      %v2853 = vpop.permute.xlu0 %2852
      %v2854 = vsel %vm1875, %v2853, 0
      %v2857 = vsel %vm1878, %v2759, 0
      %v2860 = vsel %vm1878, %v2760, 0
      %2862 = vmatprep.subr.mxu0 0.0
      %2863 = vmatpush1.msra.mxu0 0.0
      %2864 = vmatprep.subr.mxu0 0.0
      %2865 = vmatpush1.msra.mxu0 0.0
      %2866 = vmatprep.subr.mxu0 0.0
      %2867 = vmatpush1.msra.mxu0 0.0
      %2868 = vmatprep.subr.mxu0 0.0
      %2869 = vmatpush1.msra.mxu0 0.0
      %2870 = vmatprep.subr.mxu0 0.0
      %2871 = vmatpush1.msra.mxu0 0.0
      %2872 = vmatprep.subr.mxu0 0.0
      %2873 = vmatpush1.msra.mxu0 0.0
      %2874 = vmatprep.subr.mxu0 0.0
      %2875 = vmatpush1.msra.mxu0 0.0
      %2876 = vmatprep.subr.mxu0 0.0
      %2877 = vmatpush1.msra.mxu0 0.0
      %2878 = vmatprep.subr.mxu0 0.0
      %2879 = vmatpush1.msra.mxu0 0.0
      %2880 = vmatprep.subr.mxu0 0.0
      %2881 = vmatpush1.msra.mxu0 0.0
      %2882 = vmatprep.subr.mxu0 0.0
      %2883 = vmatpush1.msra.mxu0 0.0
      %2884 = vmatprep.subr.mxu0 0.0
      %2885 = vmatpush1.msra.mxu0 0.0
      %2886 = vmatprep.subr.mxu0 0.0
      %2887 = vmatpush1.msra.mxu0 0.0
      %2888 = vmatprep.subr.mxu0 0.0
      %2889 = vmatpush1.msra.mxu0 0.0
      %2890 = vmatprep.subr.mxu0 0.0
      %2891 = vmatpush1.msra.mxu0 0.0
      %2892 = vmatprep.subr.mxu0 %v2860
      %2893 = vmatpush1.msra.mxu0 %v2857
      %2894 = vmatprep.subr.mxu0 0.0
      %2895 = vmatpush2.msra.mxu0 0.0
      %2896 = vmatprep.subr.mxu0 0.0
      %2897 = vmatpush2.msra.mxu0 0.0
      %2898 = vmatprep.subr.mxu0 0.0
      %2899 = vmatpush2.msra.mxu0 0.0
      %2900 = vmatprep.subr.mxu0 0.0
      %2901 = vmatpush2.msra.mxu0 0.0
      %2902 = vmatprep.subr.mxu0 0.0
      %2903 = vmatpush2.msra.mxu0 0.0
      %2904 = vmatprep.subr.mxu0 0.0
      %2905 = vmatpush2.msra.mxu0 0.0
      %2906 = vmatprep.subr.mxu0 0.0
      %2907 = vmatpush2.msra.mxu0 0.0
      %2908 = vmatprep.subr.mxu0 0.0
      %2909 = vmatpush2.msra.mxu0 0.0
      %2910 = vmatprep.subr.mxu0 0.0
      %2911 = vmatpush2.msra.mxu0 0.0
      %2912 = vmatprep.subr.mxu0 0.0
      %2913 = vmatpush2.msra.mxu0 0.0
      %2914 = vmatprep.subr.mxu0 0.0
      %2915 = vmatpush2.msra.mxu0 0.0
      %2916 = vmatprep.subr.mxu0 0.0
      %2917 = vmatpush2.msra.mxu0 0.0
      %2918 = vmatprep.subr.mxu0 0.0
      %2919 = vmatpush2.msra.mxu0 0.0
      %2920 = vmatprep.subr.mxu0 0.0
      %2921 = vmatpush2.msra.mxu0 0.0
      %2922 = vmatprep.subr.mxu0 0.0
      %2923 = vmatpush2.msra.mxu0 0.0
      %2924 = vmatprep.subr.mxu0 0.0
      %2925 = vmatpush2.msra.mxu0 0.0
      %2926 = vmatprep.mubr.f32.mxu0 0.0
      %2927 = vmatmul.mubr.f32.gmra.mxu0 %v2854
      %v2928 = vpop.f32.mrf.mxu0
      %v2929 = vadd.f32 %v2848, %v2928
      %v2930 = vpop.f32.mrf.mxu0
      %v2931 = vadd.f32 %v2850, %v2930
      %2932 = vdwg.mxu0
      %v2933 = vmul.f32 %v2757, %v2043
      %v2934 = vmul.f32 %v2753, %v2047
      %v2935 = vmul.f32 %v2758, %v2045
      %2936 = vrot.lane.b32.xlu0 %v2761, 108
      %v2937 = vpop.permute.xlu0 %2936
      %2941 = vrot.lane.b32.xlu0 %v2933, 126
      %v2942 = vpop.permute.xlu0 %2941
      %2943 = vrot.lane.b32.xlu0 %v2934, 126
      %v2944 = vpop.permute.xlu0 %2943
      %2945 = vrot.lane.b32.xlu0 %v2935, 126
      %v2946 = vpop.permute.xlu0 %2945
      %v2947 = vsel %vm2065, %v2942, %v2944
      %v2948 = vsel %vm2065, %v2944, %v2946
      %v2949 = vsel %vm1875, %v2937, 0
      %v2951 = vsel %vm1878, %v2947, 0
      %v2953 = vsel %vm1878, %v2948, 0
      %2955 = vmatprep.subr.mxu0 0.0
      %2956 = vmatpush1.msra.mxu0 0.0
      %2957 = vmatprep.subr.mxu0 0.0
      %2958 = vmatpush1.msra.mxu0 0.0
      %2959 = vmatprep.subr.mxu0 0.0
      %2960 = vmatpush1.msra.mxu0 0.0
      %2961 = vmatprep.subr.mxu0 0.0
      %2962 = vmatpush1.msra.mxu0 0.0
      %2963 = vmatprep.subr.mxu0 0.0
      %2964 = vmatpush1.msra.mxu0 0.0
      %2965 = vmatprep.subr.mxu0 0.0
      %2966 = vmatpush1.msra.mxu0 0.0
      %2967 = vmatprep.subr.mxu0 0.0
      %2968 = vmatpush1.msra.mxu0 0.0
      %2969 = vmatprep.subr.mxu0 0.0
      %2970 = vmatpush1.msra.mxu0 0.0
      %2971 = vmatprep.subr.mxu0 0.0
      %2972 = vmatpush1.msra.mxu0 0.0
      %2973 = vmatprep.subr.mxu0 0.0
      %2974 = vmatpush1.msra.mxu0 0.0
      %2975 = vmatprep.subr.mxu0 0.0
      %2976 = vmatpush1.msra.mxu0 0.0
      %2977 = vmatprep.subr.mxu0 0.0
      %2978 = vmatpush1.msra.mxu0 0.0
      %2979 = vmatprep.subr.mxu0 0.0
      %2980 = vmatpush1.msra.mxu0 0.0
      %2981 = vmatprep.subr.mxu0 0.0
      %2982 = vmatpush1.msra.mxu0 0.0
      %2983 = vmatprep.subr.mxu0 0.0
      %2984 = vmatpush1.msra.mxu0 0.0
      %2985 = vmatprep.subr.mxu0 %v2953
      %2986 = vmatpush1.msra.mxu0 %v2951
      %2987 = vmatprep.subr.mxu0 0.0
      %2988 = vmatpush2.msra.mxu0 0.0
      %2989 = vmatprep.subr.mxu0 0.0
      %2990 = vmatpush2.msra.mxu0 0.0
      %2991 = vmatprep.subr.mxu0 0.0
      %2992 = vmatpush2.msra.mxu0 0.0
      %2993 = vmatprep.subr.mxu0 0.0
      %2994 = vmatpush2.msra.mxu0 0.0
      %2995 = vmatprep.subr.mxu0 0.0
      %2996 = vmatpush2.msra.mxu0 0.0
      %2997 = vmatprep.subr.mxu0 0.0
      %2998 = vmatpush2.msra.mxu0 0.0
      %2999 = vmatprep.subr.mxu0 0.0
      %3000 = vmatpush2.msra.mxu0 0.0
      %3001 = vmatprep.subr.mxu0 0.0
      %3002 = vmatpush2.msra.mxu0 0.0
      %3003 = vmatprep.subr.mxu0 0.0
      %3004 = vmatpush2.msra.mxu0 0.0
      %3005 = vmatprep.subr.mxu0 0.0
      %3006 = vmatpush2.msra.mxu0 0.0
      %3007 = vmatprep.subr.mxu0 0.0
      %3008 = vmatpush2.msra.mxu0 0.0
      %3009 = vmatprep.subr.mxu0 0.0
      %3010 = vmatpush2.msra.mxu0 0.0
      %3011 = vmatprep.subr.mxu0 0.0
      %3012 = vmatpush2.msra.mxu0 0.0
      %3013 = vmatprep.subr.mxu0 0.0
      %3014 = vmatpush2.msra.mxu0 0.0
      %3015 = vmatprep.subr.mxu0 0.0
      %3016 = vmatpush2.msra.mxu0 0.0
      %3017 = vmatprep.subr.mxu0 0.0
      %3018 = vmatpush2.msra.mxu0 0.0
      %3019 = vmatprep.mubr.f32.mxu0 0.0
      %3020 = vmatmul.mubr.f32.gmra.mxu0 %v2949
      %v3021 = vpop.f32.mrf.mxu0
      %v3022 = vadd.f32 0.0, %v3021
      %v3023 = vpop.f32.mrf.mxu0
      %v3024 = vadd.f32 0.0, %v3023
      %3025 = vdwg.mxu0
      %v3026 = vadd.f32 %v2929, %v3022
      %v3027 = vadd.f32 %v2931, %v3024
      %v3028 = vmul.f32 %v2757, %v2148
      %v3029 = vmul.f32 %v2753, %v2152
      %v3030 = vmul.f32 %v2758, %v2150
      %3031 = vrot.lane.b32.xlu0 %v2761, 100
      %v3032 = vpop.permute.xlu0 %3031
      %3036 = vrot.lane.b32.xlu0 %v3028, 112
      %v3037 = vpop.permute.xlu0 %3036
      %3038 = vrot.lane.b32.xlu0 %v3029, 112
      %v3039 = vpop.permute.xlu0 %3038
      %3040 = vrot.lane.b32.xlu0 %v3030, 112
      %v3041 = vpop.permute.xlu0 %3040
      %v3042 = vsel %vm2170, %v3037, %v3039
      %v3043 = vsel %vm2170, %v3039, %v3041
      %v3044 = vsel %vm1875, %v3032, 0
      %v3046 = vsel %vm1878, %v3042, 0
      %v3048 = vsel %vm1878, %v3043, 0
      %3050 = vmatprep.subr.mxu0 0.0
      %3051 = vmatpush1.msra.mxu0 0.0
      %3052 = vmatprep.subr.mxu0 0.0
      %3053 = vmatpush1.msra.mxu0 0.0
      %3054 = vmatprep.subr.mxu0 0.0
      %3055 = vmatpush1.msra.mxu0 0.0
      %3056 = vmatprep.subr.mxu0 0.0
      %3057 = vmatpush1.msra.mxu0 0.0
      %3058 = vmatprep.subr.mxu0 0.0
      %3059 = vmatpush1.msra.mxu0 0.0
      %3060 = vmatprep.subr.mxu0 0.0
      %3061 = vmatpush1.msra.mxu0 0.0
      %3062 = vmatprep.subr.mxu0 0.0
      %3063 = vmatpush1.msra.mxu0 0.0
      %3064 = vmatprep.subr.mxu0 0.0
      %3065 = vmatpush1.msra.mxu0 0.0
      %3066 = vmatprep.subr.mxu0 0.0
      %3067 = vmatpush1.msra.mxu0 0.0
      %3068 = vmatprep.subr.mxu0 0.0
      %3069 = vmatpush1.msra.mxu0 0.0
      %3070 = vmatprep.subr.mxu0 0.0
      %3071 = vmatpush1.msra.mxu0 0.0
      %3072 = vmatprep.subr.mxu0 0.0
      %3073 = vmatpush1.msra.mxu0 0.0
      %3074 = vmatprep.subr.mxu0 0.0
      %3075 = vmatpush1.msra.mxu0 0.0
      %3076 = vmatprep.subr.mxu0 0.0
      %3077 = vmatpush1.msra.mxu0 0.0
      %3078 = vmatprep.subr.mxu0 0.0
      %3079 = vmatpush1.msra.mxu0 0.0
      %3080 = vmatprep.subr.mxu0 %v3048
      %3081 = vmatpush1.msra.mxu0 %v3046
      %3082 = vmatprep.subr.mxu0 0.0
      %3083 = vmatpush2.msra.mxu0 0.0
      %3084 = vmatprep.subr.mxu0 0.0
      %3085 = vmatpush2.msra.mxu0 0.0
      %3086 = vmatprep.subr.mxu0 0.0
      %3087 = vmatpush2.msra.mxu0 0.0
      %3088 = vmatprep.subr.mxu0 0.0
      %3089 = vmatpush2.msra.mxu0 0.0
      %3090 = vmatprep.subr.mxu0 0.0
      %3091 = vmatpush2.msra.mxu0 0.0
      %3092 = vmatprep.subr.mxu0 0.0
      %3093 = vmatpush2.msra.mxu0 0.0
      %3094 = vmatprep.subr.mxu0 0.0
      %3095 = vmatpush2.msra.mxu0 0.0
      %3096 = vmatprep.subr.mxu0 0.0
      %3097 = vmatpush2.msra.mxu0 0.0
      %3098 = vmatprep.subr.mxu0 0.0
      %3099 = vmatpush2.msra.mxu0 0.0
      %3100 = vmatprep.subr.mxu0 0.0
      %3101 = vmatpush2.msra.mxu0 0.0
      %3102 = vmatprep.subr.mxu0 0.0
      %3103 = vmatpush2.msra.mxu0 0.0
      %3104 = vmatprep.subr.mxu0 0.0
      %3105 = vmatpush2.msra.mxu0 0.0
      %3106 = vmatprep.subr.mxu0 0.0
      %3107 = vmatpush2.msra.mxu0 0.0
      %3108 = vmatprep.subr.mxu0 0.0
      %3109 = vmatpush2.msra.mxu0 0.0
      %3110 = vmatprep.subr.mxu0 0.0
      %3111 = vmatpush2.msra.mxu0 0.0
      %3112 = vmatprep.subr.mxu0 0.0
      %3113 = vmatpush2.msra.mxu0 0.0
      %3114 = vmatprep.mubr.f32.mxu0 0.0
      %3115 = vmatmul.mubr.f32.gmra.mxu0 %v3044
      %v3116 = vpop.f32.mrf.mxu0
      %v3117 = vadd.f32 0.0, %v3116
      %v3118 = vpop.f32.mrf.mxu0
      %v3119 = vadd.f32 0.0, %v3118
      %3120 = vdwg.mxu0
      %v3121 = vadd.f32 %v3026, %v3117
      %v3122 = vadd.f32 %v3027, %v3119
      %3123 = vrot.lane.b32.xlu0 %v2761, 92
      %v3124 = vpop.permute.xlu0 %3123
      %3125 = vrot.lane.b32.xlu0 %v2757, 111
      %v3126 = vpop.permute.xlu0 %3125
      %3127 = vrot.lane.b32.xlu0 %v2753, 111
      %v3128 = vpop.permute.xlu0 %3127
      %3129 = vrot.lane.b32.xlu0 %v2758, 111
      %v3130 = vpop.permute.xlu0 %3129
      %v3131 = vsel %vm2260, %v3126, %v3128
      %v3132 = vsel %vm2260, %v3128, %v3130
      %v3133 = vsel %vm1875, %v3124, 0
      %v3135 = vsel %vm1878, %v3131, 0
      %v3137 = vsel %vm1878, %v3132, 0
      %3139 = vmatprep.subr.mxu0 0.0
      %3140 = vmatpush1.msra.mxu0 0.0
      %3141 = vmatprep.subr.mxu0 0.0
      %3142 = vmatpush1.msra.mxu0 0.0
      %3143 = vmatprep.subr.mxu0 0.0
      %3144 = vmatpush1.msra.mxu0 0.0
      %3145 = vmatprep.subr.mxu0 0.0
      %3146 = vmatpush1.msra.mxu0 0.0
      %3147 = vmatprep.subr.mxu0 0.0
      %3148 = vmatpush1.msra.mxu0 0.0
      %3149 = vmatprep.subr.mxu0 0.0
      %3150 = vmatpush1.msra.mxu0 0.0
      %3151 = vmatprep.subr.mxu0 0.0
      %3152 = vmatpush1.msra.mxu0 0.0
      %3153 = vmatprep.subr.mxu0 0.0
      %3154 = vmatpush1.msra.mxu0 0.0
      %3155 = vmatprep.subr.mxu0 0.0
      %3156 = vmatpush1.msra.mxu0 0.0
      %3157 = vmatprep.subr.mxu0 0.0
      %3158 = vmatpush1.msra.mxu0 0.0
      %3159 = vmatprep.subr.mxu0 0.0
      %3160 = vmatpush1.msra.mxu0 0.0
      %3161 = vmatprep.subr.mxu0 0.0
      %3162 = vmatpush1.msra.mxu0 0.0
      %3163 = vmatprep.subr.mxu0 0.0
      %3164 = vmatpush1.msra.mxu0 0.0
      %3165 = vmatprep.subr.mxu0 0.0
      %3166 = vmatpush1.msra.mxu0 0.0
      %3167 = vmatprep.subr.mxu0 0.0
      %3168 = vmatpush1.msra.mxu0 0.0
      %3169 = vmatprep.subr.mxu0 %v3137
      %3170 = vmatpush1.msra.mxu0 %v3135
      %3171 = vmatprep.subr.mxu0 0.0
      %3172 = vmatpush2.msra.mxu0 0.0
      %3173 = vmatprep.subr.mxu0 0.0
      %3174 = vmatpush2.msra.mxu0 0.0
      %3175 = vmatprep.subr.mxu0 0.0
      %3176 = vmatpush2.msra.mxu0 0.0
      %3177 = vmatprep.subr.mxu0 0.0
      %3178 = vmatpush2.msra.mxu0 0.0
      %3179 = vmatprep.subr.mxu0 0.0
      %3180 = vmatpush2.msra.mxu0 0.0
      %3181 = vmatprep.subr.mxu0 0.0
      %3182 = vmatpush2.msra.mxu0 0.0
      %3183 = vmatprep.subr.mxu0 0.0
      %3184 = vmatpush2.msra.mxu0 0.0
      %3185 = vmatprep.subr.mxu0 0.0
      %3186 = vmatpush2.msra.mxu0 0.0
      %3187 = vmatprep.subr.mxu0 0.0
      %3188 = vmatpush2.msra.mxu0 0.0
      %3189 = vmatprep.subr.mxu0 0.0
      %3190 = vmatpush2.msra.mxu0 0.0
      %3191 = vmatprep.subr.mxu0 0.0
      %3192 = vmatpush2.msra.mxu0 0.0
      %3193 = vmatprep.subr.mxu0 0.0
      %3194 = vmatpush2.msra.mxu0 0.0
      %3195 = vmatprep.subr.mxu0 0.0
      %3196 = vmatpush2.msra.mxu0 0.0
      %3197 = vmatprep.subr.mxu0 0.0
      %3198 = vmatpush2.msra.mxu0 0.0
      %3199 = vmatprep.subr.mxu0 0.0
      %3200 = vmatpush2.msra.mxu0 0.0
      %3201 = vmatprep.subr.mxu0 0.0
      %3202 = vmatpush2.msra.mxu0 0.0
      %3203 = vmatprep.mubr.f32.mxu0 0.0
      %3204 = vmatmul.mubr.f32.gmra.mxu0 %v3133
      %v3205 = vpop.f32.mrf.mxu0
      %v3206 = vadd.f32 0.0, %v3205
      %v3207 = vpop.f32.mrf.mxu0
      %v3208 = vadd.f32 0.0, %v3207
      %3209 = vdwg.mxu0
      %v3210 = vadd.f32 %v3121, %v3206
      %v3211 = vadd.f32 %v3122, %v3208
      %v3212 = vmul.f32 %v2757, %v2343
      %v3213 = vmul.f32 %v2753, %v2347
      %v3214 = vmul.f32 %v2758, %v2345
      %3215 = vrot.lane.b32.xlu0 %v2761, 84
      %v3216 = vpop.permute.xlu0 %3215
      %3220 = vrot.lane.b32.xlu0 %v3212, 110
      %v3221 = vpop.permute.xlu0 %3220
      %3222 = vrot.lane.b32.xlu0 %v3213, 110
      %v3223 = vpop.permute.xlu0 %3222
      %3224 = vrot.lane.b32.xlu0 %v3214, 110
      %v3225 = vpop.permute.xlu0 %3224
      %v3226 = vsel %vm2365, %v3221, %v3223
      %v3227 = vsel %vm2365, %v3223, %v3225
      %v3228 = vsel %vm1875, %v3216, 0
      %v3230 = vsel %vm1878, %v3226, 0
      %v3232 = vsel %vm1878, %v3227, 0
      %3234 = vmatprep.subr.mxu0 0.0
      %3235 = vmatpush1.msra.mxu0 0.0
      %3236 = vmatprep.subr.mxu0 0.0
      %3237 = vmatpush1.msra.mxu0 0.0
      %3238 = vmatprep.subr.mxu0 0.0
      %3239 = vmatpush1.msra.mxu0 0.0
      %3240 = vmatprep.subr.mxu0 0.0
      %3241 = vmatpush1.msra.mxu0 0.0
      %3242 = vmatprep.subr.mxu0 0.0
      %3243 = vmatpush1.msra.mxu0 0.0
      %3244 = vmatprep.subr.mxu0 0.0
      %3245 = vmatpush1.msra.mxu0 0.0
      %3246 = vmatprep.subr.mxu0 0.0
      %3247 = vmatpush1.msra.mxu0 0.0
      %3248 = vmatprep.subr.mxu0 0.0
      %3249 = vmatpush1.msra.mxu0 0.0
      %3250 = vmatprep.subr.mxu0 0.0
      %3251 = vmatpush1.msra.mxu0 0.0
      %3252 = vmatprep.subr.mxu0 0.0
      %3253 = vmatpush1.msra.mxu0 0.0
      %3254 = vmatprep.subr.mxu0 0.0
      %3255 = vmatpush1.msra.mxu0 0.0
      %3256 = vmatprep.subr.mxu0 0.0
      %3257 = vmatpush1.msra.mxu0 0.0
      %3258 = vmatprep.subr.mxu0 0.0
      %3259 = vmatpush1.msra.mxu0 0.0
      %3260 = vmatprep.subr.mxu0 0.0
      %3261 = vmatpush1.msra.mxu0 0.0
      %3262 = vmatprep.subr.mxu0 0.0
      %3263 = vmatpush1.msra.mxu0 0.0
      %3264 = vmatprep.subr.mxu0 %v3232
      %3265 = vmatpush1.msra.mxu0 %v3230
      %3266 = vmatprep.subr.mxu0 0.0
      %3267 = vmatpush2.msra.mxu0 0.0
      %3268 = vmatprep.subr.mxu0 0.0
      %3269 = vmatpush2.msra.mxu0 0.0
      %3270 = vmatprep.subr.mxu0 0.0
      %3271 = vmatpush2.msra.mxu0 0.0
      %3272 = vmatprep.subr.mxu0 0.0
      %3273 = vmatpush2.msra.mxu0 0.0
      %3274 = vmatprep.subr.mxu0 0.0
      %3275 = vmatpush2.msra.mxu0 0.0
      %3276 = vmatprep.subr.mxu0 0.0
      %3277 = vmatpush2.msra.mxu0 0.0
      %3278 = vmatprep.subr.mxu0 0.0
      %3279 = vmatpush2.msra.mxu0 0.0
      %3280 = vmatprep.subr.mxu0 0.0
      %3281 = vmatpush2.msra.mxu0 0.0
      %3282 = vmatprep.subr.mxu0 0.0
      %3283 = vmatpush2.msra.mxu0 0.0
      %3284 = vmatprep.subr.mxu0 0.0
      %3285 = vmatpush2.msra.mxu0 0.0
      %3286 = vmatprep.subr.mxu0 0.0
      %3287 = vmatpush2.msra.mxu0 0.0
      %3288 = vmatprep.subr.mxu0 0.0
      %3289 = vmatpush2.msra.mxu0 0.0
      %3290 = vmatprep.subr.mxu0 0.0
      %3291 = vmatpush2.msra.mxu0 0.0
      %3292 = vmatprep.subr.mxu0 0.0
      %3293 = vmatpush2.msra.mxu0 0.0
      %3294 = vmatprep.subr.mxu0 0.0
      %3295 = vmatpush2.msra.mxu0 0.0
      %3296 = vmatprep.subr.mxu0 0.0
      %3297 = vmatpush2.msra.mxu0 0.0
      %3298 = vmatprep.mubr.f32.mxu0 0.0
      %3299 = vmatmul.mubr.f32.gmra.mxu0 %v3228
      %v3300 = vpop.f32.mrf.mxu0
      %v3301 = vadd.f32 0.0, %v3300
      %v3302 = vpop.f32.mrf.mxu0
      %v3303 = vadd.f32 0.0, %v3302
      %3304 = vdwg.mxu0
      %v3305 = vadd.f32 %v3210, %v3301
      %v3306 = vadd.f32 %v3211, %v3303
      %v3307 = vmul.f32 %v2757, %v2448
      %v3308 = vmul.f32 %v2753, %v2452
      %v3309 = vmul.f32 %v2758, %v2450
      %3310 = vrot.lane.b32.xlu0 %v2761, 76
      %v3311 = vpop.permute.xlu0 %3310
      %3315 = vrot.lane.b32.xlu0 %v3307, 96
      %v3316 = vpop.permute.xlu0 %3315
      %3317 = vrot.lane.b32.xlu0 %v3308, 96
      %v3318 = vpop.permute.xlu0 %3317
      %3319 = vrot.lane.b32.xlu0 %v3309, 96
      %v3320 = vpop.permute.xlu0 %3319
      %v3321 = vsel %vm2470, %v3316, %v3318
      %v3322 = vsel %vm2470, %v3318, %v3320
      %v3323 = vsel %vm1875, %v3311, 0
      %v3325 = vsel %vm1878, %v3321, 0
      %v3327 = vsel %vm1878, %v3322, 0
      %3329 = vmatprep.subr.mxu0 0.0
      %3330 = vmatpush1.msra.mxu0 0.0
      %3331 = vmatprep.subr.mxu0 0.0
      %3332 = vmatpush1.msra.mxu0 0.0
      %3333 = vmatprep.subr.mxu0 0.0
      %3334 = vmatpush1.msra.mxu0 0.0
      %3335 = vmatprep.subr.mxu0 0.0
      %3336 = vmatpush1.msra.mxu0 0.0
      %3337 = vmatprep.subr.mxu0 0.0
      %3338 = vmatpush1.msra.mxu0 0.0
      %3339 = vmatprep.subr.mxu0 0.0
      %3340 = vmatpush1.msra.mxu0 0.0
      %3341 = vmatprep.subr.mxu0 0.0
      %3342 = vmatpush1.msra.mxu0 0.0
      %3343 = vmatprep.subr.mxu0 0.0
      %3344 = vmatpush1.msra.mxu0 0.0
      %3345 = vmatprep.subr.mxu0 0.0
      %3346 = vmatpush1.msra.mxu0 0.0
      %3347 = vmatprep.subr.mxu0 0.0
      %3348 = vmatpush1.msra.mxu0 0.0
      %3349 = vmatprep.subr.mxu0 0.0
      %3350 = vmatpush1.msra.mxu0 0.0
      %3351 = vmatprep.subr.mxu0 0.0
      %3352 = vmatpush1.msra.mxu0 0.0
      %3353 = vmatprep.subr.mxu0 0.0
      %3354 = vmatpush1.msra.mxu0 0.0
      %3355 = vmatprep.subr.mxu0 0.0
      %3356 = vmatpush1.msra.mxu0 0.0
      %3357 = vmatprep.subr.mxu0 0.0
      %3358 = vmatpush1.msra.mxu0 0.0
      %3359 = vmatprep.subr.mxu0 %v3327
      %3360 = vmatpush1.msra.mxu0 %v3325
      %3361 = vmatprep.subr.mxu0 0.0
      %3362 = vmatpush2.msra.mxu0 0.0
      %3363 = vmatprep.subr.mxu0 0.0
      %3364 = vmatpush2.msra.mxu0 0.0
      %3365 = vmatprep.subr.mxu0 0.0
      %3366 = vmatpush2.msra.mxu0 0.0
      %3367 = vmatprep.subr.mxu0 0.0
      %3368 = vmatpush2.msra.mxu0 0.0
      %3369 = vmatprep.subr.mxu0 0.0
      %3370 = vmatpush2.msra.mxu0 0.0
      %3371 = vmatprep.subr.mxu0 0.0
      %3372 = vmatpush2.msra.mxu0 0.0
      %3373 = vmatprep.subr.mxu0 0.0
      %3374 = vmatpush2.msra.mxu0 0.0
      %3375 = vmatprep.subr.mxu0 0.0
      %3376 = vmatpush2.msra.mxu0 0.0
      %3377 = vmatprep.subr.mxu0 0.0
      %3378 = vmatpush2.msra.mxu0 0.0
      %3379 = vmatprep.subr.mxu0 0.0
      %3380 = vmatpush2.msra.mxu0 0.0
      %3381 = vmatprep.subr.mxu0 0.0
      %3382 = vmatpush2.msra.mxu0 0.0
      %3383 = vmatprep.subr.mxu0 0.0
      %3384 = vmatpush2.msra.mxu0 0.0
      %3385 = vmatprep.subr.mxu0 0.0
      %3386 = vmatpush2.msra.mxu0 0.0
      %3387 = vmatprep.subr.mxu0 0.0
      %3388 = vmatpush2.msra.mxu0 0.0
      %3389 = vmatprep.subr.mxu0 0.0
      %3390 = vmatpush2.msra.mxu0 0.0
      %3391 = vmatprep.subr.mxu0 0.0
      %3392 = vmatpush2.msra.mxu0 0.0
      %3393 = vmatprep.mubr.f32.mxu0 0.0
      %3394 = vmatmul.mubr.f32.gmra.mxu0 %v3323
      %v3395 = vpop.f32.mrf.mxu0
      %v3396 = vadd.f32 0.0, %v3395
      %v3397 = vpop.f32.mrf.mxu0
      %v3398 = vadd.f32 0.0, %v3397
      %3399 = vdwg.mxu0
      %v3400 = vadd.f32 %v3305, %v3396
      %v3401 = vadd.f32 %v3306, %v3398
      %3402 = vrot.lane.b32.xlu0 %v2761, 68
      %v3403 = vpop.permute.xlu0 %3402
      %3404 = vrot.lane.b32.xlu0 %v2757, 95
      %v3405 = vpop.permute.xlu0 %3404
      %3406 = vrot.lane.b32.xlu0 %v2753, 95
      %v3407 = vpop.permute.xlu0 %3406
      %3408 = vrot.lane.b32.xlu0 %v2758, 95
      %v3409 = vpop.permute.xlu0 %3408
      %v3410 = vsel %vm2560, %v3405, %v3407
      %v3411 = vsel %vm2560, %v3407, %v3409
      %v3412 = vsel %vm1875, %v3403, 0
      %v3414 = vsel %vm1878, %v3410, 0
      %v3416 = vsel %vm1878, %v3411, 0
      %3418 = vmatprep.subr.mxu0 0.0
      %3419 = vmatpush1.msra.mxu0 0.0
      %3420 = vmatprep.subr.mxu0 0.0
      %3421 = vmatpush1.msra.mxu0 0.0
      %3422 = vmatprep.subr.mxu0 0.0
      %3423 = vmatpush1.msra.mxu0 0.0
      %3424 = vmatprep.subr.mxu0 0.0
      %3425 = vmatpush1.msra.mxu0 0.0
      %3426 = vmatprep.subr.mxu0 0.0
      %3427 = vmatpush1.msra.mxu0 0.0
      %3428 = vmatprep.subr.mxu0 0.0
      %3429 = vmatpush1.msra.mxu0 0.0
      %3430 = vmatprep.subr.mxu0 0.0
      %3431 = vmatpush1.msra.mxu0 0.0
      %3432 = vmatprep.subr.mxu0 0.0
      %3433 = vmatpush1.msra.mxu0 0.0
      %3434 = vmatprep.subr.mxu0 0.0
      %3435 = vmatpush1.msra.mxu0 0.0
      %3436 = vmatprep.subr.mxu0 0.0
      %3437 = vmatpush1.msra.mxu0 0.0
      %3438 = vmatprep.subr.mxu0 0.0
      %3439 = vmatpush1.msra.mxu0 0.0
      %3440 = vmatprep.subr.mxu0 0.0
      %3441 = vmatpush1.msra.mxu0 0.0
      %3442 = vmatprep.subr.mxu0 0.0
      %3443 = vmatpush1.msra.mxu0 0.0
      %3444 = vmatprep.subr.mxu0 0.0
      %3445 = vmatpush1.msra.mxu0 0.0
      %3446 = vmatprep.subr.mxu0 0.0
      %3447 = vmatpush1.msra.mxu0 0.0
      %3448 = vmatprep.subr.mxu0 %v3416
      %3449 = vmatpush1.msra.mxu0 %v3414
      %3450 = vmatprep.subr.mxu0 0.0
      %3451 = vmatpush2.msra.mxu0 0.0
      %3452 = vmatprep.subr.mxu0 0.0
      %3453 = vmatpush2.msra.mxu0 0.0
      %3454 = vmatprep.subr.mxu0 0.0
      %3455 = vmatpush2.msra.mxu0 0.0
      %3456 = vmatprep.subr.mxu0 0.0
      %3457 = vmatpush2.msra.mxu0 0.0
      %3458 = vmatprep.subr.mxu0 0.0
      %3459 = vmatpush2.msra.mxu0 0.0
      %3460 = vmatprep.subr.mxu0 0.0
      %3461 = vmatpush2.msra.mxu0 0.0
      %3462 = vmatprep.subr.mxu0 0.0
      %3463 = vmatpush2.msra.mxu0 0.0
      %3464 = vmatprep.subr.mxu0 0.0
      %3465 = vmatpush2.msra.mxu0 0.0
      %3466 = vmatprep.subr.mxu0 0.0
      %3467 = vmatpush2.msra.mxu0 0.0
      %3468 = vmatprep.subr.mxu0 0.0
      %3469 = vmatpush2.msra.mxu0 0.0
      %3470 = vmatprep.subr.mxu0 0.0
      %3471 = vmatpush2.msra.mxu0 0.0
      %3472 = vmatprep.subr.mxu0 0.0
      %3473 = vmatpush2.msra.mxu0 0.0
      %3474 = vmatprep.subr.mxu0 0.0
      %3475 = vmatpush2.msra.mxu0 0.0
      %3476 = vmatprep.subr.mxu0 0.0
      %3477 = vmatpush2.msra.mxu0 0.0
      %3478 = vmatprep.subr.mxu0 0.0
      %3479 = vmatpush2.msra.mxu0 0.0
      %3480 = vmatprep.subr.mxu0 0.0
      %3481 = vmatpush2.msra.mxu0 0.0
      %3482 = vmatprep.mubr.f32.mxu0 0.0
      %3483 = vmatmul.mubr.f32.gmra.mxu0 %v3412
      %v3484 = vpop.f32.mrf.mxu0
      %v3485 = vadd.f32 0.0, %v3484
      %v3486 = vpop.f32.mrf.mxu0
      %v3487 = vadd.f32 0.0, %v3486
      %3488 = vdwg.mxu0
      %v3489 = vadd.f32 %v3400, %v3485
      %v3490 = vadd.f32 %v3401, %v3487
      %v3491 = vmul.f32 %v2757, %v2643
      %v3492 = vmul.f32 %v2753, %v2647
      %v3493 = vmul.f32 %v2758, %v2645
      %3494 = vrot.lane.b32.xlu0 %v2761, 60
      %v3495 = vpop.permute.xlu0 %3494
      %3499 = vrot.lane.b32.xlu0 %v3491, 94
      %v3500 = vpop.permute.xlu0 %3499
      %3501 = vrot.lane.b32.xlu0 %v3492, 94
      %v3502 = vpop.permute.xlu0 %3501
      %3503 = vrot.lane.b32.xlu0 %v3493, 94
      %v3504 = vpop.permute.xlu0 %3503
      %v3505 = vsel %vm2665, %v3500, %v3502
      %v3506 = vsel %vm2665, %v3502, %v3504
      %v3507 = vsel %vm1875, %v3495, 0
      %v3509 = vsel %vm1878, %v3505, 0
      %v3511 = vsel %vm1878, %v3506, 0
      %3513 = vmatprep.subr.mxu0 0.0
      %3514 = vmatpush1.msra.mxu0 0.0
      %3515 = vmatprep.subr.mxu0 0.0
      %3516 = vmatpush1.msra.mxu0 0.0
      %3517 = vmatprep.subr.mxu0 0.0
      %3518 = vmatpush1.msra.mxu0 0.0
      %3519 = vmatprep.subr.mxu0 0.0
      %3520 = vmatpush1.msra.mxu0 0.0
      %3521 = vmatprep.subr.mxu0 0.0
      %3522 = vmatpush1.msra.mxu0 0.0
      %3523 = vmatprep.subr.mxu0 0.0
      %3524 = vmatpush1.msra.mxu0 0.0
      %3525 = vmatprep.subr.mxu0 0.0
      %3526 = vmatpush1.msra.mxu0 0.0
      %3527 = vmatprep.subr.mxu0 0.0
      %3528 = vmatpush1.msra.mxu0 0.0
      %3529 = vmatprep.subr.mxu0 0.0
      %3530 = vmatpush1.msra.mxu0 0.0
      %3531 = vmatprep.subr.mxu0 0.0
      %3532 = vmatpush1.msra.mxu0 0.0
      %3533 = vmatprep.subr.mxu0 0.0
      %3534 = vmatpush1.msra.mxu0 0.0
      %3535 = vmatprep.subr.mxu0 0.0
      %3536 = vmatpush1.msra.mxu0 0.0
      %3537 = vmatprep.subr.mxu0 0.0
      %3538 = vmatpush1.msra.mxu0 0.0
      %3539 = vmatprep.subr.mxu0 0.0
      %3540 = vmatpush1.msra.mxu0 0.0
      %3541 = vmatprep.subr.mxu0 0.0
      %3542 = vmatpush1.msra.mxu0 0.0
      %3543 = vmatprep.subr.mxu0 %v3511
      %3544 = vmatpush1.msra.mxu0 %v3509
      %3545 = vmatprep.subr.mxu0 0.0
      %3546 = vmatpush2.msra.mxu0 0.0
      %3547 = vmatprep.subr.mxu0 0.0
      %3548 = vmatpush2.msra.mxu0 0.0
      %3549 = vmatprep.subr.mxu0 0.0
      %3550 = vmatpush2.msra.mxu0 0.0
      %3551 = vmatprep.subr.mxu0 0.0
      %3552 = vmatpush2.msra.mxu0 0.0
      %3553 = vmatprep.subr.mxu0 0.0
      %3554 = vmatpush2.msra.mxu0 0.0
      %3555 = vmatprep.subr.mxu0 0.0
      %3556 = vmatpush2.msra.mxu0 0.0
      %3557 = vmatprep.subr.mxu0 0.0
      %3558 = vmatpush2.msra.mxu0 0.0
      %3559 = vmatprep.subr.mxu0 0.0
      %3560 = vmatpush2.msra.mxu0 0.0
      %3561 = vmatprep.subr.mxu0 0.0
      %3562 = vmatpush2.msra.mxu0 0.0
      %3563 = vmatprep.subr.mxu0 0.0
      %3564 = vmatpush2.msra.mxu0 0.0
      %3565 = vmatprep.subr.mxu0 0.0
      %3566 = vmatpush2.msra.mxu0 0.0
      %3567 = vmatprep.subr.mxu0 0.0
      %3568 = vmatpush2.msra.mxu0 0.0
      %3569 = vmatprep.subr.mxu0 0.0
      %3570 = vmatpush2.msra.mxu0 0.0
      %3571 = vmatprep.subr.mxu0 0.0
      %3572 = vmatpush2.msra.mxu0 0.0
      %3573 = vmatprep.subr.mxu0 0.0
      %3574 = vmatpush2.msra.mxu0 0.0
      %3575 = vmatprep.subr.mxu0 0.0
      %3576 = vmatpush2.msra.mxu0 0.0
      %3577 = vmatprep.mubr.f32.mxu0 0.0
      %3578 = vmatmul.mubr.f32.gmra.mxu0 %v3507
      %v3579 = vpop.f32.mrf.mxu0
      %v3580 = vadd.f32 0.0, %v3579
      %v3581 = vpop.f32.mrf.mxu0
      %v3582 = vadd.f32 0.0, %v3581
      %3583 = vdwg.mxu0
      %v3584 = vadd.f32 %v3489, %v3580
      %v3585 = vadd.f32 %v3490, %v3582
      %v3586 = vadd.f32 %v2745, %v3584
      %v3587 = vadd.f32 %v2746, %v3585
      %v3588 = vsel %vm1878, %v3586, 0.0
      %v3589 = vsel %vm1878, %v3587, 0.0
      %v3590 = vadd.f32 %v3588, %v3589
      %3591 = vadd.xlane.f32.xlu0 %v3590
      %v3592 = vpop.xlane.xlu0 %3591
      %v3593 = vmul.f32 %v3592, 0.00390625
      %v3594 = vsub.f32 %v3586, %v3593
      %v3595 = vsub.f32 %v3587, %v3593
      %v3596 = vmul.f32 %v3594, %v3594
      %v3597 = vmul.f32 %v3595, %v3595
      %v3598 = vsel %vm1878, %v3596, 0.0
      %v3599 = vsel %vm1878, %v3597, 0.0
      %v3600 = vadd.f32 %v3598, %v3599
      %3601 = vadd.xlane.f32.xlu0 %v3600
      %v3602 = vpop.xlane.xlu0 %3601
      %v3603 = vmul.f32 %v3602, 0.00390625
      %v3604 = vadd.f32 %v3603, 1e-05
      %v3605 = vrsqrt.pop %v3604
      %v3606 = vmul.f32 %v3594, %v3605
      %v3607 = vmul.f32 %v3595, %v3605
      %vm3608 = vcmp.gt.f32.partialorder %v3606, 0.0
      %vm3609 = vcmp.gt.f32.partialorder %v3607, 0.0
      %v3610 = vmul.f32 %v3606, 0.01
      %v3611 = vmul.f32 %v3607, 0.01
      %v3612 = vsel %vm3608, %v3606, %v3610
      %v3613 = vsel %vm3609, %v3607, %v3611
      %3616 = vrot.lane.b32.xlu0 %v3612, 17
      %v3617 = vpop.permute.xlu0 %3616
      %3618 = vrot.lane.b32.xlu0 %v3613, 17
      %v3619 = vpop.permute.xlu0 %3618
      %v3620 = vsel %vm1840, %v3617, %v3619
      %v3624 = vsel %vm1840, 0.0, %v3617
      %v3625 = vsel %vm1840, %v3619, 0.0
      %v3626 = vmul.f32 %v3624, %v1851
      %v3627 = vmul.f32 %v3620, %v1855
      %v3628 = vld [vmem:[%s5] sm:$0xf]
      %3630 = vrot.lane.b32.xlu0 %v3628, 124
      %v3631 = vpop.permute.xlu0 %3630
      %3634 = vrot.lane.b32.xlu0 %v3624, 127
      %v3635 = vpop.permute.xlu0 %3634
      %3636 = vrot.lane.b32.xlu0 %v3620, 127
      %v3637 = vpop.permute.xlu0 %3636
      %3638 = vrot.lane.b32.xlu0 %v3625, 127
      %v3639 = vpop.permute.xlu0 %3638
      %v3640 = vsel %vm1872, %v3635, %v3637
      %v3641 = vsel %vm1872, %v3637, %v3639
      %v3642 = vsel %vm1875, %v3631, 0
      %v3644 = vsel %vm1878, %v3640, 0
      %v3646 = vsel %vm1878, %v3641, 0
      %3648 = vmatprep.subr.mxu0 0.0
      %3649 = vmatpush1.msra.mxu0 0.0
      %3650 = vmatprep.subr.mxu0 0.0
      %3651 = vmatpush1.msra.mxu0 0.0
      %3652 = vmatprep.subr.mxu0 0.0
      %3653 = vmatpush1.msra.mxu0 0.0
      %3654 = vmatprep.subr.mxu0 0.0
      %3655 = vmatpush1.msra.mxu0 0.0
      %3656 = vmatprep.subr.mxu0 0.0
      %3657 = vmatpush1.msra.mxu0 0.0
      %3658 = vmatprep.subr.mxu0 0.0
      %3659 = vmatpush1.msra.mxu0 0.0
      %3660 = vmatprep.subr.mxu0 0.0
      %3661 = vmatpush1.msra.mxu0 0.0
      %3662 = vmatprep.subr.mxu0 0.0
      %3663 = vmatpush1.msra.mxu0 0.0
      %3664 = vmatprep.subr.mxu0 0.0
      %3665 = vmatpush1.msra.mxu0 0.0
      %3666 = vmatprep.subr.mxu0 0.0
      %3667 = vmatpush1.msra.mxu0 0.0
      %3668 = vmatprep.subr.mxu0 0.0
      %3669 = vmatpush1.msra.mxu0 0.0
      %3670 = vmatprep.subr.mxu0 0.0
      %3671 = vmatpush1.msra.mxu0 0.0
      %3672 = vmatprep.subr.mxu0 0.0
      %3673 = vmatpush1.msra.mxu0 0.0
      %3674 = vmatprep.subr.mxu0 0.0
      %3675 = vmatpush1.msra.mxu0 0.0
      %3676 = vmatprep.subr.mxu0 0.0
      %3677 = vmatpush1.msra.mxu0 0.0
      %3678 = vmatprep.subr.mxu0 %v3646
      %3679 = vmatpush1.msra.mxu0 %v3644
      %3680 = vmatprep.subr.mxu0 0.0
      %3681 = vmatpush2.msra.mxu0 0.0
      %3682 = vmatprep.subr.mxu0 0.0
      %3683 = vmatpush2.msra.mxu0 0.0
      %3684 = vmatprep.subr.mxu0 0.0
      %3685 = vmatpush2.msra.mxu0 0.0
      %3686 = vmatprep.subr.mxu0 0.0
      %3687 = vmatpush2.msra.mxu0 0.0
      %3688 = vmatprep.subr.mxu0 0.0
      %3689 = vmatpush2.msra.mxu0 0.0
      %3690 = vmatprep.subr.mxu0 0.0
      %3691 = vmatpush2.msra.mxu0 0.0
      %3692 = vmatprep.subr.mxu0 0.0
      %3693 = vmatpush2.msra.mxu0 0.0
      %3694 = vmatprep.subr.mxu0 0.0
      %3695 = vmatpush2.msra.mxu0 0.0
      %3696 = vmatprep.subr.mxu0 0.0
      %3697 = vmatpush2.msra.mxu0 0.0
      %3698 = vmatprep.subr.mxu0 0.0
      %3699 = vmatpush2.msra.mxu0 0.0
      %3700 = vmatprep.subr.mxu0 0.0
      %3701 = vmatpush2.msra.mxu0 0.0
      %3702 = vmatprep.subr.mxu0 0.0
      %3703 = vmatpush2.msra.mxu0 0.0
      %3704 = vmatprep.subr.mxu0 0.0
      %3705 = vmatpush2.msra.mxu0 0.0
      %3706 = vmatprep.subr.mxu0 0.0
      %3707 = vmatpush2.msra.mxu0 0.0
      %3708 = vmatprep.subr.mxu0 0.0
      %3709 = vmatpush2.msra.mxu0 0.0
      %3710 = vmatprep.subr.mxu0 0.0
      %3711 = vmatpush2.msra.mxu0 0.0
      %3712 = vmatprep.mubr.f32.mxu0 0.0
      %3713 = vmatmul.mubr.f32.gmra.mxu0 %v3642
      %v3714 = vpop.f32.mrf.mxu0
      %v3715 = vadd.f32 0.0, %v3714
      %v3716 = vpop.f32.mrf.mxu0
      %v3717 = vadd.f32 0.0, %v3716
      %3718 = vdwg.mxu0
      %v3719 = vsel %vm1875, %v3628, 0
      %v3722 = vsel %vm1878, %v3626, 0
      %v3725 = vsel %vm1878, %v3627, 0
      %3727 = vmatprep.subr.mxu0 0.0
      %3728 = vmatpush1.msra.mxu0 0.0
      %3729 = vmatprep.subr.mxu0 0.0
      %3730 = vmatpush1.msra.mxu0 0.0
      %3731 = vmatprep.subr.mxu0 0.0
      %3732 = vmatpush1.msra.mxu0 0.0
      %3733 = vmatprep.subr.mxu0 0.0
      %3734 = vmatpush1.msra.mxu0 0.0
      %3735 = vmatprep.subr.mxu0 0.0
      %3736 = vmatpush1.msra.mxu0 0.0
      %3737 = vmatprep.subr.mxu0 0.0
      %3738 = vmatpush1.msra.mxu0 0.0
      %3739 = vmatprep.subr.mxu0 0.0
      %3740 = vmatpush1.msra.mxu0 0.0
      %3741 = vmatprep.subr.mxu0 0.0
      %3742 = vmatpush1.msra.mxu0 0.0
      %3743 = vmatprep.subr.mxu0 0.0
      %3744 = vmatpush1.msra.mxu0 0.0
      %3745 = vmatprep.subr.mxu0 0.0
      %3746 = vmatpush1.msra.mxu0 0.0
      %3747 = vmatprep.subr.mxu0 0.0
      %3748 = vmatpush1.msra.mxu0 0.0
      %3749 = vmatprep.subr.mxu0 0.0
      %3750 = vmatpush1.msra.mxu0 0.0
      %3751 = vmatprep.subr.mxu0 0.0
      %3752 = vmatpush1.msra.mxu0 0.0
      %3753 = vmatprep.subr.mxu0 0.0
      %3754 = vmatpush1.msra.mxu0 0.0
      %3755 = vmatprep.subr.mxu0 0.0
      %3756 = vmatpush1.msra.mxu0 0.0
      %3757 = vmatprep.subr.mxu0 %v3725
      %3758 = vmatpush1.msra.mxu0 %v3722
      %3759 = vmatprep.subr.mxu0 0.0
      %3760 = vmatpush2.msra.mxu0 0.0
      %3761 = vmatprep.subr.mxu0 0.0
      %3762 = vmatpush2.msra.mxu0 0.0
      %3763 = vmatprep.subr.mxu0 0.0
      %3764 = vmatpush2.msra.mxu0 0.0
      %3765 = vmatprep.subr.mxu0 0.0
      %3766 = vmatpush2.msra.mxu0 0.0
      %3767 = vmatprep.subr.mxu0 0.0
      %3768 = vmatpush2.msra.mxu0 0.0
      %3769 = vmatprep.subr.mxu0 0.0
      %3770 = vmatpush2.msra.mxu0 0.0
      %3771 = vmatprep.subr.mxu0 0.0
      %3772 = vmatpush2.msra.mxu0 0.0
      %3773 = vmatprep.subr.mxu0 0.0
      %3774 = vmatpush2.msra.mxu0 0.0
      %3775 = vmatprep.subr.mxu0 0.0
      %3776 = vmatpush2.msra.mxu0 0.0
      %3777 = vmatprep.subr.mxu0 0.0
      %3778 = vmatpush2.msra.mxu0 0.0
      %3779 = vmatprep.subr.mxu0 0.0
      %3780 = vmatpush2.msra.mxu0 0.0
      %3781 = vmatprep.subr.mxu0 0.0
      %3782 = vmatpush2.msra.mxu0 0.0
      %3783 = vmatprep.subr.mxu0 0.0
      %3784 = vmatpush2.msra.mxu0 0.0
      %3785 = vmatprep.subr.mxu0 0.0
      %3786 = vmatpush2.msra.mxu0 0.0
      %3787 = vmatprep.subr.mxu0 0.0
      %3788 = vmatpush2.msra.mxu0 0.0
      %3789 = vmatprep.subr.mxu0 0.0
      %3790 = vmatpush2.msra.mxu0 0.0
      %3791 = vmatprep.mubr.f32.mxu0 0.0
      %3792 = vmatmul.mubr.f32.gmra.mxu0 %v3719
      %v3793 = vpop.f32.mrf.mxu0
      %v3794 = vadd.f32 %v3715, %v3793
      %v3795 = vpop.f32.mrf.mxu0
      %v3796 = vadd.f32 %v3717, %v3795
      %3797 = vdwg.mxu0
      %v3798 = vmul.f32 %v3624, %v2043
      %v3799 = vmul.f32 %v3620, %v2047
      %v3800 = vmul.f32 %v3625, %v2045
      %3801 = vrot.lane.b32.xlu0 %v3628, 120
      %v3802 = vpop.permute.xlu0 %3801
      %3806 = vrot.lane.b32.xlu0 %v3798, 126
      %v3807 = vpop.permute.xlu0 %3806
      %3808 = vrot.lane.b32.xlu0 %v3799, 126
      %v3809 = vpop.permute.xlu0 %3808
      %3810 = vrot.lane.b32.xlu0 %v3800, 126
      %v3811 = vpop.permute.xlu0 %3810
      %v3812 = vsel %vm2065, %v3807, %v3809
      %v3813 = vsel %vm2065, %v3809, %v3811
      %v3814 = vsel %vm1875, %v3802, 0
      %v3816 = vsel %vm1878, %v3812, 0
      %v3818 = vsel %vm1878, %v3813, 0
      %3820 = vmatprep.subr.mxu0 0.0
      %3821 = vmatpush1.msra.mxu0 0.0
      %3822 = vmatprep.subr.mxu0 0.0
      %3823 = vmatpush1.msra.mxu0 0.0
      %3824 = vmatprep.subr.mxu0 0.0
      %3825 = vmatpush1.msra.mxu0 0.0
      %3826 = vmatprep.subr.mxu0 0.0
      %3827 = vmatpush1.msra.mxu0 0.0
      %3828 = vmatprep.subr.mxu0 0.0
      %3829 = vmatpush1.msra.mxu0 0.0
      %3830 = vmatprep.subr.mxu0 0.0
      %3831 = vmatpush1.msra.mxu0 0.0
      %3832 = vmatprep.subr.mxu0 0.0
      %3833 = vmatpush1.msra.mxu0 0.0
      %3834 = vmatprep.subr.mxu0 0.0
      %3835 = vmatpush1.msra.mxu0 0.0
      %3836 = vmatprep.subr.mxu0 0.0
      %3837 = vmatpush1.msra.mxu0 0.0
      %3838 = vmatprep.subr.mxu0 0.0
      %3839 = vmatpush1.msra.mxu0 0.0
      %3840 = vmatprep.subr.mxu0 0.0
      %3841 = vmatpush1.msra.mxu0 0.0
      %3842 = vmatprep.subr.mxu0 0.0
      %3843 = vmatpush1.msra.mxu0 0.0
      %3844 = vmatprep.subr.mxu0 0.0
      %3845 = vmatpush1.msra.mxu0 0.0
      %3846 = vmatprep.subr.mxu0 0.0
      %3847 = vmatpush1.msra.mxu0 0.0
      %3848 = vmatprep.subr.mxu0 0.0
      %3849 = vmatpush1.msra.mxu0 0.0
      %3850 = vmatprep.subr.mxu0 %v3818
      %3851 = vmatpush1.msra.mxu0 %v3816
      %3852 = vmatprep.subr.mxu0 0.0
      %3853 = vmatpush2.msra.mxu0 0.0
      %3854 = vmatprep.subr.mxu0 0.0
      %3855 = vmatpush2.msra.mxu0 0.0
      %3856 = vmatprep.subr.mxu0 0.0
      %3857 = vmatpush2.msra.mxu0 0.0
      %3858 = vmatprep.subr.mxu0 0.0
      %3859 = vmatpush2.msra.mxu0 0.0
      %3860 = vmatprep.subr.mxu0 0.0
      %3861 = vmatpush2.msra.mxu0 0.0
      %3862 = vmatprep.subr.mxu0 0.0
      %3863 = vmatpush2.msra.mxu0 0.0
      %3864 = vmatprep.subr.mxu0 0.0
      %3865 = vmatpush2.msra.mxu0 0.0
      %3866 = vmatprep.subr.mxu0 0.0
      %3867 = vmatpush2.msra.mxu0 0.0
      %3868 = vmatprep.subr.mxu0 0.0
      %3869 = vmatpush2.msra.mxu0 0.0
      %3870 = vmatprep.subr.mxu0 0.0
      %3871 = vmatpush2.msra.mxu0 0.0
      %3872 = vmatprep.subr.mxu0 0.0
      %3873 = vmatpush2.msra.mxu0 0.0
      %3874 = vmatprep.subr.mxu0 0.0
      %3875 = vmatpush2.msra.mxu0 0.0
      %3876 = vmatprep.subr.mxu0 0.0
      %3877 = vmatpush2.msra.mxu0 0.0
      %3878 = vmatprep.subr.mxu0 0.0
      %3879 = vmatpush2.msra.mxu0 0.0
      %3880 = vmatprep.subr.mxu0 0.0
      %3881 = vmatpush2.msra.mxu0 0.0
      %3882 = vmatprep.subr.mxu0 0.0
      %3883 = vmatpush2.msra.mxu0 0.0
      %3884 = vmatprep.mubr.f32.mxu0 0.0
      %3885 = vmatmul.mubr.f32.gmra.mxu0 %v3814
      %v3886 = vpop.f32.mrf.mxu0
      %v3887 = vadd.f32 0.0, %v3886
      %v3888 = vpop.f32.mrf.mxu0
      %v3889 = vadd.f32 0.0, %v3888
      %3890 = vdwg.mxu0
      %v3891 = vadd.f32 %v3794, %v3887
      %v3892 = vadd.f32 %v3796, %v3889
      %v3893 = vmul.f32 %v3624, %v2148
      %v3894 = vmul.f32 %v3620, %v2152
      %v3895 = vmul.f32 %v3625, %v2150
      %3896 = vrot.lane.b32.xlu0 %v3628, 116
      %v3897 = vpop.permute.xlu0 %3896
      %3901 = vrot.lane.b32.xlu0 %v3893, 112
      %v3902 = vpop.permute.xlu0 %3901
      %3903 = vrot.lane.b32.xlu0 %v3894, 112
      %v3904 = vpop.permute.xlu0 %3903
      %3905 = vrot.lane.b32.xlu0 %v3895, 112
      %v3906 = vpop.permute.xlu0 %3905
      %v3907 = vsel %vm2170, %v3902, %v3904
      %v3908 = vsel %vm2170, %v3904, %v3906
      %v3909 = vsel %vm1875, %v3897, 0
      %v3911 = vsel %vm1878, %v3907, 0
      %v3913 = vsel %vm1878, %v3908, 0
      %3915 = vmatprep.subr.mxu0 0.0
      %3916 = vmatpush1.msra.mxu0 0.0
      %3917 = vmatprep.subr.mxu0 0.0
      %3918 = vmatpush1.msra.mxu0 0.0
      %3919 = vmatprep.subr.mxu0 0.0
      %3920 = vmatpush1.msra.mxu0 0.0
      %3921 = vmatprep.subr.mxu0 0.0
      %3922 = vmatpush1.msra.mxu0 0.0
      %3923 = vmatprep.subr.mxu0 0.0
      %3924 = vmatpush1.msra.mxu0 0.0
      %3925 = vmatprep.subr.mxu0 0.0
      %3926 = vmatpush1.msra.mxu0 0.0
      %3927 = vmatprep.subr.mxu0 0.0
      %3928 = vmatpush1.msra.mxu0 0.0
      %3929 = vmatprep.subr.mxu0 0.0
      %3930 = vmatpush1.msra.mxu0 0.0
      %3931 = vmatprep.subr.mxu0 0.0
      %3932 = vmatpush1.msra.mxu0 0.0
      %3933 = vmatprep.subr.mxu0 0.0
      %3934 = vmatpush1.msra.mxu0 0.0
      %3935 = vmatprep.subr.mxu0 0.0
      %3936 = vmatpush1.msra.mxu0 0.0
      %3937 = vmatprep.subr.mxu0 0.0
      %3938 = vmatpush1.msra.mxu0 0.0
      %3939 = vmatprep.subr.mxu0 0.0
      %3940 = vmatpush1.msra.mxu0 0.0
      %3941 = vmatprep.subr.mxu0 0.0
      %3942 = vmatpush1.msra.mxu0 0.0
      %3943 = vmatprep.subr.mxu0 0.0
      %3944 = vmatpush1.msra.mxu0 0.0
      %3945 = vmatprep.subr.mxu0 %v3913
      %3946 = vmatpush1.msra.mxu0 %v3911
      %3947 = vmatprep.subr.mxu0 0.0
      %3948 = vmatpush2.msra.mxu0 0.0
      %3949 = vmatprep.subr.mxu0 0.0
      %3950 = vmatpush2.msra.mxu0 0.0
      %3951 = vmatprep.subr.mxu0 0.0
      %3952 = vmatpush2.msra.mxu0 0.0
      %3953 = vmatprep.subr.mxu0 0.0
      %3954 = vmatpush2.msra.mxu0 0.0
      %3955 = vmatprep.subr.mxu0 0.0
      %3956 = vmatpush2.msra.mxu0 0.0
      %3957 = vmatprep.subr.mxu0 0.0
      %3958 = vmatpush2.msra.mxu0 0.0
      %3959 = vmatprep.subr.mxu0 0.0
      %3960 = vmatpush2.msra.mxu0 0.0
      %3961 = vmatprep.subr.mxu0 0.0
      %3962 = vmatpush2.msra.mxu0 0.0
      %3963 = vmatprep.subr.mxu0 0.0
      %3964 = vmatpush2.msra.mxu0 0.0
      %3965 = vmatprep.subr.mxu0 0.0
      %3966 = vmatpush2.msra.mxu0 0.0
      %3967 = vmatprep.subr.mxu0 0.0
      %3968 = vmatpush2.msra.mxu0 0.0
      %3969 = vmatprep.subr.mxu0 0.0
      %3970 = vmatpush2.msra.mxu0 0.0
      %3971 = vmatprep.subr.mxu0 0.0
      %3972 = vmatpush2.msra.mxu0 0.0
      %3973 = vmatprep.subr.mxu0 0.0
      %3974 = vmatpush2.msra.mxu0 0.0
      %3975 = vmatprep.subr.mxu0 0.0
      %3976 = vmatpush2.msra.mxu0 0.0
      %3977 = vmatprep.subr.mxu0 0.0
      %3978 = vmatpush2.msra.mxu0 0.0
      %3979 = vmatprep.mubr.f32.mxu0 0.0
      %3980 = vmatmul.mubr.f32.gmra.mxu0 %v3909
      %v3981 = vpop.f32.mrf.mxu0
      %v3982 = vadd.f32 0.0, %v3981
      %v3983 = vpop.f32.mrf.mxu0
      %v3984 = vadd.f32 0.0, %v3983
      %3985 = vdwg.mxu0
      %v3986 = vadd.f32 %v3891, %v3982
      %v3987 = vadd.f32 %v3892, %v3984
      %3988 = vrot.lane.b32.xlu0 %v3628, 112
      %v3989 = vpop.permute.xlu0 %3988
      %3990 = vrot.lane.b32.xlu0 %v3624, 111
      %v3991 = vpop.permute.xlu0 %3990
      %3992 = vrot.lane.b32.xlu0 %v3620, 111
      %v3993 = vpop.permute.xlu0 %3992
      %3994 = vrot.lane.b32.xlu0 %v3625, 111
      %v3995 = vpop.permute.xlu0 %3994
      %v3996 = vsel %vm2260, %v3991, %v3993
      %v3997 = vsel %vm2260, %v3993, %v3995
      %v3998 = vsel %vm1875, %v3989, 0
      %v4000 = vsel %vm1878, %v3996, 0
      %v4002 = vsel %vm1878, %v3997, 0
      %4004 = vmatprep.subr.mxu0 0.0
      %4005 = vmatpush1.msra.mxu0 0.0
      %4006 = vmatprep.subr.mxu0 0.0
      %4007 = vmatpush1.msra.mxu0 0.0
      %4008 = vmatprep.subr.mxu0 0.0
      %4009 = vmatpush1.msra.mxu0 0.0
      %4010 = vmatprep.subr.mxu0 0.0
      %4011 = vmatpush1.msra.mxu0 0.0
      %4012 = vmatprep.subr.mxu0 0.0
      %4013 = vmatpush1.msra.mxu0 0.0
      %4014 = vmatprep.subr.mxu0 0.0
      %4015 = vmatpush1.msra.mxu0 0.0
      %4016 = vmatprep.subr.mxu0 0.0
      %4017 = vmatpush1.msra.mxu0 0.0
      %4018 = vmatprep.subr.mxu0 0.0
      %4019 = vmatpush1.msra.mxu0 0.0
      %4020 = vmatprep.subr.mxu0 0.0
      %4021 = vmatpush1.msra.mxu0 0.0
      %4022 = vmatprep.subr.mxu0 0.0
      %4023 = vmatpush1.msra.mxu0 0.0
      %4024 = vmatprep.subr.mxu0 0.0
      %4025 = vmatpush1.msra.mxu0 0.0
      %4026 = vmatprep.subr.mxu0 0.0
      %4027 = vmatpush1.msra.mxu0 0.0
      %4028 = vmatprep.subr.mxu0 0.0
      %4029 = vmatpush1.msra.mxu0 0.0
      %4030 = vmatprep.subr.mxu0 0.0
      %4031 = vmatpush1.msra.mxu0 0.0
      %4032 = vmatprep.subr.mxu0 0.0
      %4033 = vmatpush1.msra.mxu0 0.0
      %4034 = vmatprep.subr.mxu0 %v4002
      %4035 = vmatpush1.msra.mxu0 %v4000
      %4036 = vmatprep.subr.mxu0 0.0
      %4037 = vmatpush2.msra.mxu0 0.0
      %4038 = vmatprep.subr.mxu0 0.0
      %4039 = vmatpush2.msra.mxu0 0.0
      %4040 = vmatprep.subr.mxu0 0.0
      %4041 = vmatpush2.msra.mxu0 0.0
      %4042 = vmatprep.subr.mxu0 0.0
      %4043 = vmatpush2.msra.mxu0 0.0
      %4044 = vmatprep.subr.mxu0 0.0
      %4045 = vmatpush2.msra.mxu0 0.0
      %4046 = vmatprep.subr.mxu0 0.0
      %4047 = vmatpush2.msra.mxu0 0.0
      %4048 = vmatprep.subr.mxu0 0.0
      %4049 = vmatpush2.msra.mxu0 0.0
      %4050 = vmatprep.subr.mxu0 0.0
      %4051 = vmatpush2.msra.mxu0 0.0
      %4052 = vmatprep.subr.mxu0 0.0
      %4053 = vmatpush2.msra.mxu0 0.0
      %4054 = vmatprep.subr.mxu0 0.0
      %4055 = vmatpush2.msra.mxu0 0.0
      %4056 = vmatprep.subr.mxu0 0.0
      %4057 = vmatpush2.msra.mxu0 0.0
      %4058 = vmatprep.subr.mxu0 0.0
      %4059 = vmatpush2.msra.mxu0 0.0
      %4060 = vmatprep.subr.mxu0 0.0
      %4061 = vmatpush2.msra.mxu0 0.0
      %4062 = vmatprep.subr.mxu0 0.0
      %4063 = vmatpush2.msra.mxu0 0.0
      %4064 = vmatprep.subr.mxu0 0.0
      %4065 = vmatpush2.msra.mxu0 0.0
      %4066 = vmatprep.subr.mxu0 0.0
      %4067 = vmatpush2.msra.mxu0 0.0
      %4068 = vmatprep.mubr.f32.mxu0 0.0
      %4069 = vmatmul.mubr.f32.gmra.mxu0 %v3998
      %v4070 = vpop.f32.mrf.mxu0
      %v4071 = vadd.f32 0.0, %v4070
      %v4072 = vpop.f32.mrf.mxu0
      %v4073 = vadd.f32 0.0, %v4072
      %4074 = vdwg.mxu0
      %v4075 = vadd.f32 %v3986, %v4071
      %v4076 = vadd.f32 %v3987, %v4073
      %v4077 = vmul.f32 %v3624, %v2343
      %v4078 = vmul.f32 %v3620, %v2347
      %v4079 = vmul.f32 %v3625, %v2345
      %4080 = vrot.lane.b32.xlu0 %v3628, 108
      %v4081 = vpop.permute.xlu0 %4080
      %4085 = vrot.lane.b32.xlu0 %v4077, 110
      %v4086 = vpop.permute.xlu0 %4085
      %4087 = vrot.lane.b32.xlu0 %v4078, 110
      %v4088 = vpop.permute.xlu0 %4087
      %4089 = vrot.lane.b32.xlu0 %v4079, 110
      %v4090 = vpop.permute.xlu0 %4089
      %v4091 = vsel %vm2365, %v4086, %v4088
      %v4092 = vsel %vm2365, %v4088, %v4090
      %v4093 = vsel %vm1875, %v4081, 0
      %v4095 = vsel %vm1878, %v4091, 0
      %v4097 = vsel %vm1878, %v4092, 0
      %4099 = vmatprep.subr.mxu0 0.0
      %4100 = vmatpush1.msra.mxu0 0.0
      %4101 = vmatprep.subr.mxu0 0.0
      %4102 = vmatpush1.msra.mxu0 0.0
      %4103 = vmatprep.subr.mxu0 0.0
      %4104 = vmatpush1.msra.mxu0 0.0
      %4105 = vmatprep.subr.mxu0 0.0
      %4106 = vmatpush1.msra.mxu0 0.0
      %4107 = vmatprep.subr.mxu0 0.0
      %4108 = vmatpush1.msra.mxu0 0.0
      %4109 = vmatprep.subr.mxu0 0.0
      %4110 = vmatpush1.msra.mxu0 0.0
      %4111 = vmatprep.subr.mxu0 0.0
      %4112 = vmatpush1.msra.mxu0 0.0
      %4113 = vmatprep.subr.mxu0 0.0
      %4114 = vmatpush1.msra.mxu0 0.0
      %4115 = vmatprep.subr.mxu0 0.0
      %4116 = vmatpush1.msra.mxu0 0.0
      %4117 = vmatprep.subr.mxu0 0.0
      %4118 = vmatpush1.msra.mxu0 0.0
      %4119 = vmatprep.subr.mxu0 0.0
      %4120 = vmatpush1.msra.mxu0 0.0
      %4121 = vmatprep.subr.mxu0 0.0
      %4122 = vmatpush1.msra.mxu0 0.0
      %4123 = vmatprep.subr.mxu0 0.0
      %4124 = vmatpush1.msra.mxu0 0.0
      %4125 = vmatprep.subr.mxu0 0.0
      %4126 = vmatpush1.msra.mxu0 0.0
      %4127 = vmatprep.subr.mxu0 0.0
      %4128 = vmatpush1.msra.mxu0 0.0
      %4129 = vmatprep.subr.mxu0 %v4097
      %4130 = vmatpush1.msra.mxu0 %v4095
      %4131 = vmatprep.subr.mxu0 0.0
      %4132 = vmatpush2.msra.mxu0 0.0
      %4133 = vmatprep.subr.mxu0 0.0
      %4134 = vmatpush2.msra.mxu0 0.0
      %4135 = vmatprep.subr.mxu0 0.0
      %4136 = vmatpush2.msra.mxu0 0.0
      %4137 = vmatprep.subr.mxu0 0.0
      %4138 = vmatpush2.msra.mxu0 0.0
      %4139 = vmatprep.subr.mxu0 0.0
      %4140 = vmatpush2.msra.mxu0 0.0
      %4141 = vmatprep.subr.mxu0 0.0
      %4142 = vmatpush2.msra.mxu0 0.0
      %4143 = vmatprep.subr.mxu0 0.0
      %4144 = vmatpush2.msra.mxu0 0.0
      %4145 = vmatprep.subr.mxu0 0.0
      %4146 = vmatpush2.msra.mxu0 0.0
      %4147 = vmatprep.subr.mxu0 0.0
      %4148 = vmatpush2.msra.mxu0 0.0
      %4149 = vmatprep.subr.mxu0 0.0
      %4150 = vmatpush2.msra.mxu0 0.0
      %4151 = vmatprep.subr.mxu0 0.0
      %4152 = vmatpush2.msra.mxu0 0.0
      %4153 = vmatprep.subr.mxu0 0.0
      %4154 = vmatpush2.msra.mxu0 0.0
      %4155 = vmatprep.subr.mxu0 0.0
      %4156 = vmatpush2.msra.mxu0 0.0
      %4157 = vmatprep.subr.mxu0 0.0
      %4158 = vmatpush2.msra.mxu0 0.0
      %4159 = vmatprep.subr.mxu0 0.0
      %4160 = vmatpush2.msra.mxu0 0.0
      %4161 = vmatprep.subr.mxu0 0.0
      %4162 = vmatpush2.msra.mxu0 0.0
      %4163 = vmatprep.mubr.f32.mxu0 0.0
      %4164 = vmatmul.mubr.f32.gmra.mxu0 %v4093
      %v4165 = vpop.f32.mrf.mxu0
      %v4166 = vadd.f32 0.0, %v4165
      %v4167 = vpop.f32.mrf.mxu0
      %v4168 = vadd.f32 0.0, %v4167
      %4169 = vdwg.mxu0
      %v4170 = vadd.f32 %v4075, %v4166
      %v4171 = vadd.f32 %v4076, %v4168
      %v4172 = vmul.f32 %v3624, %v2448
      %v4173 = vmul.f32 %v3620, %v2452
      %v4174 = vmul.f32 %v3625, %v2450
      %4175 = vrot.lane.b32.xlu0 %v3628, 104
      %v4176 = vpop.permute.xlu0 %4175
      %4180 = vrot.lane.b32.xlu0 %v4172, 96
      %v4181 = vpop.permute.xlu0 %4180
      %4182 = vrot.lane.b32.xlu0 %v4173, 96
      %v4183 = vpop.permute.xlu0 %4182
      %4184 = vrot.lane.b32.xlu0 %v4174, 96
      %v4185 = vpop.permute.xlu0 %4184
      %v4186 = vsel %vm2470, %v4181, %v4183
      %v4187 = vsel %vm2470, %v4183, %v4185
      %v4188 = vsel %vm1875, %v4176, 0
      %v4190 = vsel %vm1878, %v4186, 0
      %v4192 = vsel %vm1878, %v4187, 0
      %4194 = vmatprep.subr.mxu0 0.0
      %4195 = vmatpush1.msra.mxu0 0.0
      %4196 = vmatprep.subr.mxu0 0.0
      %4197 = vmatpush1.msra.mxu0 0.0
      %4198 = vmatprep.subr.mxu0 0.0
      %4199 = vmatpush1.msra.mxu0 0.0
      %4200 = vmatprep.subr.mxu0 0.0
      %4201 = vmatpush1.msra.mxu0 0.0
      %4202 = vmatprep.subr.mxu0 0.0
      %4203 = vmatpush1.msra.mxu0 0.0
      %4204 = vmatprep.subr.mxu0 0.0
      %4205 = vmatpush1.msra.mxu0 0.0
      %4206 = vmatprep.subr.mxu0 0.0
      %4207 = vmatpush1.msra.mxu0 0.0
      %4208 = vmatprep.subr.mxu0 0.0
      %4209 = vmatpush1.msra.mxu0 0.0
      %4210 = vmatprep.subr.mxu0 0.0
      %4211 = vmatpush1.msra.mxu0 0.0
      %4212 = vmatprep.subr.mxu0 0.0
      %4213 = vmatpush1.msra.mxu0 0.0
      %4214 = vmatprep.subr.mxu0 0.0
      %4215 = vmatpush1.msra.mxu0 0.0
      %4216 = vmatprep.subr.mxu0 0.0
      %4217 = vmatpush1.msra.mxu0 0.0
      %4218 = vmatprep.subr.mxu0 0.0
      %4219 = vmatpush1.msra.mxu0 0.0
      %4220 = vmatprep.subr.mxu0 0.0
      %4221 = vmatpush1.msra.mxu0 0.0
      %4222 = vmatprep.subr.mxu0 0.0
      %4223 = vmatpush1.msra.mxu0 0.0
      %4224 = vmatprep.subr.mxu0 %v4192
      %4225 = vmatpush1.msra.mxu0 %v4190
      %4226 = vmatprep.subr.mxu0 0.0
      %4227 = vmatpush2.msra.mxu0 0.0
      %4228 = vmatprep.subr.mxu0 0.0
      %4229 = vmatpush2.msra.mxu0 0.0
      %4230 = vmatprep.subr.mxu0 0.0
      %4231 = vmatpush2.msra.mxu0 0.0
      %4232 = vmatprep.subr.mxu0 0.0
      %4233 = vmatpush2.msra.mxu0 0.0
      %4234 = vmatprep.subr.mxu0 0.0
      %4235 = vmatpush2.msra.mxu0 0.0
      %4236 = vmatprep.subr.mxu0 0.0
      %4237 = vmatpush2.msra.mxu0 0.0
      %4238 = vmatprep.subr.mxu0 0.0
      %4239 = vmatpush2.msra.mxu0 0.0
      %4240 = vmatprep.subr.mxu0 0.0
      %4241 = vmatpush2.msra.mxu0 0.0
      %4242 = vmatprep.subr.mxu0 0.0
      %4243 = vmatpush2.msra.mxu0 0.0
      %4244 = vmatprep.subr.mxu0 0.0
      %4245 = vmatpush2.msra.mxu0 0.0
      %4246 = vmatprep.subr.mxu0 0.0
      %4247 = vmatpush2.msra.mxu0 0.0
      %4248 = vmatprep.subr.mxu0 0.0
      %4249 = vmatpush2.msra.mxu0 0.0
      %4250 = vmatprep.subr.mxu0 0.0
      %4251 = vmatpush2.msra.mxu0 0.0
      %4252 = vmatprep.subr.mxu0 0.0
      %4253 = vmatpush2.msra.mxu0 0.0
      %4254 = vmatprep.subr.mxu0 0.0
      %4255 = vmatpush2.msra.mxu0 0.0
      %4256 = vmatprep.subr.mxu0 0.0
      %4257 = vmatpush2.msra.mxu0 0.0
      %4258 = vmatprep.mubr.f32.mxu0 0.0
      %4259 = vmatmul.mubr.f32.gmra.mxu0 %v4188
      %v4260 = vpop.f32.mrf.mxu0
      %v4261 = vadd.f32 0.0, %v4260
      %v4262 = vpop.f32.mrf.mxu0
      %v4263 = vadd.f32 0.0, %v4262
      %4264 = vdwg.mxu0
      %v4265 = vadd.f32 %v4170, %v4261
      %v4266 = vadd.f32 %v4171, %v4263
      %4267 = vrot.lane.b32.xlu0 %v3628, 100
      %v4268 = vpop.permute.xlu0 %4267
      %4269 = vrot.lane.b32.xlu0 %v3624, 95
      %v4270 = vpop.permute.xlu0 %4269
      %4271 = vrot.lane.b32.xlu0 %v3620, 95
      %v4272 = vpop.permute.xlu0 %4271
      %4273 = vrot.lane.b32.xlu0 %v3625, 95
      %v4274 = vpop.permute.xlu0 %4273
      %v4275 = vsel %vm2560, %v4270, %v4272
      %v4276 = vsel %vm2560, %v4272, %v4274
      %v4277 = vsel %vm1875, %v4268, 0
      %v4279 = vsel %vm1878, %v4275, 0
      %v4281 = vsel %vm1878, %v4276, 0
      %4283 = vmatprep.subr.mxu0 0.0
      %4284 = vmatpush1.msra.mxu0 0.0
      %4285 = vmatprep.subr.mxu0 0.0
      %4286 = vmatpush1.msra.mxu0 0.0
      %4287 = vmatprep.subr.mxu0 0.0
      %4288 = vmatpush1.msra.mxu0 0.0
      %4289 = vmatprep.subr.mxu0 0.0
      %4290 = vmatpush1.msra.mxu0 0.0
      %4291 = vmatprep.subr.mxu0 0.0
      %4292 = vmatpush1.msra.mxu0 0.0
      %4293 = vmatprep.subr.mxu0 0.0
      %4294 = vmatpush1.msra.mxu0 0.0
      %4295 = vmatprep.subr.mxu0 0.0
      %4296 = vmatpush1.msra.mxu0 0.0
      %4297 = vmatprep.subr.mxu0 0.0
      %4298 = vmatpush1.msra.mxu0 0.0
      %4299 = vmatprep.subr.mxu0 0.0
      %4300 = vmatpush1.msra.mxu0 0.0
      %4301 = vmatprep.subr.mxu0 0.0
      %4302 = vmatpush1.msra.mxu0 0.0
      %4303 = vmatprep.subr.mxu0 0.0
      %4304 = vmatpush1.msra.mxu0 0.0
      %4305 = vmatprep.subr.mxu0 0.0
      %4306 = vmatpush1.msra.mxu0 0.0
      %4307 = vmatprep.subr.mxu0 0.0
      %4308 = vmatpush1.msra.mxu0 0.0
      %4309 = vmatprep.subr.mxu0 0.0
      %4310 = vmatpush1.msra.mxu0 0.0
      %4311 = vmatprep.subr.mxu0 0.0
      %4312 = vmatpush1.msra.mxu0 0.0
      %4313 = vmatprep.subr.mxu0 %v4281
      %4314 = vmatpush1.msra.mxu0 %v4279
      %4315 = vmatprep.subr.mxu0 0.0
      %4316 = vmatpush2.msra.mxu0 0.0
      %4317 = vmatprep.subr.mxu0 0.0
      %4318 = vmatpush2.msra.mxu0 0.0
      %4319 = vmatprep.subr.mxu0 0.0
      %4320 = vmatpush2.msra.mxu0 0.0
      %4321 = vmatprep.subr.mxu0 0.0
      %4322 = vmatpush2.msra.mxu0 0.0
      %4323 = vmatprep.subr.mxu0 0.0
      %4324 = vmatpush2.msra.mxu0 0.0
      %4325 = vmatprep.subr.mxu0 0.0
      %4326 = vmatpush2.msra.mxu0 0.0
      %4327 = vmatprep.subr.mxu0 0.0
      %4328 = vmatpush2.msra.mxu0 0.0
      %4329 = vmatprep.subr.mxu0 0.0
      %4330 = vmatpush2.msra.mxu0 0.0
      %4331 = vmatprep.subr.mxu0 0.0
      %4332 = vmatpush2.msra.mxu0 0.0
      %4333 = vmatprep.subr.mxu0 0.0
      %4334 = vmatpush2.msra.mxu0 0.0
      %4335 = vmatprep.subr.mxu0 0.0
      %4336 = vmatpush2.msra.mxu0 0.0
      %4337 = vmatprep.subr.mxu0 0.0
      %4338 = vmatpush2.msra.mxu0 0.0
      %4339 = vmatprep.subr.mxu0 0.0
      %4340 = vmatpush2.msra.mxu0 0.0
      %4341 = vmatprep.subr.mxu0 0.0
      %4342 = vmatpush2.msra.mxu0 0.0
      %4343 = vmatprep.subr.mxu0 0.0
      %4344 = vmatpush2.msra.mxu0 0.0
      %4345 = vmatprep.subr.mxu0 0.0
      %4346 = vmatpush2.msra.mxu0 0.0
      %4347 = vmatprep.mubr.f32.mxu0 0.0
      %4348 = vmatmul.mubr.f32.gmra.mxu0 %v4277
      %v4349 = vpop.f32.mrf.mxu0
      %v4350 = vadd.f32 0.0, %v4349
      %v4351 = vpop.f32.mrf.mxu0
      %v4352 = vadd.f32 0.0, %v4351
      %4353 = vdwg.mxu0
      %v4354 = vadd.f32 %v4265, %v4350
      %v4355 = vadd.f32 %v4266, %v4352
      %v4356 = vmul.f32 %v3624, %v2643
      %v4357 = vmul.f32 %v3620, %v2647
      %v4358 = vmul.f32 %v3625, %v2645
      %4359 = vrot.lane.b32.xlu0 %v3628, 96
      %v4360 = vpop.permute.xlu0 %4359
      %4364 = vrot.lane.b32.xlu0 %v4356, 94
      %v4365 = vpop.permute.xlu0 %4364
      %4366 = vrot.lane.b32.xlu0 %v4357, 94
      %v4367 = vpop.permute.xlu0 %4366
      %4368 = vrot.lane.b32.xlu0 %v4358, 94
      %v4369 = vpop.permute.xlu0 %4368
      %v4370 = vsel %vm2665, %v4365, %v4367
      %v4371 = vsel %vm2665, %v4367, %v4369
      %v4372 = vsel %vm1875, %v4360, 0
      %v4374 = vsel %vm1878, %v4370, 0
      %v4376 = vsel %vm1878, %v4371, 0
      %4378 = vmatprep.subr.mxu0 0.0
      %4379 = vmatpush1.msra.mxu0 0.0
      %4380 = vmatprep.subr.mxu0 0.0
      %4381 = vmatpush1.msra.mxu0 0.0
      %4382 = vmatprep.subr.mxu0 0.0
      %4383 = vmatpush1.msra.mxu0 0.0
      %4384 = vmatprep.subr.mxu0 0.0
      %4385 = vmatpush1.msra.mxu0 0.0
      %4386 = vmatprep.subr.mxu0 0.0
      %4387 = vmatpush1.msra.mxu0 0.0
      %4388 = vmatprep.subr.mxu0 0.0
      %4389 = vmatpush1.msra.mxu0 0.0
      %4390 = vmatprep.subr.mxu0 0.0
      %4391 = vmatpush1.msra.mxu0 0.0
      %4392 = vmatprep.subr.mxu0 0.0
      %4393 = vmatpush1.msra.mxu0 0.0
      %4394 = vmatprep.subr.mxu0 0.0
      %4395 = vmatpush1.msra.mxu0 0.0
      %4396 = vmatprep.subr.mxu0 0.0
      %4397 = vmatpush1.msra.mxu0 0.0
      %4398 = vmatprep.subr.mxu0 0.0
      %4399 = vmatpush1.msra.mxu0 0.0
      %4400 = vmatprep.subr.mxu0 0.0
      %4401 = vmatpush1.msra.mxu0 0.0
      %4402 = vmatprep.subr.mxu0 0.0
      %4403 = vmatpush1.msra.mxu0 0.0
      %4404 = vmatprep.subr.mxu0 0.0
      %4405 = vmatpush1.msra.mxu0 0.0
      %4406 = vmatprep.subr.mxu0 0.0
      %4407 = vmatpush1.msra.mxu0 0.0
      %4408 = vmatprep.subr.mxu0 %v4376
      %4409 = vmatpush1.msra.mxu0 %v4374
      %4410 = vmatprep.subr.mxu0 0.0
      %4411 = vmatpush2.msra.mxu0 0.0
      %4412 = vmatprep.subr.mxu0 0.0
      %4413 = vmatpush2.msra.mxu0 0.0
      %4414 = vmatprep.subr.mxu0 0.0
      %4415 = vmatpush2.msra.mxu0 0.0
      %4416 = vmatprep.subr.mxu0 0.0
      %4417 = vmatpush2.msra.mxu0 0.0
      %4418 = vmatprep.subr.mxu0 0.0
      %4419 = vmatpush2.msra.mxu0 0.0
      %4420 = vmatprep.subr.mxu0 0.0
      %4421 = vmatpush2.msra.mxu0 0.0
      %4422 = vmatprep.subr.mxu0 0.0
      %4423 = vmatpush2.msra.mxu0 0.0
      %4424 = vmatprep.subr.mxu0 0.0
      %4425 = vmatpush2.msra.mxu0 0.0
      %4426 = vmatprep.subr.mxu0 0.0
      %4427 = vmatpush2.msra.mxu0 0.0
      %4428 = vmatprep.subr.mxu0 0.0
      %4429 = vmatpush2.msra.mxu0 0.0
      %4430 = vmatprep.subr.mxu0 0.0
      %4431 = vmatpush2.msra.mxu0 0.0
      %4432 = vmatprep.subr.mxu0 0.0
      %4433 = vmatpush2.msra.mxu0 0.0
      %4434 = vmatprep.subr.mxu0 0.0
      %4435 = vmatpush2.msra.mxu0 0.0
      %4436 = vmatprep.subr.mxu0 0.0
      %4437 = vmatpush2.msra.mxu0 0.0
      %4438 = vmatprep.subr.mxu0 0.0
      %4439 = vmatpush2.msra.mxu0 0.0
      %4440 = vmatprep.subr.mxu0 0.0
      %4441 = vmatpush2.msra.mxu0 0.0
      %4442 = vmatprep.mubr.f32.mxu0 0.0
      %4443 = vmatmul.mubr.f32.gmra.mxu0 %v4372
      %v4444 = vpop.f32.mrf.mxu0
      %v4445 = vadd.f32 0.0, %v4444
      %v4446 = vpop.f32.mrf.mxu0
      %v4447 = vadd.f32 0.0, %v4446
      %4448 = vdwg.mxu0
      %v4449 = vadd.f32 %v4354, %v4445
      %v4450 = vadd.f32 %v4355, %v4447
      %v4451 = vsel %vm1878, %v4449, 0.0
      %v4452 = vsel %vm1878, %v4450, 0.0
      %v4453 = vadd.f32 %v4451, %v4452
      %4454 = vadd.xlane.f32.xlu0 %v4453
      %v4455 = vpop.xlane.xlu0 %4454
      %v4456 = vmul.f32 %v4455, 0.00390625
      %v4457 = vsub.f32 %v4449, %v4456
      %v4458 = vsub.f32 %v4450, %v4456
      %v4459 = vmul.f32 %v4457, %v4457
      %v4460 = vmul.f32 %v4458, %v4458
      %v4461 = vsel %vm1878, %v4459, 0.0
      %v4462 = vsel %vm1878, %v4460, 0.0
      %v4463 = vadd.f32 %v4461, %v4462
      %4464 = vadd.xlane.f32.xlu0 %v4463
      %v4465 = vpop.xlane.xlu0 %4464
      %v4466 = vmul.f32 %v4465, 0.00390625
      %v4467 = vadd.f32 %v4466, 1e-05
      %v4468 = vrsqrt.pop %v4467
      %v4469 = vmul.f32 %v4457, %v4468
      %v4470 = vmul.f32 %v4458, %v4468
      %vm4471 = vcmp.gt.f32.partialorder %v4469, 0.0
      %vm4472 = vcmp.gt.f32.partialorder %v4470, 0.0
      %v4473 = vmul.f32 %v4469, 0.01
      %v4474 = vmul.f32 %v4470, 0.01
      %v4475 = vsel %vm4471, %v4469, %v4473
      %v4476 = vsel %vm4472, %v4470, %v4474
      %v4479 = vcombine.low %v4475, %v4476
      %4481 = vst [vmem:[%s322] sm:$0xff] %v4479
      %p4482 = scmp.lt.s32.totalorder %s19, 1
      %s4483 = scalar_select %p4482, %s19, 1
      %s4484 = smul.addr %s4483, 2
      %s4485 = smul.addr %s4484, 4
      %s4486 = scalar_lea.vmem %s8, %s4485
      // Predicated region
      $region53: #{upscale_forward.1} parent=51 // pred_check
        %p4487 = pneg %p215
      $region54: #{upscale_forward.1} parent=51 // pred_check_branch
        %4489 = sbr.rel (%p4487) target = $region56
      $region55: #{upscale_forward.1} parent=51 // pred_region
        _
      $region56: #{upscale_forward.1} parent=51 // pred_fallthru
        _
    $region52: #{upscale_forward.1} parent=5 // pred_fallthru
      _
    %p4490 = scmp.le.s32.totalorder 2, %s14
    // Predicated region
    $region57: #{upscale_forward.1} parent=5 // pred_check
      %p4491 = pneg %p4490
    $region58: #{upscale_forward.1} parent=5 // pred_check_branch
      %4493 = sbr.rel (%p4491) target = $region60
    $region59: #{upscale_forward.1} parent=5 // pred_region
      %s4494 = ssub.s32 %s14, 2
      // Predicated region
      $region61: #{upscale_forward.1} parent=59 // pred_check
        %p4495 = pneg %p221
      $region62: #{upscale_forward.1} parent=59 // pred_check_branch
        %4497 = sbr.rel (%p4495) target = $region64
      $region63: #{upscale_forward.1} parent=59 // pred_region
        %p4498 = scmp.lt.s32.totalorder %s20, 1
        %s4499 = scalar_select %p4498, %s20, 1
        %s4500 = smul.addr %s4499, 2
        %s4501 = smul.addr %s4500, 4
        %s4502 = scalar_lea.vmem %s8, %s4501
      $region64: #{upscale_forward.1} parent=59 // pred_fallthru
        _
    $region60: #{upscale_forward.1} parent=5 // pred_fallthru
      _
  $region6: #{upscale_forward.1} parent=0 // loop_footer
    %s18 = sadd.s32 1, %s14
  $region7: #{upscale_forward.1} parent=0 // loop_footer_branch
    %13 = sbr.rel target = $region3
  $region8: #{upscale_forward.1} parent=0 // loop_exit
    _

</llo_original>
